<compile_context>
chip_gen: v5e
topology: v5e:2x2
jax: 0.10.0
libtpu: 0.0.40
codegen_flags: <defaults>
</compile_context>

<pallas_src>
import functools

import jax
import jax.numpy as jnp
from jax.experimental import pallas as pl
from jax.experimental.pallas import tpu as pltpu

MIN_SCALE = 1e-3
LN_EPS = 1e-5  # torch.nn.LayerNorm default


def _layer_norm(y, w, b):
    mu = jnp.mean(y, axis=-1, keepdims=True)
    var = jnp.mean((y - mu) ** 2, axis=-1, keepdims=True)
    return (y - mu) * jax.lax.rsqrt(var + LN_EPS) * w + b


# ----------------------------------------------------------------------------
# Fused kernel: pi head + GRU recurrence + (hoisted) loc/scale heads
# ----------------------------------------------------------------------------
def fused_decoder_kernel(pi_in_ref, x_ref, h0_ref,
                         w_ih_ref, w_hh_ref, b_ih_ref, b_hh_ref,
                         loc_w1_ref, loc_b1_ref, loc_lnw_ref, loc_lnb_ref,
                         loc_w2_ref, loc_b2_ref,
                         scale_w1_ref, scale_b1_ref, scale_lnw_ref, scale_lnb_ref,
                         scale_w2_ref, scale_b2_ref,
                         pi_w1_ref, pi_b1_ref, pi_ln1w_ref, pi_ln1b_ref,
                         pi_w2_ref, pi_b2_ref, pi_ln2w_ref, pi_ln2b_ref,
                         pi_w3_ref, pi_b3_ref,
                         out_ref, pi_ref):
    Bp, H = h0_ref.shape
    F = out_ref.shape[0] // Bp

    # ------------------ pi head (independent of the recurrence) ------------
    y = jnp.dot(pi_in_ref[...], pi_w1_ref[...],
                preferred_element_type=jnp.float32) + pi_b1_ref[...]
    y = jnp.maximum(_layer_norm(y, pi_ln1w_ref[...], pi_ln1b_ref[...]), 0.0)
    y = jnp.dot(y, pi_w2_ref[...],
                preferred_element_type=jnp.float32) + pi_b2_ref[...]
    y = jnp.maximum(_layer_norm(y, pi_ln2w_ref[...], pi_ln2b_ref[...]), 0.0)
    pi_ref[...] = jnp.dot(y, pi_w3_ref[...],
                          preferred_element_type=jnp.float32) + pi_b3_ref[...]

    # ------------------ GRU recurrence (heads hoisted out) -----------------
    # Split hidden weights ONCE so each per-step gate dot is lane-aligned.
    w_hh = w_hh_ref[...]                       # [H, 3H], gate order r,z,n
    w_hr, w_hz, w_hn = w_hh[:, 0:H], w_hh[:, H:2 * H], w_hh[:, 2 * H:3 * H]
    b_hh = b_hh_ref[...]                       # [1, 3H]

    # Input-gate contribution is identical for every time step; fold b_hh for
    # the r/z gates (b_hn must stay inside the r*(...) term).
    gi = jnp.dot(x_ref[...], w_ih_ref[...],
                 preferred_element_type=jnp.float32) + b_ih_ref[...]
    gi_r = gi[:, 0:H] + b_hh[:, 0:H]
    gi_z = gi[:, H:2 * H] + b_hh[:, H:2 * H]
    gi_n = gi[:, 2 * H:3 * H]
    b_hn = jnp.broadcast_to(b_hh[:, 2 * H:3 * H], (Bp, H))   # hoisted broadcast

    h = h0_ref[...]
    hs = []
    for _ in range(F):                         # fully unrolled (F static, small)
        gr = jnp.dot(h, w_hr, preferred_element_type=jnp.float32)
        gz = jnp.dot(h, w_hz, preferred_element_type=jnp.float32)
        gn = jnp.dot(h, w_hn, preferred_element_type=jnp.float32) + b_hn
        r = jax.nn.sigmoid(gi_r + gr)
        z = jax.nn.sigmoid(gi_z + gz)
        n = jnp.tanh(gi_n + r * gn)
        h = (1.0 - z) * n + z * h
        hs.append(h)
    h_all = jnp.concatenate(hs, axis=0)        # [F*Bp, H], time-major

    # ------------------ loc + scale heads, one batched matmul chain --------
    w1 = jnp.concatenate([loc_w1_ref[...], scale_w1_ref[...]], axis=1)   # [H, 2H]
    b1 = jnp.concatenate([loc_b1_ref[...], scale_b1_ref[...]], axis=1)   # [1, 2H]
    y = jnp.dot(h_all, w1, preferred_element_type=jnp.float32) + b1      # [F*Bp, 2H]
    y_loc = jnp.maximum(_layer_norm(y[:, 0:H], loc_lnw_ref[...], loc_lnb_ref[...]), 0.0)
    y_sc = jnp.maximum(_layer_norm(y[:, H:2 * H], scale_lnw_ref[...], scale_lnb_ref[...]), 0.0)
    loc = jnp.dot(y_loc, loc_w2_ref[...],
                  preferred_element_type=jnp.float32) + loc_b2_ref[...]   # [F*Bp, 2]
    sc = jnp.dot(y_sc, scale_w2_ref[...],
                 preferred_element_type=jnp.float32) + scale_b2_ref[...]  # [F*Bp, 2]
    # ELU(alpha=1) + 1 + min_scale (exp argument clamped for robustness)
    sc = jnp.where(sc > 0.0, sc, jnp.exp(jnp.minimum(sc, 0.0)) - 1.0) + 1.0 + MIN_SCALE

    out_ref[...] = jnp.concatenate([loc, sc], axis=-1)                    # one store


# ----------------------------------------------------------------------------
# Wrapper
# ----------------------------------------------------------------------------
_VMEM = pl.BlockSpec(memory_space=pltpu.MemorySpace.VMEM)


@functools.partial(jax.jit, static_argnums=(3,))
def gru_decoder_forward(local_embed, global_embed, p, future_steps):
    K, N, I = global_embed.shape
    H = local_embed.shape[-1]
    B = K * N
    Bp = ((B + 7) // 8) * 8        # pad batch rows to a sublane multiple

    # Glue (tiny; fused by XLA): GRU input, initial hidden state, pi-head input.
    x = global_embed.reshape(B, I)                       # same input every step
    h0 = jnp.tile(local_embed, (K, 1))                   # local_embed.repeat(K, 1)
    pi_in = jnp.concatenate(
        [jnp.broadcast_to(local_embed[None], (K, N, H)), global_embed], axis=-1
    ).reshape(B, H + I)

    def pad_rows(a):
        return a if Bp == B else jnp.pad(a, ((0, Bp - B), (0, 0)))

    x, h0, pi_in = pad_rows(x), pad_rows(h0), pad_rows(pi_in)

    args = (pi_in, x, h0,
            p['w_ih'], p['w_hh'], p['b_ih'], p['b_hh'],
            p['loc_w1'], p['loc_b1'], p['loc_lnw'], p['loc_lnb'],
            p['loc_w2'], p['loc_b2'],
            p['scale_w1'], p['scale_b1'], p['scale_lnw'], p['scale_lnb'],
            p['scale_w2'], p['scale_b2'],
            p['pi_w1'], p['pi_b1'], p['pi_ln1w'], p['pi_ln1b'],
            p['pi_w2'], p['pi_b2'], p['pi_ln2w'], p['pi_ln2b'],
            p['pi_w3'], p['pi_b3'])

    out_flat, pi_flat = pl.pallas_call(
        fused_decoder_kernel,
        out_shape=(jax.ShapeDtypeStruct((future_steps * Bp, 4), jnp.float32),
                   jax.ShapeDtypeStruct((Bp, 1), jnp.float32)),
        in_specs=[_VMEM] * len(args),
        out_specs=(_VMEM, _VMEM),
    )(*args)

    out = out_flat.reshape(future_steps, Bp, 4)[:, :B]              # [F, B, 4]
    out = jnp.transpose(out, (1, 0, 2)).reshape(K, N, future_steps, 4)
    pi = pi_flat[:B, 0].reshape(K, N).T                             # [N, K]
    return out, pi


# ----------------------------------------------------------------------------
# Deterministic parameter init (synthetic; mirrors the nn.Module shapes)
# ----------------------------------------------------------------------------
def init_params(key, H, I):
    keys = iter(jax.random.split(key, 40))

    def w(shape, scale):
        return jax.random.normal(next(keys), shape, jnp.float32) * scale

    s_i, s_h, s_hi = 1.0 / (I ** 0.5), 1.0 / (H ** 0.5), 1.0 / ((H + I) ** 0.5)
    p = {
        # GRU (weights stored transposed: [in, 3H] with gate order r,z,n)
        'w_ih': w((I, 3 * H), s_i), 'w_hh': w((H, 3 * H), s_h),
        'b_ih': w((1, 3 * H), s_h), 'b_hh': w((1, 3 * H), s_h),
        # loc head
        'loc_w1': w((H, H), s_h), 'loc_b1': w((1, H), s_h),
        'loc_lnw': 1.0 + 0.1 * w((1, H), 1.0), 'loc_lnb': 0.1 * w((1, H), 1.0),
        'loc_w2': w((H, 2), s_h), 'loc_b2': w((1, 2), s_h),
        # scale head
        'scale_w1': w((H, H), s_h), 'scale_b1': w((1, H), s_h),
        'scale_lnw': 1.0 + 0.1 * w((1, H), 1.0), 'scale_lnb': 0.1 * w((1, H), 1.0),
        'scale_w2': w((H, 2), s_h), 'scale_b2': w((1, 2), s_h),
        # pi head
        'pi_w1': w((H + I, H), s_hi), 'pi_b1': w((1, H), s_hi),
        'pi_ln1w': 1.0 + 0.1 * w((1, H), 1.0), 'pi_ln1b': 0.1 * w((1, H), 1.0),
        'pi_w2': w((H, H), s_h), 'pi_b2': w((1, H), s_h),
        'pi_ln2w': 1.0 + 0.1 * w((1, H), 1.0), 'pi_ln2b': 0.1 * w((1, H), 1.0),
        'pi_w3': w((H, 1), s_h), 'pi_b3': w((1, 1), s_h),
    }
    return p


# ----------------------------------------------------------------------------
# Pure-JAX reference (mirrors the PyTorch forward semantics)
# ----------------------------------------------------------------------------
def reference_forward(local_embed, global_embed, p, F):
    K, N, I = global_embed.shape
    H = local_embed.shape[-1]
    B = K * N

    def ln(y, w, b):
        mu = jnp.mean(y, -1, keepdims=True)
        var = jnp.mean((y - mu) ** 2, -1, keepdims=True)
        return (y - mu) / jnp.sqrt(var + LN_EPS) * w + b

    def head(h, w1, b1, lnw, lnb, w2, b2):
        y = jnp.maximum(ln(h @ w1 + b1, lnw, lnb), 0.0)
        return y @ w2 + b2

    pi_in = jnp.concatenate(
        [jnp.broadcast_to(local_embed[None], (K, N, H)), global_embed], -1
    ).reshape(B, H + I)
    y = jnp.maximum(ln(pi_in @ p['pi_w1'] + p['pi_b1'], p['pi_ln1w'], p['pi_ln1b']), 0.0)
    y = jnp.maximum(ln(y @ p['pi_w2'] + p['pi_b2'], p['pi_ln2w'], p['pi_ln2b']), 0.0)
    pi = (y @ p['pi_w3'] + p['pi_b3']).reshape(K, N).T

    x = global_embed.reshape(B, I)
    h = jnp.tile(local_embed, (K, 1))
    gi = x @ p['w_ih'] + p['b_ih']
    hs = []
    for _ in range(F):
        gh = h @ p['w_hh'] + p['b_hh']
        r = jax.nn.sigmoid(gi[:, :H] + gh[:, :H])
        z = jax.nn.sigmoid(gi[:, H:2 * H] + gh[:, H:2 * H])
        n = jnp.tanh(gi[:, 2 * H:] + r * gh[:, 2 * H:])
        h = (1 - z) * n + z * h
        hs.append(h)
    out_bfh = jnp.transpose(jnp.stack(hs, 0), (1, 0, 2))             # [B, F, H]
    loc = head(out_bfh, p['loc_w1'], p['loc_b1'], p['loc_lnw'], p['loc_lnb'],
               p['loc_w2'], p['loc_b2'])
    sc = head(out_bfh, p['scale_w1'], p['scale_b1'], p['scale_lnw'], p['scale_lnb'],
              p['scale_w2'], p['scale_b2'])
    sc = jnp.where(sc > 0, sc, jnp.exp(jnp.minimum(sc, 0.0)) - 1.0) + 1.0 + MIN_SCALE
    return jnp.concatenate([loc, sc], -1).reshape(K, N, F, 4), pi


if __name__ == "__main__":
    H = 32    # local_channels  (GRU hidden size)
    I = 32    # global_channels (GRU input size)
    F = 8     # future_steps
    K = 6     # num_modes
    N = 2     # number of agents

    key = jax.random.PRNGKey(0)
    k1, k2, k3 = jax.random.split(key, 3)
    local_embed = jax.random.normal(k1, (N, H), jnp.float32)
    global_embed = jax.random.normal(k2, (K, N, I), jnp.float32)
    params = init_params(k3, H, I)

    out, pi = gru_decoder_forward(local_embed, global_embed, params, F)
    out, pi = jax.block_until_ready((out, pi))

    assert out.shape == (K, N, F, 4), out.shape
    assert pi.shape == (N, K), pi.shape

    ref_out, ref_pi = reference_forward(local_embed, global_embed, params, F)
    err_out = float(jnp.max(jnp.abs(out - ref_out)))
    err_pi = float(jnp.max(jnp.abs(pi - ref_pi)))
    assert err_out < 2e-2 and err_pi < 2e-2, (err_out, err_pi)

    print("KERNEL_OK")
</pallas_src>

<mosaic_0001>
module attributes {stable_mosaic.version = 11 : i64} {
  func.func @fused_decoder_kernel(%arg0: memref<16x64xf32, #tpu.memory_space<vmem>>, %arg1: memref<16x32xf32, #tpu.memory_space<vmem>>, %arg2: memref<16x32xf32, #tpu.memory_space<vmem>>, %arg3: memref<32x96xf32, #tpu.memory_space<vmem>>, %arg4: memref<32x96xf32, #tpu.memory_space<vmem>>, %arg5: memref<1x96xf32, #tpu.memory_space<vmem>>, %arg6: memref<1x96xf32, #tpu.memory_space<vmem>>, %arg7: memref<32x32xf32, #tpu.memory_space<vmem>>, %arg8: memref<1x32xf32, #tpu.memory_space<vmem>>, %arg9: memref<1x32xf32, #tpu.memory_space<vmem>>, %arg10: memref<1x32xf32, #tpu.memory_space<vmem>>, %arg11: memref<32x2xf32, #tpu.memory_space<vmem>>, %arg12: memref<1x2xf32, #tpu.memory_space<vmem>>, %arg13: memref<32x32xf32, #tpu.memory_space<vmem>>, %arg14: memref<1x32xf32, #tpu.memory_space<vmem>>, %arg15: memref<1x32xf32, #tpu.memory_space<vmem>>, %arg16: memref<1x32xf32, #tpu.memory_space<vmem>>, %arg17: memref<32x2xf32, #tpu.memory_space<vmem>>, %arg18: memref<1x2xf32, #tpu.memory_space<vmem>>, %arg19: memref<64x32xf32, #tpu.memory_space<vmem>>, %arg20: memref<1x32xf32, #tpu.memory_space<vmem>>, %arg21: memref<1x32xf32, #tpu.memory_space<vmem>>, %arg22: memref<1x32xf32, #tpu.memory_space<vmem>>, %arg23: memref<32x32xf32, #tpu.memory_space<vmem>>, %arg24: memref<1x32xf32, #tpu.memory_space<vmem>>, %arg25: memref<1x32xf32, #tpu.memory_space<vmem>>, %arg26: memref<1x32xf32, #tpu.memory_space<vmem>>, %arg27: memref<32x1xf32, #tpu.memory_space<vmem>>, %arg28: memref<1x1xf32, #tpu.memory_space<vmem>>, %arg29: memref<128x4xf32, #tpu.memory_space<vmem>>, %arg30: memref<16x1xf32, #tpu.memory_space<vmem>>) attributes {dimension_semantics = [], scalar_prefetch = 0 : i64, scratch_operands = 0 : i64, tpu.core_type = #tpu.core_type<tc>} {
    %c0 = arith.constant 0 : index
    %c0_0 = arith.constant 0 : index
    %0 = vector.load %arg0[%c0, %c0_0] : memref<16x64xf32, #tpu.memory_space<vmem>>, vector<16x64xf32>
    %c0_1 = arith.constant 0 : index
    %c0_2 = arith.constant 0 : index
    %1 = vector.load %arg19[%c0_1, %c0_2] : memref<64x32xf32, #tpu.memory_space<vmem>>, vector<64x32xf32>
    %cst = arith.constant dense<0.000000e+00> : vector<16x32xf32>
    %2 = tpu.matmul %0, %1, %cst {dimension_numbers = #tpu.dot_dimension_numbers<[1], [0], [0], [1], [0, 0, 1, 1], [], []>} : vector<16x64xf32>, vector<64x32xf32>, vector<16x32xf32> -> vector<16x32xf32>
    %c0_3 = arith.constant 0 : index
    %c0_4 = arith.constant 0 : index
    %3 = vector.load %arg20[%c0_3, %c0_4] : memref<1x32xf32, #tpu.memory_space<vmem>>, vector<1x32xf32>
    %4 = vector.broadcast %3 : vector<1x32xf32> to vector<16x32xf32>
    %5 = arith.addf %2, %4 : vector<16x32xf32>
    %c0_5 = arith.constant 0 : index
    %c0_6 = arith.constant 0 : index
    %6 = vector.load %arg21[%c0_5, %c0_6] : memref<1x32xf32, #tpu.memory_space<vmem>>, vector<1x32xf32>
    %c0_7 = arith.constant 0 : index
    %c0_8 = arith.constant 0 : index
    %7 = vector.load %arg22[%c0_7, %c0_8] : memref<1x32xf32, #tpu.memory_space<vmem>>, vector<1x32xf32>
    %cst_9 = arith.constant dense<0.000000e+00> : vector<16xf32>
    %8 = vector.multi_reduction <add>, %5, %cst_9 [1] : vector<16x32xf32> to vector<16xf32>
    %9 = vector.shape_cast %8 : vector<16xf32> to vector<16x1xf32>
    %cst_10 = arith.constant 3.200000e+01 : f32
    %10 = vector.broadcast %cst_10 : f32 to vector<16x1xf32>
    %11 = arith.divf %9, %10 : vector<16x1xf32>
    %12 = vector.broadcast %11 : vector<16x1xf32> to vector<16x32xf32>
    %13 = arith.subf %5, %12 : vector<16x32xf32>
    %14 = arith.mulf %13, %13 : vector<16x32xf32>
    %cst_11 = arith.constant dense<0.000000e+00> : vector<16xf32>
    %15 = vector.multi_reduction <add>, %14, %cst_11 [1] : vector<16x32xf32> to vector<16xf32>
    %16 = vector.shape_cast %15 : vector<16xf32> to vector<16x1xf32>
    %cst_12 = arith.constant 3.200000e+01 : f32
    %17 = vector.broadcast %cst_12 : f32 to vector<16x1xf32>
    %18 = arith.divf %16, %17 : vector<16x1xf32>
    %19 = vector.broadcast %11 : vector<16x1xf32> to vector<16x32xf32>
    %20 = arith.subf %5, %19 : vector<16x32xf32>
    %cst_13 = arith.constant 9.99999974E-6 : f32
    %21 = vector.broadcast %cst_13 : f32 to vector<16x1xf32>
    %22 = arith.addf %18, %21 : vector<16x1xf32>
    %23 = math.rsqrt %22 : vector<16x1xf32>
    %24 = vector.broadcast %23 : vector<16x1xf32> to vector<16x32xf32>
    %25 = arith.mulf %20, %24 : vector<16x32xf32>
    %26 = vector.broadcast %6 : vector<1x32xf32> to vector<16x32xf32>
    %27 = arith.mulf %25, %26 : vector<16x32xf32>
    %28 = vector.broadcast %7 : vector<1x32xf32> to vector<16x32xf32>
    %29 = arith.addf %27, %28 : vector<16x32xf32>
    %cst_14 = arith.constant 0.000000e+00 : f32
    %30 = vector.broadcast %cst_14 : f32 to vector<16x32xf32>
    %31 = arith.maximumf %29, %30 : vector<16x32xf32>
    %c0_15 = arith.constant 0 : index
    %c0_16 = arith.constant 0 : index
    %32 = vector.load %arg23[%c0_15, %c0_16] : memref<32x32xf32, #tpu.memory_space<vmem>>, vector<32x32xf32>
    %cst_17 = arith.constant dense<0.000000e+00> : vector<16x32xf32>
    %33 = tpu.matmul %31, %32, %cst_17 {dimension_numbers = #tpu.dot_dimension_numbers<[1], [0], [0], [1], [0, 0, 1, 1], [], []>} : vector<16x32xf32>, vector<32x32xf32>, vector<16x32xf32> -> vector<16x32xf32>
    %c0_18 = arith.constant 0 : index
    %c0_19 = arith.constant 0 : index
    %34 = vector.load %arg24[%c0_18, %c0_19] : memref<1x32xf32, #tpu.memory_space<vmem>>, vector<1x32xf32>
    %35 = vector.broadcast %34 : vector<1x32xf32> to vector<16x32xf32>
    %36 = arith.addf %33, %35 : vector<16x32xf32>
    %c0_20 = arith.constant 0 : index
    %c0_21 = arith.constant 0 : index
    %37 = vector.load %arg25[%c0_20, %c0_21] : memref<1x32xf32, #tpu.memory_space<vmem>>, vector<1x32xf32>
    %c0_22 = arith.constant 0 : index
    %c0_23 = arith.constant 0 : index
    %38 = vector.load %arg26[%c0_22, %c0_23] : memref<1x32xf32, #tpu.memory_space<vmem>>, vector<1x32xf32>
    %cst_24 = arith.constant dense<0.000000e+00> : vector<16xf32>
    %39 = vector.multi_reduction <add>, %36, %cst_24 [1] : vector<16x32xf32> to vector<16xf32>
    %40 = vector.shape_cast %39 : vector<16xf32> to vector<16x1xf32>
    %cst_25 = arith.constant 3.200000e+01 : f32
    %41 = vector.broadcast %cst_25 : f32 to vector<16x1xf32>
    %42 = arith.divf %40, %41 : vector<16x1xf32>
    %43 = vector.broadcast %42 : vector<16x1xf32> to vector<16x32xf32>
    %44 = arith.subf %36, %43 : vector<16x32xf32>
    %45 = arith.mulf %44, %44 : vector<16x32xf32>
    %cst_26 = arith.constant dense<0.000000e+00> : vector<16xf32>
    %46 = vector.multi_reduction <add>, %45, %cst_26 [1] : vector<16x32xf32> to vector<16xf32>
    %47 = vector.shape_cast %46 : vector<16xf32> to vector<16x1xf32>
    %cst_27 = arith.constant 3.200000e+01 : f32
    %48 = vector.broadcast %cst_27 : f32 to vector<16x1xf32>
    %49 = arith.divf %47, %48 : vector<16x1xf32>
    %50 = vector.broadcast %42 : vector<16x1xf32> to vector<16x32xf32>
    %51 = arith.subf %36, %50 : vector<16x32xf32>
    %cst_28 = arith.constant 9.99999974E-6 : f32
    %52 = vector.broadcast %cst_28 : f32 to vector<16x1xf32>
    %53 = arith.addf %49, %52 : vector<16x1xf32>
    %54 = math.rsqrt %53 : vector<16x1xf32>
    %55 = vector.broadcast %54 : vector<16x1xf32> to vector<16x32xf32>
    %56 = arith.mulf %51, %55 : vector<16x32xf32>
    %57 = vector.broadcast %37 : vector<1x32xf32> to vector<16x32xf32>
    %58 = arith.mulf %56, %57 : vector<16x32xf32>
    %59 = vector.broadcast %38 : vector<1x32xf32> to vector<16x32xf32>
    %60 = arith.addf %58, %59 : vector<16x32xf32>
    %cst_29 = arith.constant 0.000000e+00 : f32
    %61 = vector.broadcast %cst_29 : f32 to vector<16x32xf32>
    %62 = arith.maximumf %60, %61 : vector<16x32xf32>
    %c0_30 = arith.constant 0 : index
    %c0_31 = arith.constant 0 : index
    %63 = vector.load %arg27[%c0_30, %c0_31] : memref<32x1xf32, #tpu.memory_space<vmem>>, vector<32x1xf32>
    %cst_32 = arith.constant dense<0.000000e+00> : vector<16x1xf32>
    %64 = tpu.matmul %62, %63, %cst_32 {dimension_numbers = #tpu.dot_dimension_numbers<[1], [0], [0], [1], [0, 0, 1, 1], [], []>} : vector<16x32xf32>, vector<32x1xf32>, vector<16x1xf32> -> vector<16x1xf32>
    %c0_33 = arith.constant 0 : index
    %c0_34 = arith.constant 0 : index
    %65 = vector.load %arg28[%c0_33, %c0_34] : memref<1x1xf32, #tpu.memory_space<vmem>>, vector<1x1xf32>
    %66 = vector.broadcast %65 : vector<1x1xf32> to vector<16x1xf32>
    %67 = arith.addf %64, %66 : vector<16x1xf32>
    %c0_35 = arith.constant 0 : index
    %c0_36 = arith.constant 0 : index
    %68 = vector.load %arg30[%c0_35, %c0_36] : memref<16x1xf32, #tpu.memory_space<vmem>>, vector<16x1xf32>
    tpu.vector_store %arg30[%c0_35, %c0_36], %67 {strides = array<i32>} : memref<16x1xf32, #tpu.memory_space<vmem>>, vector<16x1xf32>,
    %c0_37 = arith.constant 0 : index
    %c0_38 = arith.constant 0 : index
    %69 = vector.load %arg4[%c0_37, %c0_38] : memref<32x96xf32, #tpu.memory_space<vmem>>, vector<32x96xf32>
    %70 = vector.extract_strided_slice %69 {offsets = [0, 0], sizes = [32, 32], strides = [1, 1]} : vector<32x96xf32> to vector<32x32xf32>
    %71 = vector.extract_strided_slice %69 {offsets = [0, 32], sizes = [32, 32], strides = [1, 1]} : vector<32x96xf32> to vector<32x32xf32>
    %72 = vector.extract_strided_slice %69 {offsets = [0, 64], sizes = [32, 32], strides = [1, 1]} : vector<32x96xf32> to vector<32x32xf32>
    %c0_39 = arith.constant 0 : index
    %c0_40 = arith.constant 0 : index
    %73 = vector.load %arg6[%c0_39, %c0_40] : memref<1x96xf32, #tpu.memory_space<vmem>>, vector<1x96xf32>
    %c0_41 = arith.constant 0 : index
    %c0_42 = arith.constant 0 : index
    %74 = vector.load %arg1[%c0_41, %c0_42] : memref<16x32xf32, #tpu.memory_space<vmem>>, vector<16x32xf32>
    %c0_43 = arith.constant 0 : index
    %c0_44 = arith.constant 0 : index
    %75 = vector.load %arg3[%c0_43, %c0_44] : memref<32x96xf32, #tpu.memory_space<vmem>>, vector<32x96xf32>
    %cst_45 = arith.constant dense<0.000000e+00> : vector<16x96xf32>
    %76 = tpu.matmul %74, %75, %cst_45 {dimension_numbers = #tpu.dot_dimension_numbers<[1], [0], [0], [1], [0, 0, 1, 1], [], []>} : vector<16x32xf32>, vector<32x96xf32>, vector<16x96xf32> -> vector<16x96xf32>
    %c0_46 = arith.constant 0 : index
    %c0_47 = arith.constant 0 : index
    %77 = vector.load %arg5[%c0_46, %c0_47] : memref<1x96xf32, #tpu.memory_space<vmem>>, vector<1x96xf32>
    %78 = vector.broadcast %77 : vector<1x96xf32> to vector<16x96xf32>
    %79 = arith.addf %76, %78 : vector<16x96xf32>
    %80 = vector.extract_strided_slice %79 {offsets = [0, 0], sizes = [16, 32], strides = [1, 1]} : vector<16x96xf32> to vector<16x32xf32>
    %81 = vector.extract_strided_slice %73 {offsets = [0, 0], sizes = [1, 32], strides = [1, 1]} : vector<1x96xf32> to vector<1x32xf32>
    %82 = vector.broadcast %81 : vector<1x32xf32> to vector<16x32xf32>
    %83 = arith.addf %80, %82 : vector<16x32xf32>
    %84 = vector.extract_strided_slice %79 {offsets = [0, 32], sizes = [16, 32], strides = [1, 1]} : vector<16x96xf32> to vector<16x32xf32>
    %85 = vector.extract_strided_slice %73 {offsets = [0, 32], sizes = [1, 32], strides = [1, 1]} : vector<1x96xf32> to vector<1x32xf32>
    %86 = vector.broadcast %85 : vector<1x32xf32> to vector<16x32xf32>
    %87 = arith.addf %84, %86 : vector<16x32xf32>
    %88 = vector.extract_strided_slice %79 {offsets = [0, 64], sizes = [16, 32], strides = [1, 1]} : vector<16x96xf32> to vector<16x32xf32>
    %89 = vector.extract_strided_slice %73 {offsets = [0, 64], sizes = [1, 32], strides = [1, 1]} : vector<1x96xf32> to vector<1x32xf32>
    %90 = vector.shape_cast %89 : vector<1x32xf32> to vector<1x32xf32>
    %91 = vector.broadcast %90 : vector<1x32xf32> to vector<16x32xf32>
    %c0_48 = arith.constant 0 : index
    %c0_49 = arith.constant 0 : index
    %92 = vector.load %arg2[%c0_48, %c0_49] : memref<16x32xf32, #tpu.memory_space<vmem>>, vector<16x32xf32>
    %cst_50 = arith.constant dense<0.000000e+00> : vector<16x32xf32>
    %93 = tpu.matmul %92, %70, %cst_50 {dimension_numbers = #tpu.dot_dimension_numbers<[1], [0], [0], [1], [0, 0, 1, 1], [], []>} : vector<16x32xf32>, vector<32x32xf32>, vector<16x32xf32> -> vector<16x32xf32>
    %cst_51 = arith.constant dense<0.000000e+00> : vector<16x32xf32>
    %94 = tpu.matmul %92, %71, %cst_51 {dimension_numbers = #tpu.dot_dimension_numbers<[1], [0], [0], [1], [0, 0, 1, 1], [], []>} : vector<16x32xf32>, vector<32x32xf32>, vector<16x32xf32> -> vector<16x32xf32>
    %cst_52 = arith.constant dense<0.000000e+00> : vector<16x32xf32>
    %95 = tpu.matmul %92, %72, %cst_52 {dimension_numbers = #tpu.dot_dimension_numbers<[1], [0], [0], [1], [0, 0, 1, 1], [], []>} : vector<16x32xf32>, vector<32x32xf32>, vector<16x32xf32> -> vector<16x32xf32>
    %96 = arith.addf %95, %91 : vector<16x32xf32>
    %97 = arith.addf %83, %93 : vector<16x32xf32>
    %98 = arith.negf %97 : vector<16x32xf32>
    %99 = math.exp %98 : vector<16x32xf32>
    %cst_53 = arith.constant 1.000000e+00 : f32
    %100 = vector.broadcast %cst_53 : f32 to vector<16x32xf32>
    %101 = arith.addf %100, %99 : vector<16x32xf32>
    %102 = arith.divf %100, %101 : vector<16x32xf32>
    %103 = arith.addf %87, %94 : vector<16x32xf32>
    %104 = arith.negf %103 : vector<16x32xf32>
    %105 = math.exp %104 : vector<16x32xf32>
    %cst_54 = arith.constant 1.000000e+00 : f32
    %106 = vector.broadcast %cst_54 : f32 to vector<16x32xf32>
    %107 = arith.addf %106, %105 : vector<16x32xf32>
    %108 = arith.divf %106, %107 : vector<16x32xf32>
    %109 = arith.mulf %102, %96 : vector<16x32xf32>
    %110 = arith.addf %88, %109 : vector<16x32xf32>
    %111 = math.tanh %110 : vector<16x32xf32>
    %cst_55 = arith.constant 1.000000e+00 : f32
    %112 = vector.broadcast %cst_55 : f32 to vector<16x32xf32>
    %113 = arith.subf %112, %108 : vector<16x32xf32>
    %114 = arith.mulf %113, %111 : vector<16x32xf32>
    %115 = arith.mulf %108, %92 : vector<16x32xf32>
    %116 = arith.addf %114, %115 : vector<16x32xf32>
    %cst_56 = arith.constant dense<0.000000e+00> : vector<16x32xf32>
    %117 = tpu.matmul %116, %70, %cst_56 {dimension_numbers = #tpu.dot_dimension_numbers<[1], [0], [0], [1], [0, 0, 1, 1], [], []>} : vector<16x32xf32>, vector<32x32xf32>, vector<16x32xf32> -> vector<16x32xf32>
    %cst_57 = arith.constant dense<0.000000e+00> : vector<16x32xf32>
    %118 = tpu.matmul %116, %71, %cst_57 {dimension_numbers = #tpu.dot_dimension_numbers<[1], [0], [0], [1], [0, 0, 1, 1], [], []>} : vector<16x32xf32>, vector<32x32xf32>, vector<16x32xf32> -> vector<16x32xf32>
    %cst_58 = arith.constant dense<0.000000e+00> : vector<16x32xf32>
    %119 = tpu.matmul %116, %72, %cst_58 {dimension_numbers = #tpu.dot_dimension_numbers<[1], [0], [0], [1], [0, 0, 1, 1], [], []>} : vector<16x32xf32>, vector<32x32xf32>, vector<16x32xf32> -> vector<16x32xf32>
    %120 = arith.addf %119, %91 : vector<16x32xf32>
    %121 = arith.addf %83, %117 : vector<16x32xf32>
    %122 = arith.negf %121 : vector<16x32xf32>
    %123 = math.exp %122 : vector<16x32xf32>
    %cst_59 = arith.constant 1.000000e+00 : f32
    %124 = vector.broadcast %cst_59 : f32 to vector<16x32xf32>
    %125 = arith.addf %124, %123 : vector<16x32xf32>
    %126 = arith.divf %124, %125 : vector<16x32xf32>
    %127 = arith.addf %87, %118 : vector<16x32xf32>
    %128 = arith.negf %127 : vector<16x32xf32>
    %129 = math.exp %128 : vector<16x32xf32>
    %cst_60 = arith.constant 1.000000e+00 : f32
    %130 = vector.broadcast %cst_60 : f32 to vector<16x32xf32>
    %131 = arith.addf %130, %129 : vector<16x32xf32>
    %132 = arith.divf %130, %131 : vector<16x32xf32>
    %133 = arith.mulf %126, %120 : vector<16x32xf32>
    %134 = arith.addf %88, %133 : vector<16x32xf32>
    %135 = math.tanh %134 : vector<16x32xf32>
    %cst_61 = arith.constant 1.000000e+00 : f32
    %136 = vector.broadcast %cst_61 : f32 to vector<16x32xf32>
    %137 = arith.subf %136, %132 : vector<16x32xf32>
    %138 = arith.mulf %137, %135 : vector<16x32xf32>
    %139 = arith.mulf %132, %116 : vector<16x32xf32>
    %140 = arith.addf %138, %139 : vector<16x32xf32>
    %cst_62 = arith.constant dense<0.000000e+00> : vector<16x32xf32>
    %141 = tpu.matmul %140, %70, %cst_62 {dimension_numbers = #tpu.dot_dimension_numbers<[1], [0], [0], [1], [0, 0, 1, 1], [], []>} : vector<16x32xf32>, vector<32x32xf32>, vector<16x32xf32> -> vector<16x32xf32>
    %cst_63 = arith.constant dense<0.000000e+00> : vector<16x32xf32>
    %142 = tpu.matmul %140, %71, %cst_63 {dimension_numbers = #tpu.dot_dimension_numbers<[1], [0], [0], [1], [0, 0, 1, 1], [], []>} : vector<16x32xf32>, vector<32x32xf32>, vector<16x32xf32> -> vector<16x32xf32>
    %cst_64 = arith.constant dense<0.000000e+00> : vector<16x32xf32>
    %143 = tpu.matmul %140, %72, %cst_64 {dimension_numbers = #tpu.dot_dimension_numbers<[1], [0], [0], [1], [0, 0, 1, 1], [], []>} : vector<16x32xf32>, vector<32x32xf32>, vector<16x32xf32> -> vector<16x32xf32>
    %144 = arith.addf %143, %91 : vector<16x32xf32>
    %145 = arith.addf %83, %141 : vector<16x32xf32>
    %146 = arith.negf %145 : vector<16x32xf32>
    %147 = math.exp %146 : vector<16x32xf32>
    %cst_65 = arith.constant 1.000000e+00 : f32
    %148 = vector.broadcast %cst_65 : f32 to vector<16x32xf32>
    %149 = arith.addf %148, %147 : vector<16x32xf32>
    %150 = arith.divf %148, %149 : vector<16x32xf32>
    %151 = arith.addf %87, %142 : vector<16x32xf32>
    %152 = arith.negf %151 : vector<16x32xf32>
    %153 = math.exp %152 : vector<16x32xf32>
    %cst_66 = arith.constant 1.000000e+00 : f32
    %154 = vector.broadcast %cst_66 : f32 to vector<16x32xf32>
    %155 = arith.addf %154, %153 : vector<16x32xf32>
    %156 = arith.divf %154, %155 : vector<16x32xf32>
    %157 = arith.mulf %150, %144 : vector<16x32xf32>
    %158 = arith.addf %88, %157 : vector<16x32xf32>
    %159 = math.tanh %158 : vector<16x32xf32>
    %cst_67 = arith.constant 1.000000e+00 : f32
    %160 = vector.broadcast %cst_67 : f32 to vector<16x32xf32>
    %161 = arith.subf %160, %156 : vector<16x32xf32>
    %162 = arith.mulf %161, %159 : vector<16x32xf32>
    %163 = arith.mulf %156, %140 : vector<16x32xf32>
    %164 = arith.addf %162, %163 : vector<16x32xf32>
    %cst_68 = arith.constant dense<0.000000e+00> : vector<16x32xf32>
    %165 = tpu.matmul %164, %70, %cst_68 {dimension_numbers = #tpu.dot_dimension_numbers<[1], [0], [0], [1], [0, 0, 1, 1], [], []>} : vector<16x32xf32>, vector<32x32xf32>, vector<16x32xf32> -> vector<16x32xf32>
    %cst_69 = arith.constant dense<0.000000e+00> : vector<16x32xf32>
    %166 = tpu.matmul %164, %71, %cst_69 {dimension_numbers = #tpu.dot_dimension_numbers<[1], [0], [0], [1], [0, 0, 1, 1], [], []>} : vector<16x32xf32>, vector<32x32xf32>, vector<16x32xf32> -> vector<16x32xf32>
    %cst_70 = arith.constant dense<0.000000e+00> : vector<16x32xf32>
    %167 = tpu.matmul %164, %72, %cst_70 {dimension_numbers = #tpu.dot_dimension_numbers<[1], [0], [0], [1], [0, 0, 1, 1], [], []>} : vector<16x32xf32>, vector<32x32xf32>, vector<16x32xf32> -> vector<16x32xf32>
    %168 = arith.addf %167, %91 : vector<16x32xf32>
    %169 = arith.addf %83, %165 : vector<16x32xf32>
    %170 = arith.negf %169 : vector<16x32xf32>
    %171 = math.exp %170 : vector<16x32xf32>
    %cst_71 = arith.constant 1.000000e+00 : f32
    %172 = vector.broadcast %cst_71 : f32 to vector<16x32xf32>
    %173 = arith.addf %172, %171 : vector<16x32xf32>
    %174 = arith.divf %172, %173 : vector<16x32xf32>
    %175 = arith.addf %87, %166 : vector<16x32xf32>
    %176 = arith.negf %175 : vector<16x32xf32>
    %177 = math.exp %176 : vector<16x32xf32>
    %cst_72 = arith.constant 1.000000e+00 : f32
    %178 = vector.broadcast %cst_72 : f32 to vector<16x32xf32>
    %179 = arith.addf %178, %177 : vector<16x32xf32>
    %180 = arith.divf %178, %179 : vector<16x32xf32>
    %181 = arith.mulf %174, %168 : vector<16x32xf32>
    %182 = arith.addf %88, %181 : vector<16x32xf32>
    %183 = math.tanh %182 : vector<16x32xf32>
    %cst_73 = arith.constant 1.000000e+00 : f32
    %184 = vector.broadcast %cst_73 : f32 to vector<16x32xf32>
    %185 = arith.subf %184, %180 : vector<16x32xf32>
    %186 = arith.mulf %185, %183 : vector<16x32xf32>
    %187 = arith.mulf %180, %164 : vector<16x32xf32>
    %188 = arith.addf %186, %187 : vector<16x32xf32>
    %cst_74 = arith.constant dense<0.000000e+00> : vector<16x32xf32>
    %189 = tpu.matmul %188, %70, %cst_74 {dimension_numbers = #tpu.dot_dimension_numbers<[1], [0], [0], [1], [0, 0, 1, 1], [], []>} : vector<16x32xf32>, vector<32x32xf32>, vector<16x32xf32> -> vector<16x32xf32>
    %cst_75 = arith.constant dense<0.000000e+00> : vector<16x32xf32>
    %190 = tpu.matmul %188, %71, %cst_75 {dimension_numbers = #tpu.dot_dimension_numbers<[1], [0], [0], [1], [0, 0, 1, 1], [], []>} : vector<16x32xf32>, vector<32x32xf32>, vector<16x32xf32> -> vector<16x32xf32>
    %cst_76 = arith.constant dense<0.000000e+00> : vector<16x32xf32>
    %191 = tpu.matmul %188, %72, %cst_76 {dimension_numbers = #tpu.dot_dimension_numbers<[1], [0], [0], [1], [0, 0, 1, 1], [], []>} : vector<16x32xf32>, vector<32x32xf32>, vector<16x32xf32> -> vector<16x32xf32>
    %192 = arith.addf %191, %91 : vector<16x32xf32>
    %193 = arith.addf %83, %189 : vector<16x32xf32>
    %194 = arith.negf %193 : vector<16x32xf32>
    %195 = math.exp %194 : vector<16x32xf32>
    %cst_77 = arith.constant 1.000000e+00 : f32
    %196 = vector.broadcast %cst_77 : f32 to vector<16x32xf32>
    %197 = arith.addf %196, %195 : vector<16x32xf32>
    %198 = arith.divf %196, %197 : vector<16x32xf32>
    %199 = arith.addf %87, %190 : vector<16x32xf32>
    %200 = arith.negf %199 : vector<16x32xf32>
    %201 = math.exp %200 : vector<16x32xf32>
    %cst_78 = arith.constant 1.000000e+00 : f32
    %202 = vector.broadcast %cst_78 : f32 to vector<16x32xf32>
    %203 = arith.addf %202, %201 : vector<16x32xf32>
    %204 = arith.divf %202, %203 : vector<16x32xf32>
    %205 = arith.mulf %198, %192 : vector<16x32xf32>
    %206 = arith.addf %88, %205 : vector<16x32xf32>
    %207 = math.tanh %206 : vector<16x32xf32>
    %cst_79 = arith.constant 1.000000e+00 : f32
    %208 = vector.broadcast %cst_79 : f32 to vector<16x32xf32>
    %209 = arith.subf %208, %204 : vector<16x32xf32>
    %210 = arith.mulf %209, %207 : vector<16x32xf32>
    %211 = arith.mulf %204, %188 : vector<16x32xf32>
    %212 = arith.addf %210, %211 : vector<16x32xf32>
    %cst_80 = arith.constant dense<0.000000e+00> : vector<16x32xf32>
    %213 = tpu.matmul %212, %70, %cst_80 {dimension_numbers = #tpu.dot_dimension_numbers<[1], [0], [0], [1], [0, 0, 1, 1], [], []>} : vector<16x32xf32>, vector<32x32xf32>, vector<16x32xf32> -> vector<16x32xf32>
    %cst_81 = arith.constant dense<0.000000e+00> : vector<16x32xf32>
    %214 = tpu.matmul %212, %71, %cst_81 {dimension_numbers = #tpu.dot_dimension_numbers<[1], [0], [0], [1], [0, 0, 1, 1], [], []>} : vector<16x32xf32>, vector<32x32xf32>, vector<16x32xf32> -> vector<16x32xf32>
    %cst_82 = arith.constant dense<0.000000e+00> : vector<16x32xf32>
    %215 = tpu.matmul %212, %72, %cst_82 {dimension_numbers = #tpu.dot_dimension_numbers<[1], [0], [0], [1], [0, 0, 1, 1], [], []>} : vector<16x32xf32>, vector<32x32xf32>, vector<16x32xf32> -> vector<16x32xf32>
    %216 = arith.addf %215, %91 : vector<16x32xf32>
    %217 = arith.addf %83, %213 : vector<16x32xf32>
    %218 = arith.negf %217 : vector<16x32xf32>
    %219 = math.exp %218 : vector<16x32xf32>
    %cst_83 = arith.constant 1.000000e+00 : f32
    %220 = vector.broadcast %cst_83 : f32 to vector<16x32xf32>
    %221 = arith.addf %220, %219 : vector<16x32xf32>
    %222 = arith.divf %220, %221 : vector<16x32xf32>
    %223 = arith.addf %87, %214 : vector<16x32xf32>
    %224 = arith.negf %223 : vector<16x32xf32>
    %225 = math.exp %224 : vector<16x32xf32>
    %cst_84 = arith.constant 1.000000e+00 : f32
    %226 = vector.broadcast %cst_84 : f32 to vector<16x32xf32>
    %227 = arith.addf %226, %225 : vector<16x32xf32>
    %228 = arith.divf %226, %227 : vector<16x32xf32>
    %229 = arith.mulf %222, %216 : vector<16x32xf32>
    %230 = arith.addf %88, %229 : vector<16x32xf32>
    %231 = math.tanh %230 : vector<16x32xf32>
    %cst_85 = arith.constant 1.000000e+00 : f32
    %232 = vector.broadcast %cst_85 : f32 to vector<16x32xf32>
    %233 = arith.subf %232, %228 : vector<16x32xf32>
    %234 = arith.mulf %233, %231 : vector<16x32xf32>
    %235 = arith.mulf %228, %212 : vector<16x32xf32>
    %236 = arith.addf %234, %235 : vector<16x32xf32>
    %cst_86 = arith.constant dense<0.000000e+00> : vector<16x32xf32>
    %237 = tpu.matmul %236, %70, %cst_86 {dimension_numbers = #tpu.dot_dimension_numbers<[1], [0], [0], [1], [0, 0, 1, 1], [], []>} : vector<16x32xf32>, vector<32x32xf32>, vector<16x32xf32> -> vector<16x32xf32>
    %cst_87 = arith.constant dense<0.000000e+00> : vector<16x32xf32>
    %238 = tpu.matmul %236, %71, %cst_87 {dimension_numbers = #tpu.dot_dimension_numbers<[1], [0], [0], [1], [0, 0, 1, 1], [], []>} : vector<16x32xf32>, vector<32x32xf32>, vector<16x32xf32> -> vector<16x32xf32>
    %cst_88 = arith.constant dense<0.000000e+00> : vector<16x32xf32>
    %239 = tpu.matmul %236, %72, %cst_88 {dimension_numbers = #tpu.dot_dimension_numbers<[1], [0], [0], [1], [0, 0, 1, 1], [], []>} : vector<16x32xf32>, vector<32x32xf32>, vector<16x32xf32> -> vector<16x32xf32>
    %240 = arith.addf %239, %91 : vector<16x32xf32>
    %241 = arith.addf %83, %237 : vector<16x32xf32>
    %242 = arith.negf %241 : vector<16x32xf32>
    %243 = math.exp %242 : vector<16x32xf32>
    %cst_89 = arith.constant 1.000000e+00 : f32
    %244 = vector.broadcast %cst_89 : f32 to vector<16x32xf32>
    %245 = arith.addf %244, %243 : vector<16x32xf32>
    %246 = arith.divf %244, %245 : vector<16x32xf32>
    %247 = arith.addf %87, %238 : vector<16x32xf32>
    %248 = arith.negf %247 : vector<16x32xf32>
    %249 = math.exp %248 : vector<16x32xf32>
    %cst_90 = arith.constant 1.000000e+00 : f32
    %250 = vector.broadcast %cst_90 : f32 to vector<16x32xf32>
    %251 = arith.addf %250, %249 : vector<16x32xf32>
    %252 = arith.divf %250, %251 : vector<16x32xf32>
    %253 = arith.mulf %246, %240 : vector<16x32xf32>
    %254 = arith.addf %88, %253 : vector<16x32xf32>
    %255 = math.tanh %254 : vector<16x32xf32>
    %cst_91 = arith.constant 1.000000e+00 : f32
    %256 = vector.broadcast %cst_91 : f32 to vector<16x32xf32>
    %257 = arith.subf %256, %252 : vector<16x32xf32>
    %258 = arith.mulf %257, %255 : vector<16x32xf32>
    %259 = arith.mulf %252, %236 : vector<16x32xf32>
    %260 = arith.addf %258, %259 : vector<16x32xf32>
    %cst_92 = arith.constant dense<0.000000e+00> : vector<16x32xf32>
    %261 = tpu.matmul %260, %70, %cst_92 {dimension_numbers = #tpu.dot_dimension_numbers<[1], [0], [0], [1], [0, 0, 1, 1], [], []>} : vector<16x32xf32>, vector<32x32xf32>, vector<16x32xf32> -> vector<16x32xf32>
    %cst_93 = arith.constant dense<0.000000e+00> : vector<16x32xf32>
    %262 = tpu.matmul %260, %71, %cst_93 {dimension_numbers = #tpu.dot_dimension_numbers<[1], [0], [0], [1], [0, 0, 1, 1], [], []>} : vector<16x32xf32>, vector<32x32xf32>, vector<16x32xf32> -> vector<16x32xf32>
    %cst_94 = arith.constant dense<0.000000e+00> : vector<16x32xf32>
    %263 = tpu.matmul %260, %72, %cst_94 {dimension_numbers = #tpu.dot_dimension_numbers<[1], [0], [0], [1], [0, 0, 1, 1], [], []>} : vector<16x32xf32>, vector<32x32xf32>, vector<16x32xf32> -> vector<16x32xf32>
    %264 = arith.addf %263, %91 : vector<16x32xf32>
    %265 = arith.addf %83, %261 : vector<16x32xf32>
    %266 = arith.negf %265 : vector<16x32xf32>
    %267 = math.exp %266 : vector<16x32xf32>
    %cst_95 = arith.constant 1.000000e+00 : f32
    %268 = vector.broadcast %cst_95 : f32 to vector<16x32xf32>
    %269 = arith.addf %268, %267 : vector<16x32xf32>
    %270 = arith.divf %268, %269 : vector<16x32xf32>
    %271 = arith.addf %87, %262 : vector<16x32xf32>
    %272 = arith.negf %271 : vector<16x32xf32>
    %273 = math.exp %272 : vector<16x32xf32>
    %cst_96 = arith.constant 1.000000e+00 : f32
    %274 = vector.broadcast %cst_96 : f32 to vector<16x32xf32>
    %275 = arith.addf %274, %273 : vector<16x32xf32>
    %276 = arith.divf %274, %275 : vector<16x32xf32>
    %277 = arith.mulf %270, %264 : vector<16x32xf32>
    %278 = arith.addf %88, %277 : vector<16x32xf32>
    %279 = math.tanh %278 : vector<16x32xf32>
    %cst_97 = arith.constant 1.000000e+00 : f32
    %280 = vector.broadcast %cst_97 : f32 to vector<16x32xf32>
    %281 = arith.subf %280, %276 : vector<16x32xf32>
    %282 = arith.mulf %281, %279 : vector<16x32xf32>
    %283 = arith.mulf %276, %260 : vector<16x32xf32>
    %284 = arith.addf %282, %283 : vector<16x32xf32>
    %285 = tpu.concatenate %116, %140, %164, %188, %212, %236, %260, %284 in 0 : vector<16x32xf32>, vector<16x32xf32>, vector<16x32xf32>, vector<16x32xf32>, vector<16x32xf32>, vector<16x32xf32>, vector<16x32xf32>, vector<16x32xf32> -> vector<128x32xf32>
    %c0_98 = arith.constant 0 : index
    %c0_99 = arith.constant 0 : index
    %286 = vector.load %arg7[%c0_98, %c0_99] : memref<32x32xf32, #tpu.memory_space<vmem>>, vector<32x32xf32>
    %c0_100 = arith.constant 0 : index
    %c0_101 = arith.constant 0 : index
    %287 = vector.load %arg13[%c0_100, %c0_101] : memref<32x32xf32, #tpu.memory_space<vmem>>, vector<32x32xf32>
    %288 = tpu.concatenate %286, %287 in 1 : vector<32x32xf32>, vector<32x32xf32> -> vector<32x64xf32>
    %c0_102 = arith.constant 0 : index
    %c0_103 = arith.constant 0 : index
    %289 = vector.load %arg8[%c0_102, %c0_103] : memref<1x32xf32, #tpu.memory_space<vmem>>, vector<1x32xf32>
    %c0_104 = arith.constant 0 : index
    %c0_105 = arith.constant 0 : index
    %290 = vector.load %arg14[%c0_104, %c0_105] : memref<1x32xf32, #tpu.memory_space<vmem>>, vector<1x32xf32>
    %291 = tpu.concatenate %289, %290 in 1 : vector<1x32xf32>, vector<1x32xf32> -> vector<1x64xf32>
    %cst_106 = arith.constant dense<0.000000e+00> : vector<128x64xf32>
    %292 = tpu.matmul %285, %288, %cst_106 {dimension_numbers = #tpu.dot_dimension_numbers<[1], [0], [0], [1], [0, 0, 1, 1], [], []>} : vector<128x32xf32>, vector<32x64xf32>, vector<128x64xf32> -> vector<128x64xf32>
    %293 = vector.broadcast %291 : vector<1x64xf32> to vector<128x64xf32>
    %294 = arith.addf %292, %293 : vector<128x64xf32>
    %295 = vector.extract_strided_slice %294 {offsets = [0, 0], sizes = [128, 32], strides = [1, 1]} : vector<128x64xf32> to vector<128x32xf32>
    %c0_107 = arith.constant 0 : index
    %c0_108 = arith.constant 0 : index
    %296 = vector.load %arg9[%c0_107, %c0_108] : memref<1x32xf32, #tpu.memory_space<vmem>>, vector<1x32xf32>
    %c0_109 = arith.constant 0 : index
    %c0_110 = arith.constant 0 : index
    %297 = vector.load %arg10[%c0_109, %c0_110] : memref<1x32xf32, #tpu.memory_space<vmem>>, vector<1x32xf32>
    %cst_111 = arith.constant dense<0.000000e+00> : vector<128xf32>
    %298 = vector.multi_reduction <add>, %295, %cst_111 [1] : vector<128x32xf32> to vector<128xf32>
    %299 = vector.shape_cast %298 : vector<128xf32> to vector<128x1xf32>
    %cst_112 = arith.constant 3.200000e+01 : f32
    %300 = vector.broadcast %cst_112 : f32 to vector<128x1xf32>
    %301 = arith.divf %299, %300 : vector<128x1xf32>
    %302 = vector.broadcast %301 : vector<128x1xf32> to vector<128x32xf32>
    %303 = arith.subf %295, %302 : vector<128x32xf32>
    %304 = arith.mulf %303, %303 : vector<128x32xf32>
    %cst_113 = arith.constant dense<0.000000e+00> : vector<128xf32>
    %305 = vector.multi_reduction <add>, %304, %cst_113 [1] : vector<128x32xf32> to vector<128xf32>
    %306 = vector.shape_cast %305 : vector<128xf32> to vector<128x1xf32>
    %cst_114 = arith.constant 3.200000e+01 : f32
    %307 = vector.broadcast %cst_114 : f32 to vector<128x1xf32>
    %308 = arith.divf %306, %307 : vector<128x1xf32>
    %309 = vector.broadcast %301 : vector<128x1xf32> to vector<128x32xf32>
    %310 = arith.subf %295, %309 : vector<128x32xf32>
    %cst_115 = arith.constant 9.99999974E-6 : f32
    %311 = vector.broadcast %cst_115 : f32 to vector<128x1xf32>
    %312 = arith.addf %308, %311 : vector<128x1xf32>
    %313 = math.rsqrt %312 : vector<128x1xf32>
    %314 = vector.broadcast %313 : vector<128x1xf32> to vector<128x32xf32>
    %315 = arith.mulf %310, %314 : vector<128x32xf32>
    %316 = vector.broadcast %296 : vector<1x32xf32> to vector<128x32xf32>
    %317 = arith.mulf %315, %316 : vector<128x32xf32>
    %318 = vector.broadcast %297 : vector<1x32xf32> to vector<128x32xf32>
    %319 = arith.addf %317, %318 : vector<128x32xf32>
    %cst_116 = arith.constant 0.000000e+00 : f32
    %320 = vector.broadcast %cst_116 : f32 to vector<128x32xf32>
    %321 = arith.maximumf %319, %320 : vector<128x32xf32>
    %322 = vector.extract_strided_slice %294 {offsets = [0, 32], sizes = [128, 32], strides = [1, 1]} : vector<128x64xf32> to vector<128x32xf32>
    %c0_117 = arith.constant 0 : index
    %c0_118 = arith.constant 0 : index
    %323 = vector.load %arg15[%c0_117, %c0_118] : memref<1x32xf32, #tpu.memory_space<vmem>>, vector<1x32xf32>
    %c0_119 = arith.constant 0 : index
    %c0_120 = arith.constant 0 : index
    %324 = vector.load %arg16[%c0_119, %c0_120] : memref<1x32xf32, #tpu.memory_space<vmem>>, vector<1x32xf32>
    %cst_121 = arith.constant dense<0.000000e+00> : vector<128xf32>
    %325 = vector.multi_reduction <add>, %322, %cst_121 [1] : vector<128x32xf32> to vector<128xf32>
    %326 = vector.shape_cast %325 : vector<128xf32> to vector<128x1xf32>
    %cst_122 = arith.constant 3.200000e+01 : f32
    %327 = vector.broadcast %cst_122 : f32 to vector<128x1xf32>
    %328 = arith.divf %326, %327 : vector<128x1xf32>
    %329 = vector.broadcast %328 : vector<128x1xf32> to vector<128x32xf32>
    %330 = arith.subf %322, %329 : vector<128x32xf32>
    %331 = arith.mulf %330, %330 : vector<128x32xf32>
    %cst_123 = arith.constant dense<0.000000e+00> : vector<128xf32>
    %332 = vector.multi_reduction <add>, %331, %cst_123 [1] : vector<128x32xf32> to vector<128xf32>
    %333 = vector.shape_cast %332 : vector<128xf32> to vector<128x1xf32>
    %cst_124 = arith.constant 3.200000e+01 : f32
    %334 = vector.broadcast %cst_124 : f32 to vector<128x1xf32>
    %335 = arith.divf %333, %334 : vector<128x1xf32>
    %336 = vector.broadcast %328 : vector<128x1xf32> to vector<128x32xf32>
    %337 = arith.subf %322, %336 : vector<128x32xf32>
    %cst_125 = arith.constant 9.99999974E-6 : f32
    %338 = vector.broadcast %cst_125 : f32 to vector<128x1xf32>
    %339 = arith.addf %335, %338 : vector<128x1xf32>
    %340 = math.rsqrt %339 : vector<128x1xf32>
    %341 = vector.broadcast %340 : vector<128x1xf32> to vector<128x32xf32>
    %342 = arith.mulf %337, %341 : vector<128x32xf32>
    %343 = vector.broadcast %323 : vector<1x32xf32> to vector<128x32xf32>
    %344 = arith.mulf %342, %343 : vector<128x32xf32>
    %345 = vector.broadcast %324 : vector<1x32xf32> to vector<128x32xf32>
    %346 = arith.addf %344, %345 : vector<128x32xf32>
    %cst_126 = arith.constant 0.000000e+00 : f32
    %347 = vector.broadcast %cst_126 : f32 to vector<128x32xf32>
    %348 = arith.maximumf %346, %347 : vector<128x32xf32>
    %c0_127 = arith.constant 0 : index
    %c0_128 = arith.constant 0 : index
    %349 = vector.load %arg11[%c0_127, %c0_128] : memref<32x2xf32, #tpu.memory_space<vmem>>, vector<32x2xf32>
    %cst_129 = arith.constant dense<0.000000e+00> : vector<128x2xf32>
    %350 = tpu.matmul %321, %349, %cst_129 {dimension_numbers = #tpu.dot_dimension_numbers<[1], [0], [0], [1], [0, 0, 1, 1], [], []>} : vector<128x32xf32>, vector<32x2xf32>, vector<128x2xf32> -> vector<128x2xf32>
    %c0_130 = arith.constant 0 : index
    %c0_131 = arith.constant 0 : index
    %351 = vector.load %arg12[%c0_130, %c0_131] : memref<1x2xf32, #tpu.memory_space<vmem>>, vector<1x2xf32>
    %352 = vector.broadcast %351 : vector<1x2xf32> to vector<128x2xf32>
    %353 = arith.addf %350, %352 : vector<128x2xf32>
    %c0_132 = arith.constant 0 : index
    %c0_133 = arith.constant 0 : index
    %354 = vector.load %arg17[%c0_132, %c0_133] : memref<32x2xf32, #tpu.memory_space<vmem>>, vector<32x2xf32>
    %cst_134 = arith.constant dense<0.000000e+00> : vector<128x2xf32>
    %355 = tpu.matmul %348, %354, %cst_134 {dimension_numbers = #tpu.dot_dimension_numbers<[1], [0], [0], [1], [0, 0, 1, 1], [], []>} : vector<128x32xf32>, vector<32x2xf32>, vector<128x2xf32> -> vector<128x2xf32>
    %c0_135 = arith.constant 0 : index
    %c0_136 = arith.constant 0 : index
    %356 = vector.load %arg18[%c0_135, %c0_136] : memref<1x2xf32, #tpu.memory_space<vmem>>, vector<1x2xf32>
    %357 = vector.broadcast %356 : vector<1x2xf32> to vector<128x2xf32>
    %358 = arith.addf %355, %357 : vector<128x2xf32>
    %cst_137 = arith.constant 0.000000e+00 : f32
    %359 = vector.broadcast %cst_137 : f32 to vector<128x2xf32>
    %360 = arith.cmpf ogt, %358, %359 : vector<128x2xf32>
    %cst_138 = arith.constant 0.000000e+00 : f32
    %361 = vector.broadcast %cst_138 : f32 to vector<128x2xf32>
    %362 = arith.minimumf %358, %361 : vector<128x2xf32>
    %363 = math.exp %362 : vector<128x2xf32>
    %cst_139 = arith.constant 1.000000e+00 : f32
    %364 = vector.broadcast %cst_139 : f32 to vector<128x2xf32>
    %365 = arith.subf %363, %364 : vector<128x2xf32>
    %366 = arith.select %360, %358, %365 : vector<128x2xi1>, vector<128x2xf32>
    %cst_140 = arith.constant 1.000000e+00 : f32
    %367 = vector.broadcast %cst_140 : f32 to vector<128x2xf32>
    %368 = arith.addf %366, %367 : vector<128x2xf32>
    %cst_141 = arith.constant 1.000000e-03 : f32
    %369 = vector.broadcast %cst_141 : f32 to vector<128x2xf32>
    %370 = arith.addf %368, %369 : vector<128x2xf32>
    %371 = tpu.concatenate %353, %370 in 1 : vector<128x2xf32>, vector<128x2xf32> -> vector<128x4xf32>
    %c0_142 = arith.constant 0 : index
    %c0_143 = arith.constant 0 : index
    %372 = vector.load %arg29[%c0_142, %c0_143] : memref<128x4xf32, #tpu.memory_space<vmem>>, vector<128x4xf32>
    tpu.vector_store %arg29[%c0_142, %c0_143], %371 {strides = array<i32>} : memref<128x4xf32, #tpu.memory_space<vmem>>, vector<128x4xf32>,
    return
  }
}

</mosaic_0001>

<llo_original>
// kernel: tile.9
$region0: #{tile.9}
  %s0 = inlined_call_operand.vmem [shape: f32[6,2,32], index: 0, kind: input, shape index: {}]
  %s1 = inlined_call_operand.vmem [shape: f32[12,32], index: 1, kind: output, shape index: {}]
  $region1: #{tile.9} parent=0
    #allocation0 [shape = 'u8[24576]{0}', space=vmem, size = 0x6000, scoped, tag = 'scoped mem for input reshape']
    %s3 = ssub.s32 4, 1
    %s4 = scalar_lea.vmem %s0, 10
    %v5 = vld [vmem:[%s4] sm:%s3]
    %s6 = scalar_lea.vmem [#allocation0], 40
    %7 = vst [vmem:[%s6] sm:%s3] %v5
    %s8 = scalar_lea.vmem %s0, 8
    %v9 = vld [vmem:[%s8] sm:%s3]
    %s10 = scalar_lea.vmem [#allocation0], 32
    %11 = vst [vmem:[%s10] sm:%s3] %v9
    %s12 = scalar_lea.vmem %s0, 6
    %v13 = vld [vmem:[%s12] sm:%s3]
    %s14 = scalar_lea.vmem [#allocation0], 24
    %15 = vst [vmem:[%s14] sm:%s3] %v13
    %s16 = scalar_lea.vmem %s0, 4
    %v17 = vld [vmem:[%s16] sm:%s3]
    %s18 = scalar_lea.vmem [#allocation0], 16
    %19 = vst [vmem:[%s18] sm:%s3] %v17
    %s20 = scalar_lea.vmem %s0, 2
    %v21 = vld [vmem:[%s20] sm:%s3]
    %s22 = scalar_lea.vmem [#allocation0], 8
    %23 = vst [vmem:[%s22] sm:%s3] %v21
    %v24 = vld [vmem:[%s0] sm:%s3]
    %25 = vst [vmem:[#allocation0] sm:%s3] %v24
    %v26 = vld [vmem:[#allocation0] sm:$0x3]
    %vm27 = vcmask 261120
    %28 = vst.msk [vmem:[%s1] sm:$0x3] %vm27, %v26
    %s29 = scalar_lea.vmem [#allocation0], 8
    %v30 = vld [vmem:[%s29] sm:$0x3]
    %vm31 = vcmask 261120
    %s32 = scalar_lea.vmem %s1, 2
    %33 = vst.msk [vmem:[%s32] sm:$0x3] %vm31, %v30
    %s34 = scalar_lea.vmem [#allocation0], 16
    %v35 = vld [vmem:[%s34] sm:$0x3]
    %vm36 = vcmask 261120
    %s37 = scalar_lea.vmem %s1, 4
    %38 = vst.msk [vmem:[%s37] sm:$0x3] %vm36, %v35
    %s39 = scalar_lea.vmem [#allocation0], 24
    %v40 = vld [vmem:[%s39] sm:$0x3]
    %vm41 = vcmask 261120
    %s42 = scalar_lea.vmem %s1, 6
    %43 = vst.msk [vmem:[%s42] sm:$0x3] %vm41, %v40
    %s44 = scalar_lea.vmem [#allocation0], 32
    %v45 = vld [vmem:[%s44] sm:$0x3]
    %vm46 = vcmask 261120
    %s47 = scalar_lea.vmem %s1, 8
    %48 = vst.msk [vmem:[%s47] sm:$0x3] %vm46, %v45
    %s49 = scalar_lea.vmem [#allocation0], 40
    %v50 = vld [vmem:[%s49] sm:$0x3]
    %vm51 = vcmask 261120
    %s52 = scalar_lea.vmem %s1, 10
    %53 = vst.msk [vmem:[%s52] sm:$0x3] %vm51, %v50

// kernel: squeeze.1
$region0: #{squeeze.1}
  %s0 = inlined_call_operand.vmem [shape: f32[12], index: 0, kind: input, shape index: {}]
  %s1 = inlined_call_operand.vmem [shape: f32[6,2], index: 1, kind: output, shape index: {}]
  $region1: #{squeeze.1} parent=0
    #allocation0 [shape = 'u8[4096]{0}', space=vmem, size = 0x1000, scoped, tag = 'scoped mem for input reshape']
    %s3 = ssub.s32 2, 1
    %v4 = vld [vmem:[%s0] sm:%s3]
    %5 = vst [vmem:[#allocation0] sm:%s3] %v4
    %v6 = vld [vmem:[#allocation0] sm:$0x1]
    %vm7 = vcmask 15360
    %8 = vst.msk [vmem:[%s1] sm:$0x1] %vm7, %v6
    %v9 = vld [vmem:[#allocation0] sm:$0x1]
    %10 = vrot.lane.b32.xlu0 %v9, 126
    %v11 = vpop.permute.xlu0 %10
    %vm12 = vcmask 15360
    %s13 = scalar_lea.vmem %s1, 1
    %14 = vst.msk [vmem:[%s13] sm:$0x1] %vm12, %v11
    %v15 = vld [vmem:[#allocation0] sm:$0x1]
    %16 = vrot.lane.b32.xlu0 %v15, 124
    %v17 = vpop.permute.xlu0 %16
    %vm18 = vcmask 15360
    %s19 = scalar_lea.vmem %s1, 2
    %20 = vst.msk [vmem:[%s19] sm:$0x1] %vm18, %v17
    %v21 = vld [vmem:[#allocation0] sm:$0x1]
    %22 = vrot.lane.b32.xlu0 %v21, 122
    %v23 = vpop.permute.xlu0 %22
    %vm24 = vcmask 15360
    %s25 = scalar_lea.vmem %s1, 3
    %26 = vst.msk [vmem:[%s25] sm:$0x1] %vm24, %v23
    %v27 = vld [vmem:[#allocation0] sm:$0x1]
    %28 = vrot.lane.b32.xlu0 %v27, 120
    %v29 = vpop.permute.xlu0 %28
    %vm30 = vcmask 15360
    %s31 = scalar_lea.vmem %s1, 4
    %32 = vst.msk [vmem:[%s31] sm:$0x1] %vm30, %v29
    %v33 = vld [vmem:[#allocation0] sm:$0x1]
    %34 = vrot.lane.b32.xlu0 %v33, 118
    %v35 = vpop.permute.xlu0 %34
    %vm36 = vcmask 15360
    %s37 = scalar_lea.vmem %s1, 5
    %38 = vst.msk [vmem:[%s37] sm:$0x1] %vm36, %v35

// kernel: gru_decoder_forward.1
$region0: #{gru_decoder_forward.1}
  #allocation0 [shape = 'u32[]', space=smem, size = 0x4, offset = 0x4, fixed_abs, tag = 'smem constant byte address 0x4 - core index']
  #allocation1 [shape = 'u32[72,128]{1,0:T(1,128)}', space=vmem, size = 0x9000, scoped, tag = 'internal scratch']
  #allocation2 [shape = 'f32[1,1]{1,0:T(1,128)S(1)}', space=vmem, size = 0x200, scoped, tag = 'scoped memory for gru_decoder_forward.1']
  %s0 = inlined_call_operand.smem [shape: u32[31], index: -1, kind: input, shape index: {}]
  %s1 = sld [smem:[%s0]]
  %s2 = scalar_lea.smem %s0, 1
  %s3 = sld [smem:[%s2]]
  %s4 = scalar_lea.smem %s0, 2
  %s5 = sld [smem:[%s4]]
  %s6 = scalar_lea.smem %s0, 3
  %s7 = sld [smem:[%s6]]
  %s8 = scalar_lea.smem %s0, 4
  %s9 = sld [smem:[%s8]]
  %s10 = scalar_lea.smem %s0, 5
  %s11 = sld [smem:[%s10]]
  %s12 = scalar_lea.smem %s0, 6
  %s13 = sld [smem:[%s12]]
  %s14 = scalar_lea.smem %s0, 7
  %s15 = sld [smem:[%s14]]
  %s16 = scalar_lea.smem %s0, 8
  %s17 = sld [smem:[%s16]]
  %s18 = scalar_lea.smem %s0, 9
  %s19 = sld [smem:[%s18]]
  %s20 = scalar_lea.smem %s0, 10
  %s21 = sld [smem:[%s20]]
  %s22 = scalar_lea.smem %s0, 11
  %s23 = sld [smem:[%s22]]
  %s24 = scalar_lea.smem %s0, 12
  %s25 = sld [smem:[%s24]]
  %s26 = scalar_lea.smem %s0, 13
  %s27 = sld [smem:[%s26]]
  %s28 = scalar_lea.smem %s0, 14
  %s29 = sld [smem:[%s28]]
  %s30 = scalar_lea.smem %s0, 15
  %s31 = sld [smem:[%s30]]
  %s32 = scalar_lea.smem %s0, 16
  %s33 = sld [smem:[%s32]]
  %s34 = scalar_lea.smem %s0, 17
  %s35 = sld [smem:[%s34]]
  %s36 = scalar_lea.smem %s0, 18
  %s37 = sld [smem:[%s36]]
  %s38 = scalar_lea.smem %s0, 19
  %s39 = sld [smem:[%s38]]
  %s40 = scalar_lea.smem %s0, 20
  %s41 = sld [smem:[%s40]]
  %s42 = scalar_lea.smem %s0, 21
  %s43 = sld [smem:[%s42]]
  %s44 = scalar_lea.smem %s0, 22
  %s45 = sld [smem:[%s44]]
  %s46 = scalar_lea.smem %s0, 23
  %s47 = sld [smem:[%s46]]
  %s48 = scalar_lea.smem %s0, 24
  %s49 = sld [smem:[%s48]]
  %s50 = scalar_lea.smem %s0, 25
  %s51 = sld [smem:[%s50]]
  %s52 = scalar_lea.smem %s0, 26
  %s53 = sld [smem:[%s52]]
  %s54 = scalar_lea.smem %s0, 27
  %s55 = sld [smem:[%s54]]
  %s56 = scalar_lea.smem %s0, 28
  %s57 = sld [smem:[%s56]]
  %s58 = scalar_lea.smem %s0, 29
  %s59 = sld [smem:[%s58]]
  %s60 = scalar_lea.smem %s0, 30
  %s61 = sld [smem:[%s60]]
  %62 = xla_tuple %s59, %s61
  %s63 = sld [smem:[#allocation0]]
  $region134: #{gru_decoder_forward.1} parent=0
    _
  %s65 = ssub.s32 1, %s63
  %s66 = scalar_select 0, %s65, %s63
  %v67 = vstv %s57
  %68 = vst [vmem:[#allocation2] sm:$0x1] %v67
  // Predicated region
  $region2: #{gru_decoder_forward.1} parent=0 // pred_check
    _
  $region3: #{gru_decoder_forward.1} parent=0 // pred_check_branch
    %70 = sbr.rel (0) target = $region5
  $region4: #{gru_decoder_forward.1} parent=0 // pred_region
    _
  $region5: #{gru_decoder_forward.1} parent=0 // pred_fallthru
    _
  // Predicated region
  $region6: #{gru_decoder_forward.1} parent=0 // pred_check
    _
  $region7: #{gru_decoder_forward.1} parent=0 // pred_check_branch
    %72 = sbr.rel (0) target = $region9
  $region8: #{gru_decoder_forward.1} parent=0 // pred_region
    _
  $region9: #{gru_decoder_forward.1} parent=0 // pred_fallthru
    _
  // Predicated region
  $region10: #{gru_decoder_forward.1} parent=0 // pred_check
    _
  $region11: #{gru_decoder_forward.1} parent=0 // pred_check_branch
    %74 = sbr.rel (0) target = $region13
  $region12: #{gru_decoder_forward.1} parent=0 // pred_region
    _
  $region13: #{gru_decoder_forward.1} parent=0 // pred_fallthru
    _
  // Predicated region
  $region14: #{gru_decoder_forward.1} parent=0 // pred_check
    _
  $region15: #{gru_decoder_forward.1} parent=0 // pred_check_branch
    %76 = sbr.rel (0) target = $region17
  $region16: #{gru_decoder_forward.1} parent=0 // pred_region
    _
  $region17: #{gru_decoder_forward.1} parent=0 // pred_fallthru
    _
  // Predicated region
  $region18: #{gru_decoder_forward.1} parent=0 // pred_check
    _
  $region19: #{gru_decoder_forward.1} parent=0 // pred_check_branch
    %78 = sbr.rel (0) target = $region21
  $region20: #{gru_decoder_forward.1} parent=0 // pred_region
    _
  $region21: #{gru_decoder_forward.1} parent=0 // pred_fallthru
    _
  // Predicated region
  $region22: #{gru_decoder_forward.1} parent=0 // pred_check
    _
  $region23: #{gru_decoder_forward.1} parent=0 // pred_check_branch
    %80 = sbr.rel (0) target = $region25
  $region24: #{gru_decoder_forward.1} parent=0 // pred_region
    _
  $region25: #{gru_decoder_forward.1} parent=0 // pred_fallthru
    _
  // Predicated region
  $region26: #{gru_decoder_forward.1} parent=0 // pred_check
    _
  $region27: #{gru_decoder_forward.1} parent=0 // pred_check_branch
    %82 = sbr.rel (0) target = $region29
  $region28: #{gru_decoder_forward.1} parent=0 // pred_region
    _
  $region29: #{gru_decoder_forward.1} parent=0 // pred_fallthru
    _
  // Predicated region
  $region30: #{gru_decoder_forward.1} parent=0 // pred_check
    _
  $region31: #{gru_decoder_forward.1} parent=0 // pred_check_branch
    %84 = sbr.rel (0) target = $region33
  $region32: #{gru_decoder_forward.1} parent=0 // pred_region
    _
  $region33: #{gru_decoder_forward.1} parent=0 // pred_fallthru
    _
  // Predicated region
  $region34: #{gru_decoder_forward.1} parent=0 // pred_check
    _
  $region35: #{gru_decoder_forward.1} parent=0 // pred_check_branch
    %86 = sbr.rel (0) target = $region37
  $region36: #{gru_decoder_forward.1} parent=0 // pred_region
    _
  $region37: #{gru_decoder_forward.1} parent=0 // pred_fallthru
    _
  // Predicated region
  $region38: #{gru_decoder_forward.1} parent=0 // pred_check
    _
  $region39: #{gru_decoder_forward.1} parent=0 // pred_check_branch
    %88 = sbr.rel (0) target = $region41
  $region40: #{gru_decoder_forward.1} parent=0 // pred_region
    _
  $region41: #{gru_decoder_forward.1} parent=0 // pred_fallthru
    _
  // Predicated region
  $region42: #{gru_decoder_forward.1} parent=0 // pred_check
    _
  $region43: #{gru_decoder_forward.1} parent=0 // pred_check_branch
    %90 = sbr.rel (0) target = $region45
  $region44: #{gru_decoder_forward.1} parent=0 // pred_region
    _
  $region45: #{gru_decoder_forward.1} parent=0 // pred_fallthru
    _
  // Predicated region
  $region46: #{gru_decoder_forward.1} parent=0 // pred_check
    _
  $region47: #{gru_decoder_forward.1} parent=0 // pred_check_branch
    %92 = sbr.rel (0) target = $region49
  $region48: #{gru_decoder_forward.1} parent=0 // pred_region
    _
  $region49: #{gru_decoder_forward.1} parent=0 // pred_fallthru
    _
  // Predicated region
  $region50: #{gru_decoder_forward.1} parent=0 // pred_check
    _
  $region51: #{gru_decoder_forward.1} parent=0 // pred_check_branch
    %94 = sbr.rel (0) target = $region53
  $region52: #{gru_decoder_forward.1} parent=0 // pred_region
    _
  $region53: #{gru_decoder_forward.1} parent=0 // pred_fallthru
    _
  // Predicated region
  $region54: #{gru_decoder_forward.1} parent=0 // pred_check
    _
  $region55: #{gru_decoder_forward.1} parent=0 // pred_check_branch
    %96 = sbr.rel (0) target = $region57
  $region56: #{gru_decoder_forward.1} parent=0 // pred_region
    _
  $region57: #{gru_decoder_forward.1} parent=0 // pred_fallthru
    _
  // Predicated region
  $region58: #{gru_decoder_forward.1} parent=0 // pred_check
    _
  $region59: #{gru_decoder_forward.1} parent=0 // pred_check_branch
    %98 = sbr.rel (0) target = $region61
  $region60: #{gru_decoder_forward.1} parent=0 // pred_region
    _
  $region61: #{gru_decoder_forward.1} parent=0 // pred_fallthru
    _
  // Predicated region
  $region62: #{gru_decoder_forward.1} parent=0 // pred_check
    _
  $region63: #{gru_decoder_forward.1} parent=0 // pred_check_branch
    %100 = sbr.rel (0) target = $region65
  $region64: #{gru_decoder_forward.1} parent=0 // pred_region
    _
  $region65: #{gru_decoder_forward.1} parent=0 // pred_fallthru
    _
  // Predicated region
  $region66: #{gru_decoder_forward.1} parent=0 // pred_check
    _
  $region67: #{gru_decoder_forward.1} parent=0 // pred_check_branch
    %102 = sbr.rel (0) target = $region69
  $region68: #{gru_decoder_forward.1} parent=0 // pred_region
    _
  $region69: #{gru_decoder_forward.1} parent=0 // pred_fallthru
    _
  // Predicated region
  $region70: #{gru_decoder_forward.1} parent=0 // pred_check
    _
  $region71: #{gru_decoder_forward.1} parent=0 // pred_check_branch
    %104 = sbr.rel (0) target = $region73
  $region72: #{gru_decoder_forward.1} parent=0 // pred_region
    _
  $region73: #{gru_decoder_forward.1} parent=0 // pred_fallthru
    _
  // Predicated region
  $region74: #{gru_decoder_forward.1} parent=0 // pred_check
    _
  $region75: #{gru_decoder_forward.1} parent=0 // pred_check_branch
    %106 = sbr.rel (0) target = $region77
  $region76: #{gru_decoder_forward.1} parent=0 // pred_region
    _
  $region77: #{gru_decoder_forward.1} parent=0 // pred_fallthru
    _
  // Predicated region
  $region78: #{gru_decoder_forward.1} parent=0 // pred_check
    _
  $region79: #{gru_decoder_forward.1} parent=0 // pred_check_branch
    %108 = sbr.rel (0) target = $region81
  $region80: #{gru_decoder_forward.1} parent=0 // pred_region
    _
  $region81: #{gru_decoder_forward.1} parent=0 // pred_fallthru
    _
  // Predicated region
  $region82: #{gru_decoder_forward.1} parent=0 // pred_check
    _
  $region83: #{gru_decoder_forward.1} parent=0 // pred_check_branch
    %110 = sbr.rel (0) target = $region85
  $region84: #{gru_decoder_forward.1} parent=0 // pred_region
    _
  $region85: #{gru_decoder_forward.1} parent=0 // pred_fallthru
    _
  // Predicated region
  $region86: #{gru_decoder_forward.1} parent=0 // pred_check
    _
  $region87: #{gru_decoder_forward.1} parent=0 // pred_check_branch
    %112 = sbr.rel (0) target = $region89
  $region88: #{gru_decoder_forward.1} parent=0 // pred_region
    _
  $region89: #{gru_decoder_forward.1} parent=0 // pred_fallthru
    _
  // Predicated region
  $region90: #{gru_decoder_forward.1} parent=0 // pred_check
    _
  $region91: #{gru_decoder_forward.1} parent=0 // pred_check_branch
    %114 = sbr.rel (0) target = $region93
  $region92: #{gru_decoder_forward.1} parent=0 // pred_region
    _
  $region93: #{gru_decoder_forward.1} parent=0 // pred_fallthru
    _
  // Predicated region
  $region94: #{gru_decoder_forward.1} parent=0 // pred_check
    _
  $region95: #{gru_decoder_forward.1} parent=0 // pred_check_branch
    %116 = sbr.rel (0) target = $region97
  $region96: #{gru_decoder_forward.1} parent=0 // pred_region
    _
  $region97: #{gru_decoder_forward.1} parent=0 // pred_fallthru
    _
  // Predicated region
  $region98: #{gru_decoder_forward.1} parent=0 // pred_check
    _
  $region99: #{gru_decoder_forward.1} parent=0 // pred_check_branch
    %118 = sbr.rel (0) target = $region101
  $region100: #{gru_decoder_forward.1} parent=0 // pred_region
    _
  $region101: #{gru_decoder_forward.1} parent=0 // pred_fallthru
    _
  // Predicated region
  $region102: #{gru_decoder_forward.1} parent=0 // pred_check
    _
  $region103: #{gru_decoder_forward.1} parent=0 // pred_check_branch
    %120 = sbr.rel (0) target = $region105
  $region104: #{gru_decoder_forward.1} parent=0 // pred_region
    _
  $region105: #{gru_decoder_forward.1} parent=0 // pred_fallthru
    _
  // Predicated region
  $region106: #{gru_decoder_forward.1} parent=0 // pred_check
    _
  $region107: #{gru_decoder_forward.1} parent=0 // pred_check_branch
    %122 = sbr.rel (0) target = $region109
  $region108: #{gru_decoder_forward.1} parent=0 // pred_region
    _
  $region109: #{gru_decoder_forward.1} parent=0 // pred_fallthru
    _
  // Predicated region
  $region110: #{gru_decoder_forward.1} parent=0 // pred_check
    _
  $region111: #{gru_decoder_forward.1} parent=0 // pred_check_branch
    %124 = sbr.rel (0) target = $region113
  $region112: #{gru_decoder_forward.1} parent=0 // pred_region
    _
  $region113: #{gru_decoder_forward.1} parent=0 // pred_fallthru
    _
  // Predicated region
  $region114: #{gru_decoder_forward.1} parent=0 // pred_check
    _
  $region115: #{gru_decoder_forward.1} parent=0 // pred_check_branch
    %126 = sbr.rel (0) target = $region117
  $region116: #{gru_decoder_forward.1} parent=0 // pred_region
    _
  $region117: #{gru_decoder_forward.1} parent=0 // pred_fallthru
    _
  %v127 = vld [vmem:[%s1] sm:$0xff]
  %v128 = vld [vmem:[%s1 + $0x8] sm:$0xff]
  %v129 = vld [vmem:[%s39] sm:$0xff]
  %v130 = vld [vmem:[%s39 + $0x8] sm:$0xff]
  %v131 = vld [vmem:[%s39 + $0x10] sm:$0xff]
  %v132 = vld [vmem:[%s39 + $0x18] sm:$0xff]
  %v133 = vld [vmem:[%s39 + $0x20] sm:$0xff]
  %v134 = vld [vmem:[%s39 + $0x28] sm:$0xff]
  %v135 = vld [vmem:[%s39 + $0x30] sm:$0xff]
  %v136 = vld [vmem:[%s39 + $0x38] sm:$0xff]
  %v137 = vld [vmem:[%s41] sm:$0x1]
  %v139 = vperm.slane %v137, 0
  %vm141 = vcmask 523264
  %v143 = vsel %vm141, %v127, 0
  %v146 = vsel %vm141, %v128, 0
  %148 = vmatpush.msra.mxu0 0.0
  %149 = vmatpush.msra.mxu0 0.0
  %150 = vmatpush.msra.mxu0 0.0
  %151 = vmatpush.msra.mxu0 0.0
  %152 = vmatpush.msra.mxu0 0.0
  %153 = vmatpush.msra.mxu0 0.0
  %154 = vmatpush.msra.mxu0 0.0
  %155 = vmatpush.msra.mxu0 0.0
  %156 = vmatpush.msra.mxu0 %v136
  %157 = vmatpush.msra.mxu0 %v135
  %158 = vmatpush.msra.mxu0 %v134
  %159 = vmatpush.msra.mxu0 %v133
  %160 = vmatpush.msra.mxu0 %v132
  %161 = vmatpush.msra.mxu0 %v131
  %162 = vmatpush.msra.mxu0 %v130
  %163 = vmatpush.msra.mxu0 %v129
  %164 = vmatmul.f32.gmra.mxu0 %v143
  %v165 = vpop.f32.mrf.mxu0
  %v166 = vadd.f32 %v139, %v165
  %167 = vmatmul.f32.gmra.mxu0 %v146
  %v168 = vpop.f32.mrf.mxu0
  %v169 = vadd.f32 %v139, %v168
  %170 = vdwg.mxu0
  %v171 = vld [vmem:[%s43] sm:$0x1]
  %v172 = vld [vmem:[%s45] sm:$0x1]
  %vm173 = vcmask 261120
  %v174 = vsel %vm173, %v166, 0.0
  %175 = vadd.xlane.f32.xlu0 %v174
  %v176 = vpop.xlane.xlu0 %175
  %v177 = vsel %vm173, %v169, 0.0
  %178 = vadd.xlane.f32.xlu0 %v177
  %v179 = vpop.xlane.xlu0 %178
  %v180 = vrcp.pop 32.0
  %v181 = vmul.f32 32.0, %v180
  %v182 = vsub.f32 1.0, %v181
  %v183 = vmul.f32 %v180, %v182
  %v184 = vadd.f32 %v180, %v183
  %vm185 = vweird.f32 %v180
  %v186 = vsel %vm185, %v180, %v184
  %v187 = vmul.f32 %v176, %v186
  %v188 = vmul.f32 %v179, %v186
  %v189 = vsub.f32 %v166, %v187
  %v190 = vsub.f32 %v169, %v188
  %v191 = vmul.f32 %v189, %v189
  %v192 = vmul.f32 %v190, %v190
  %v193 = vsel %vm173, %v191, 0.0
  %194 = vadd.xlane.f32.xlu0 %v193
  %v195 = vpop.xlane.xlu0 %194
  %v196 = vsel %vm173, %v192, 0.0
  %197 = vadd.xlane.f32.xlu0 %v196
  %v198 = vpop.xlane.xlu0 %197
  %v199 = vmul.f32 %v195, %v186
  %v200 = vmul.f32 %v198, %v186
  %v201 = vadd.f32 %v199, 1e-05
  %v202 = vadd.f32 %v200, 1e-05
  %v203 = vrsqrt.pop %v201
  %v204 = vmul.f32 %v203, %v201
  %v205 = vmul.f32 %v204, %v203
  %v206 = vmul.f32 0.5, %v205
  %v207 = vsub.f32 1.5, %v206
  %v208 = vmul.f32 %v203, %v207
  %vm209 = vweird.f32 %v201
  %vm210 = vweird.f32 %v203
  %vm211 = vmor %vm209, %vm210
  %v212 = vsel %vm211, %v203, %v208
  %v213 = vrsqrt.pop %v202
  %v214 = vmul.f32 %v213, %v202
  %v215 = vmul.f32 %v214, %v213
  %v216 = vmul.f32 0.5, %v215
  %v217 = vsub.f32 1.5, %v216
  %v218 = vmul.f32 %v213, %v217
  %vm219 = vweird.f32 %v202
  %vm220 = vweird.f32 %v213
  %vm221 = vmor %vm219, %vm220
  %v222 = vsel %vm221, %v213, %v218
  %v223 = vmul.f32 %v189, %v212
  %v224 = vmul.f32 %v190, %v222
  %v226 = vperm.slane %v171, 0
  %v228 = vmul.f32 %v223, %v226
  %v229 = vmul.f32 %v224, %v226
  %v231 = vperm.slane %v172, 0
  %v233 = vadd.f32 %v228, %v231
  %v234 = vadd.f32 %v229, %v231
  %v235 = vmax.f32 %v233, 0.0
  %v236 = vmax.f32 %v234, 0.0
  %v237 = vld [vmem:[%s47] sm:$0xff]
  %v238 = vld [vmem:[%s47 + $0x8] sm:$0xff]
  %v239 = vld [vmem:[%s47 + $0x10] sm:$0xff]
  %v240 = vld [vmem:[%s47 + $0x18] sm:$0xff]
  %v241 = vld [vmem:[%s49] sm:$0x1]
  %v243 = vperm.slane %v241, 0
  %v246 = vsel %vm173, %v235, 0
  %v249 = vsel %vm173, %v236, 0
  %251 = vmatpush.msra.mxu0 0.0
  %252 = vmatpush.msra.mxu0 0.0
  %253 = vmatpush.msra.mxu0 0.0
  %254 = vmatpush.msra.mxu0 0.0
  %255 = vmatpush.msra.mxu0 0.0
  %256 = vmatpush.msra.mxu0 0.0
  %257 = vmatpush.msra.mxu0 0.0
  %258 = vmatpush.msra.mxu0 0.0
  %259 = vmatpush.msra.mxu0 0.0
  %260 = vmatpush.msra.mxu0 0.0
  %261 = vmatpush.msra.mxu0 0.0
  %262 = vmatpush.msra.mxu0 0.0
  %263 = vmatpush.msra.mxu0 %v240
  %264 = vmatpush.msra.mxu0 %v239
  %265 = vmatpush.msra.mxu0 %v238
  %266 = vmatpush.msra.mxu0 %v237
  %267 = vmatmul.f32.gmra.mxu0 %v246
  %v268 = vpop.f32.mrf.mxu0
  %v269 = vadd.f32 %v243, %v268
  %270 = vmatmul.f32.gmra.mxu0 %v249
  %v271 = vpop.f32.mrf.mxu0
  %v272 = vadd.f32 %v243, %v271
  %273 = vdwg.mxu0
  %v274 = vld [vmem:[%s51] sm:$0x1]
  %v275 = vld [vmem:[%s53] sm:$0x1]
  %v276 = vsel %vm173, %v269, 0.0
  %277 = vadd.xlane.f32.xlu0 %v276
  %v278 = vpop.xlane.xlu0 %277
  %v279 = vsel %vm173, %v272, 0.0
  %280 = vadd.xlane.f32.xlu0 %v279
  %v281 = vpop.xlane.xlu0 %280
  %v282 = vmul.f32 %v278, %v186
  %v283 = vmul.f32 %v281, %v186
  %v284 = vsub.f32 %v269, %v282
  %v285 = vsub.f32 %v272, %v283
  %v286 = vmul.f32 %v284, %v284
  %v287 = vmul.f32 %v285, %v285
  %v288 = vsel %vm173, %v286, 0.0
  %289 = vadd.xlane.f32.xlu0 %v288
  %v290 = vpop.xlane.xlu0 %289
  %v291 = vsel %vm173, %v287, 0.0
  %292 = vadd.xlane.f32.xlu0 %v291
  %v293 = vpop.xlane.xlu0 %292
  %v294 = vmul.f32 %v290, %v186
  %v295 = vmul.f32 %v293, %v186
  %v296 = vadd.f32 %v294, 1e-05
  %v297 = vadd.f32 %v295, 1e-05
  %v298 = vrsqrt.pop %v296
  %v299 = vmul.f32 %v298, %v296
  %v300 = vmul.f32 %v299, %v298
  %v301 = vmul.f32 0.5, %v300
  %v302 = vsub.f32 1.5, %v301
  %v303 = vmul.f32 %v298, %v302
  %vm304 = vweird.f32 %v296
  %vm305 = vweird.f32 %v298
  %vm306 = vmor %vm304, %vm305
  %v307 = vsel %vm306, %v298, %v303
  %v308 = vrsqrt.pop %v297
  %v309 = vmul.f32 %v308, %v297
  %v310 = vmul.f32 %v309, %v308
  %v311 = vmul.f32 0.5, %v310
  %v312 = vsub.f32 1.5, %v311
  %v313 = vmul.f32 %v308, %v312
  %vm314 = vweird.f32 %v297
  %vm315 = vweird.f32 %v308
  %vm316 = vmor %vm314, %vm315
  %v317 = vsel %vm316, %v308, %v313
  %v318 = vmul.f32 %v284, %v307
  %v319 = vmul.f32 %v285, %v317
  %v321 = vperm.slane %v274, 0
  %v323 = vmul.f32 %v318, %v321
  %v324 = vmul.f32 %v319, %v321
  %v326 = vperm.slane %v275, 0
  %v328 = vadd.f32 %v323, %v326
  %v329 = vadd.f32 %v324, %v326
  %v330 = vmax.f32 %v328, 0.0
  %v331 = vmax.f32 %v329, 0.0
  %v332 = vld [vmem:[%s55] sm:$0xff]
  %v333 = vld [vmem:[%s55 + $0x8] sm:$0xff]
  %v334 = vld [vmem:[%s55 + $0x10] sm:$0xff]
  %v335 = vld [vmem:[%s55 + $0x18] sm:$0xff]
  %v336 = vld [vmem:[#allocation2] sm:$0x1]
  %v338 = vperm.slane %v336, 0
  %v341 = vsel %vm173, %v330, 0
  %v344 = vsel %vm173, %v331, 0
  %346 = vmatpush.msra.mxu0 0.0
  %347 = vmatpush.msra.mxu0 0.0
  %348 = vmatpush.msra.mxu0 0.0
  %349 = vmatpush.msra.mxu0 0.0
  %350 = vmatpush.msra.mxu0 0.0
  %351 = vmatpush.msra.mxu0 0.0
  %352 = vmatpush.msra.mxu0 0.0
  %353 = vmatpush.msra.mxu0 0.0
  %354 = vmatpush.msra.mxu0 0.0
  %355 = vmatpush.msra.mxu0 0.0
  %356 = vmatpush.msra.mxu0 0.0
  %357 = vmatpush.msra.mxu0 0.0
  %358 = vmatpush.msra.mxu0 %v335
  %359 = vmatpush.msra.mxu0 %v334
  %360 = vmatpush.msra.mxu0 %v333
  %361 = vmatpush.msra.mxu0 %v332
  %362 = vmatmul.f32.gmra.mxu0 %v341
  %v363 = vpop.f32.mrf.mxu0
  %v364 = vadd.f32 %v338, %v363
  %365 = vmatmul.f32.gmra.mxu0 %v344
  %v366 = vpop.f32.mrf.mxu0
  %v367 = vadd.f32 %v338, %v366
  %368 = vdwg.mxu0
  %vm369 = vcmask 7168
  %370 = vst.msk [vmem:[%s61] sm:$0xff] %vm369, %v364
  %371 = vst.msk [vmem:[%s61 + $0x8] sm:$0xff] %vm369, %v367
  %v372 = vld [vmem:[%s9] sm:$0xff]
  %v373 = vld [vmem:[%s9 + $0x8] sm:$0xff]
  %v374 = vld [vmem:[%s9 + $0x10] sm:$0xff]
  %v375 = vld [vmem:[%s9 + $0x18] sm:$0xff]
  %v376 = vld [vmem:[%s13] sm:$0x1]
  %v377 = vld [vmem:[%s3] sm:$0xff]
  %v378 = vld [vmem:[%s3 + $0x8] sm:$0xff]
  %v379 = vld [vmem:[%s7] sm:$0xff]
  %v380 = vld [vmem:[%s7 + $0x8] sm:$0xff]
  %v381 = vld [vmem:[%s7 + $0x10] sm:$0xff]
  %v382 = vld [vmem:[%s7 + $0x18] sm:$0xff]
  %v383 = vld [vmem:[%s11] sm:$0x1]
  %v385 = vperm.slane %v383, 0
  %v388 = vsel %vm173, %v377, 0
  %v391 = vsel %vm173, %v378, 0
  %393 = vmatpush.msra.mxu0 0.0
  %394 = vmatpush.msra.mxu0 0.0
  %395 = vmatpush.msra.mxu0 0.0
  %396 = vmatpush.msra.mxu0 0.0
  %397 = vmatpush.msra.mxu0 0.0
  %398 = vmatpush.msra.mxu0 0.0
  %399 = vmatpush.msra.mxu0 0.0
  %400 = vmatpush.msra.mxu0 0.0
  %401 = vmatpush.msra.mxu0 0.0
  %402 = vmatpush.msra.mxu0 0.0
  %403 = vmatpush.msra.mxu0 0.0
  %404 = vmatpush.msra.mxu0 0.0
  %405 = vmatpush.msra.mxu0 %v382
  %406 = vmatpush.msra.mxu0 %v381
  %407 = vmatpush.msra.mxu0 %v380
  %408 = vmatpush.msra.mxu0 %v379
  %409 = vmatmul.f32.gmra.mxu0 %v388
  %v410 = vpop.f32.mrf.mxu0
  %v411 = vadd.f32 %v385, %v410
  %412 = vmatmul.f32.gmra.mxu0 %v391
  %v413 = vpop.f32.mrf.mxu0
  %v414 = vadd.f32 %v385, %v413
  %415 = vdwg.mxu0
  %v417 = vperm.slane %v376, 0
  %v419 = vadd.f32 %v411, %v417
  %v420 = vadd.f32 %v414, %v417
  %v421 = vld [vmem:[%s5] sm:$0xff]
  %v422 = vld [vmem:[%s5 + $0x8] sm:$0xff]
  %v424 = vsel %vm173, %v421, 0
  %v427 = vsel %vm173, %v422, 0
  %429 = vmatpush.msra.mxu0 0.0
  %430 = vmatpush.msra.mxu0 0.0
  %431 = vmatpush.msra.mxu0 0.0
  %432 = vmatpush.msra.mxu0 0.0
  %433 = vmatpush.msra.mxu0 0.0
  %434 = vmatpush.msra.mxu0 0.0
  %435 = vmatpush.msra.mxu0 0.0
  %436 = vmatpush.msra.mxu0 0.0
  %437 = vmatpush.msra.mxu0 0.0
  %438 = vmatpush.msra.mxu0 0.0
  %439 = vmatpush.msra.mxu0 0.0
  %440 = vmatpush.msra.mxu0 0.0
  %441 = vmatpush.msra.mxu0 %v375
  %442 = vmatpush.msra.mxu0 %v374
  %443 = vmatpush.msra.mxu0 %v373
  %444 = vmatpush.msra.mxu0 %v372
  %445 = vmatmul.f32.gmra.mxu0 %v424
  %v446 = vpop.f32.mrf.mxu0
  %v447 = vadd.f32 0.0, %v446
  %448 = vmatmul.f32.gmra.mxu0 %v427
  %v449 = vpop.f32.mrf.mxu0
  %v450 = vadd.f32 0.0, %v449
  %451 = vdwg.mxu0
  %456 = vrot.lane.b32.xlu0 %v372, 96
  %v457 = vpop.permute.xlu0 %456
  %458 = vrot.lane.b32.xlu0 %v373, 96
  %v459 = vpop.permute.xlu0 %458
  %460 = vrot.lane.b32.xlu0 %v374, 96
  %v461 = vpop.permute.xlu0 %460
  %462 = vrot.lane.b32.xlu0 %v375, 96
  %v463 = vpop.permute.xlu0 %462
  %468 = vmatpush.msra.mxu0 0.0
  %469 = vmatpush.msra.mxu0 0.0
  %470 = vmatpush.msra.mxu0 0.0
  %471 = vmatpush.msra.mxu0 0.0
  %472 = vmatpush.msra.mxu0 0.0
  %473 = vmatpush.msra.mxu0 0.0
  %474 = vmatpush.msra.mxu0 0.0
  %475 = vmatpush.msra.mxu0 0.0
  %476 = vmatpush.msra.mxu0 0.0
  %477 = vmatpush.msra.mxu0 0.0
  %478 = vmatpush.msra.mxu0 0.0
  %479 = vmatpush.msra.mxu0 0.0
  %480 = vmatpush.msra.mxu0 %v463
  %481 = vmatpush.msra.mxu0 %v461
  %482 = vmatpush.msra.mxu0 %v459
  %483 = vmatpush.msra.mxu0 %v457
  %484 = vmatmul.f32.gmra.mxu0 %v424
  %v485 = vpop.f32.mrf.mxu0
  %v486 = vadd.f32 0.0, %v485
  %487 = vmatmul.f32.gmra.mxu0 %v427
  %v488 = vpop.f32.mrf.mxu0
  %v489 = vadd.f32 0.0, %v488
  %490 = vdwg.mxu0
  %491 = vrot.lane.b32.xlu0 %v372, 64
  %v492 = vpop.permute.xlu0 %491
  %493 = vrot.lane.b32.xlu0 %v373, 64
  %v494 = vpop.permute.xlu0 %493
  %495 = vrot.lane.b32.xlu0 %v374, 64
  %v496 = vpop.permute.xlu0 %495
  %497 = vrot.lane.b32.xlu0 %v375, 64
  %v498 = vpop.permute.xlu0 %497
  %503 = vrot.lane.b32.xlu0 %v417, 64
  %v504 = vpop.permute.xlu0 %503
  %506 = vmatpush.msra.mxu0 0.0
  %507 = vmatpush.msra.mxu0 0.0
  %508 = vmatpush.msra.mxu0 0.0
  %509 = vmatpush.msra.mxu0 0.0
  %510 = vmatpush.msra.mxu0 0.0
  %511 = vmatpush.msra.mxu0 0.0
  %512 = vmatpush.msra.mxu0 0.0
  %513 = vmatpush.msra.mxu0 0.0
  %514 = vmatpush.msra.mxu0 0.0
  %515 = vmatpush.msra.mxu0 0.0
  %516 = vmatpush.msra.mxu0 0.0
  %517 = vmatpush.msra.mxu0 0.0
  %518 = vmatpush.msra.mxu0 %v498
  %519 = vmatpush.msra.mxu0 %v496
  %520 = vmatpush.msra.mxu0 %v494
  %521 = vmatpush.msra.mxu0 %v492
  %522 = vmatmul.f32.gmra.mxu0 %v424
  %v523 = vpop.f32.mrf.mxu0
  %v524 = vadd.f32 %v504, %v523
  %525 = vmatmul.f32.gmra.mxu0 %v427
  %v526 = vpop.f32.mrf.mxu0
  %v527 = vadd.f32 %v504, %v526
  %528 = vdwg.mxu0
  %v529 = vadd.f32 %v419, %v447
  %v530 = vadd.f32 %v420, %v450
  %v531 = vxor.u32 %v529, 2147483648
  %v532 = vxor.u32 %v530, 2147483648
  %v533 = vmul.f32 %v531, 1.442695
  %v534 = vpow.pop %v533
  %v535 = vmul.f32 %v532, 1.442695
  %v536 = vpow.pop %v535
  %v537 = vadd.f32 %v534, 1.0
  %v538 = vadd.f32 %v536, 1.0
  %v539 = vrcp.pop %v537
  %v540 = vmul.f32 %v537, %v539
  %v541 = vsub.f32 1.0, %v540
  %v542 = vmul.f32 %v539, %v541
  %v543 = vadd.f32 %v539, %v542
  %vm544 = vweird.f32 %v537
  %vm545 = vweird.f32 %v539
  %vm546 = vmor %vm544, %vm545
  %v547 = vsel %vm546, %v539, %v543
  %v548 = vand.u32 2147483647, %v537
  %vm549 = vcmp.eq.f32.partialorder %v548, 8.507059e+37
  %v550 = vand.u32 %v537, 2147483648
  %v551 = vor.u32 1.1754944e-38, %v550
  %v552 = vsel %vm549, %v551, %v547
  %v553 = vmul.f32 1.0, %v552
  %v554 = vrcp.pop %v538
  %v555 = vmul.f32 %v538, %v554
  %v556 = vsub.f32 1.0, %v555
  %v557 = vmul.f32 %v554, %v556
  %v558 = vadd.f32 %v554, %v557
  %vm559 = vweird.f32 %v538
  %vm560 = vweird.f32 %v554
  %vm561 = vmor %vm559, %vm560
  %v562 = vsel %vm561, %v554, %v558
  %v563 = vand.u32 2147483647, %v538
  %vm564 = vcmp.eq.f32.partialorder %v563, 8.507059e+37
  %v565 = vand.u32 %v538, 2147483648
  %v566 = vor.u32 1.1754944e-38, %v565
  %v567 = vsel %vm564, %v566, %v562
  %v568 = vmul.f32 1.0, %v567
  %571 = vrot.lane.b32.xlu0 %v486, 32
  %v572 = vpop.permute.xlu0 %571
  %573 = vrot.lane.b32.xlu0 %v489, 32
  %v574 = vpop.permute.xlu0 %573
  %v577 = vadd.f32 %v419, %v572
  %v578 = vadd.f32 %v420, %v574
  %v579 = vxor.u32 %v577, 2147483648
  %v580 = vxor.u32 %v578, 2147483648
  %v581 = vmul.f32 %v579, 1.442695
  %v582 = vpow.pop %v581
  %v583 = vmul.f32 %v580, 1.442695
  %v584 = vpow.pop %v583
  %v585 = vadd.f32 %v582, 1.0
  %v586 = vadd.f32 %v584, 1.0
  %v587 = vrcp.pop %v585
  %v588 = vmul.f32 %v585, %v587
  %v589 = vsub.f32 1.0, %v588
  %v590 = vmul.f32 %v587, %v589
  %v591 = vadd.f32 %v587, %v590
  %vm592 = vweird.f32 %v585
  %vm593 = vweird.f32 %v587
  %vm594 = vmor %vm592, %vm593
  %v595 = vsel %vm594, %v587, %v591
  %v596 = vand.u32 2147483647, %v585
  %vm597 = vcmp.eq.f32.partialorder %v596, 8.507059e+37
  %v598 = vand.u32 %v585, 2147483648
  %v599 = vor.u32 1.1754944e-38, %v598
  %v600 = vsel %vm597, %v599, %v595
  %v601 = vmul.f32 1.0, %v600
  %v602 = vrcp.pop %v586
  %v603 = vmul.f32 %v586, %v602
  %v604 = vsub.f32 1.0, %v603
  %v605 = vmul.f32 %v602, %v604
  %v606 = vadd.f32 %v602, %v605
  %vm607 = vweird.f32 %v586
  %vm608 = vweird.f32 %v602
  %vm609 = vmor %vm607, %vm608
  %v610 = vsel %vm609, %v602, %v606
  %v611 = vand.u32 2147483647, %v586
  %vm612 = vcmp.eq.f32.partialorder %v611, 8.507059e+37
  %v613 = vand.u32 %v586, 2147483648
  %v614 = vor.u32 1.1754944e-38, %v613
  %v615 = vsel %vm612, %v614, %v610
  %v616 = vmul.f32 1.0, %v615
  %v617 = vmul.f32 %v553, %v524
  %v618 = vmul.f32 %v568, %v527
  %621 = vrot.lane.b32.xlu0 %v617, 64
  %v622 = vpop.permute.xlu0 %621
  %623 = vrot.lane.b32.xlu0 %v618, 64
  %v624 = vpop.permute.xlu0 %623
  %v627 = vadd.f32 %v411, %v622
  %v628 = vadd.f32 %v414, %v624
  %v629 = vtanh.pop %v627
  %v630 = vtanh.pop %v628
  %v631 = vsub.f32 1.0, %v601
  %v632 = vsub.f32 1.0, %v616
  %635 = vrot.lane.b32.xlu0 %v629, 96
  %v636 = vpop.permute.xlu0 %635
  %637 = vrot.lane.b32.xlu0 %v630, 96
  %v638 = vpop.permute.xlu0 %637
  %v641 = vmul.f32 %v631, %v636
  %v642 = vmul.f32 %v632, %v638
  %643 = vrot.lane.b32.xlu0 %v421, 32
  %v644 = vpop.permute.xlu0 %643
  %645 = vrot.lane.b32.xlu0 %v422, 32
  %v646 = vpop.permute.xlu0 %645
  %v649 = vmul.f32 %v601, %v644
  %v650 = vmul.f32 %v616, %v646
  %v651 = vadd.f32 %v641, %v649
  %v652 = vadd.f32 %v642, %v650
  %655 = vrot.lane.b32.xlu0 %v651, 96
  %v656 = vpop.permute.xlu0 %655
  %657 = vrot.lane.b32.xlu0 %v652, 96
  %v658 = vpop.permute.xlu0 %657
  %v659 = vsel %vm173, %v656, 0
  %v661 = vsel %vm173, %v658, 0
  %663 = vmatpush.msra.mxu0 0.0
  %664 = vmatpush.msra.mxu0 0.0
  %665 = vmatpush.msra.mxu0 0.0
  %666 = vmatpush.msra.mxu0 0.0
  %667 = vmatpush.msra.mxu0 0.0
  %668 = vmatpush.msra.mxu0 0.0
  %669 = vmatpush.msra.mxu0 0.0
  %670 = vmatpush.msra.mxu0 0.0
  %671 = vmatpush.msra.mxu0 0.0
  %672 = vmatpush.msra.mxu0 0.0
  %673 = vmatpush.msra.mxu0 0.0
  %674 = vmatpush.msra.mxu0 0.0
  %675 = vmatpush.msra.mxu0 %v375
  %676 = vmatpush.msra.mxu0 %v374
  %677 = vmatpush.msra.mxu0 %v373
  %678 = vmatpush.msra.mxu0 %v372
  %679 = vmatmul.f32.gmra.mxu0 %v659
  %v680 = vpop.f32.mrf.mxu0
  %v681 = vadd.f32 0.0, %v680
  %682 = vmatmul.f32.gmra.mxu0 %v661
  %v683 = vpop.f32.mrf.mxu0
  %v684 = vadd.f32 0.0, %v683
  %685 = vdwg.mxu0
  %686 = vmatpush.msra.mxu0 0.0
  %687 = vmatpush.msra.mxu0 0.0
  %688 = vmatpush.msra.mxu0 0.0
  %689 = vmatpush.msra.mxu0 0.0
  %690 = vmatpush.msra.mxu0 0.0
  %691 = vmatpush.msra.mxu0 0.0
  %692 = vmatpush.msra.mxu0 0.0
  %693 = vmatpush.msra.mxu0 0.0
  %694 = vmatpush.msra.mxu0 0.0
  %695 = vmatpush.msra.mxu0 0.0
  %696 = vmatpush.msra.mxu0 0.0
  %697 = vmatpush.msra.mxu0 0.0
  %698 = vmatpush.msra.mxu0 %v463
  %699 = vmatpush.msra.mxu0 %v461
  %700 = vmatpush.msra.mxu0 %v459
  %701 = vmatpush.msra.mxu0 %v457
  %702 = vmatmul.f32.gmra.mxu0 %v659
  %v703 = vpop.f32.mrf.mxu0
  %v704 = vadd.f32 0.0, %v703
  %705 = vmatmul.f32.gmra.mxu0 %v661
  %v706 = vpop.f32.mrf.mxu0
  %v707 = vadd.f32 0.0, %v706
  %708 = vdwg.mxu0
  %709 = vmatpush.msra.mxu0 0.0
  %710 = vmatpush.msra.mxu0 0.0
  %711 = vmatpush.msra.mxu0 0.0
  %712 = vmatpush.msra.mxu0 0.0
  %713 = vmatpush.msra.mxu0 0.0
  %714 = vmatpush.msra.mxu0 0.0
  %715 = vmatpush.msra.mxu0 0.0
  %716 = vmatpush.msra.mxu0 0.0
  %717 = vmatpush.msra.mxu0 0.0
  %718 = vmatpush.msra.mxu0 0.0
  %719 = vmatpush.msra.mxu0 0.0
  %720 = vmatpush.msra.mxu0 0.0
  %721 = vmatpush.msra.mxu0 %v498
  %722 = vmatpush.msra.mxu0 %v496
  %723 = vmatpush.msra.mxu0 %v494
  %724 = vmatpush.msra.mxu0 %v492
  %725 = vmatmul.f32.gmra.mxu0 %v659
  %v726 = vpop.f32.mrf.mxu0
  %v727 = vadd.f32 %v504, %v726
  %728 = vmatmul.f32.gmra.mxu0 %v661
  %v729 = vpop.f32.mrf.mxu0
  %v730 = vadd.f32 %v504, %v729
  %731 = vdwg.mxu0
  %v732 = vadd.f32 %v419, %v681
  %v733 = vadd.f32 %v420, %v684
  %v734 = vxor.u32 %v732, 2147483648
  %v735 = vxor.u32 %v733, 2147483648
  %v736 = vmul.f32 %v734, 1.442695
  %v737 = vpow.pop %v736
  %v738 = vmul.f32 %v735, 1.442695
  %v739 = vpow.pop %v738
  %v740 = vadd.f32 %v737, 1.0
  %v741 = vadd.f32 %v739, 1.0
  %v742 = vrcp.pop %v740
  %v743 = vmul.f32 %v740, %v742
  %v744 = vsub.f32 1.0, %v743
  %v745 = vmul.f32 %v742, %v744
  %v746 = vadd.f32 %v742, %v745
  %vm747 = vweird.f32 %v740
  %vm748 = vweird.f32 %v742
  %vm749 = vmor %vm747, %vm748
  %v750 = vsel %vm749, %v742, %v746
  %v751 = vand.u32 2147483647, %v740
  %vm752 = vcmp.eq.f32.partialorder %v751, 8.507059e+37
  %v753 = vand.u32 %v740, 2147483648
  %v754 = vor.u32 1.1754944e-38, %v753
  %v755 = vsel %vm752, %v754, %v750
  %v756 = vmul.f32 1.0, %v755
  %v757 = vrcp.pop %v741
  %v758 = vmul.f32 %v741, %v757
  %v759 = vsub.f32 1.0, %v758
  %v760 = vmul.f32 %v757, %v759
  %v761 = vadd.f32 %v757, %v760
  %vm762 = vweird.f32 %v741
  %vm763 = vweird.f32 %v757
  %vm764 = vmor %vm762, %vm763
  %v765 = vsel %vm764, %v757, %v761
  %v766 = vand.u32 2147483647, %v741
  %vm767 = vcmp.eq.f32.partialorder %v766, 8.507059e+37
  %v768 = vand.u32 %v741, 2147483648
  %v769 = vor.u32 1.1754944e-38, %v768
  %v770 = vsel %vm767, %v769, %v765
  %v771 = vmul.f32 1.0, %v770
  %774 = vrot.lane.b32.xlu0 %v704, 32
  %v775 = vpop.permute.xlu0 %774
  %776 = vrot.lane.b32.xlu0 %v707, 32
  %v777 = vpop.permute.xlu0 %776
  %v780 = vadd.f32 %v419, %v775
  %v781 = vadd.f32 %v420, %v777
  %v782 = vxor.u32 %v780, 2147483648
  %v783 = vxor.u32 %v781, 2147483648
  %v784 = vmul.f32 %v782, 1.442695
  %v785 = vpow.pop %v784
  %v786 = vmul.f32 %v783, 1.442695
  %v787 = vpow.pop %v786
  %v788 = vadd.f32 %v785, 1.0
  %v789 = vadd.f32 %v787, 1.0
  %v790 = vrcp.pop %v788
  %v791 = vmul.f32 %v788, %v790
  %v792 = vsub.f32 1.0, %v791
  %v793 = vmul.f32 %v790, %v792
  %v794 = vadd.f32 %v790, %v793
  %vm795 = vweird.f32 %v788
  %vm796 = vweird.f32 %v790
  %vm797 = vmor %vm795, %vm796
  %v798 = vsel %vm797, %v790, %v794
  %v799 = vand.u32 2147483647, %v788
  %vm800 = vcmp.eq.f32.partialorder %v799, 8.507059e+37
  %v801 = vand.u32 %v788, 2147483648
  %v802 = vor.u32 1.1754944e-38, %v801
  %v803 = vsel %vm800, %v802, %v798
  %v804 = vmul.f32 1.0, %v803
  %v805 = vrcp.pop %v789
  %v806 = vmul.f32 %v789, %v805
  %v807 = vsub.f32 1.0, %v806
  %v808 = vmul.f32 %v805, %v807
  %v809 = vadd.f32 %v805, %v808
  %vm810 = vweird.f32 %v789
  %vm811 = vweird.f32 %v805
  %vm812 = vmor %vm810, %vm811
  %v813 = vsel %vm812, %v805, %v809
  %v814 = vand.u32 2147483647, %v789
  %vm815 = vcmp.eq.f32.partialorder %v814, 8.507059e+37
  %v816 = vand.u32 %v789, 2147483648
  %v817 = vor.u32 1.1754944e-38, %v816
  %v818 = vsel %vm815, %v817, %v813
  %v819 = vmul.f32 1.0, %v818
  %v820 = vmul.f32 %v756, %v727
  %v821 = vmul.f32 %v771, %v730
  %824 = vrot.lane.b32.xlu0 %v820, 64
  %v825 = vpop.permute.xlu0 %824
  %826 = vrot.lane.b32.xlu0 %v821, 64
  %v827 = vpop.permute.xlu0 %826
  %v830 = vadd.f32 %v411, %v825
  %v831 = vadd.f32 %v414, %v827
  %v832 = vtanh.pop %v830
  %v833 = vtanh.pop %v831
  %v834 = vsub.f32 1.0, %v804
  %v835 = vsub.f32 1.0, %v819
  %838 = vrot.lane.b32.xlu0 %v832, 96
  %v839 = vpop.permute.xlu0 %838
  %840 = vrot.lane.b32.xlu0 %v833, 96
  %v841 = vpop.permute.xlu0 %840
  %v844 = vmul.f32 %v834, %v839
  %v845 = vmul.f32 %v835, %v841
  %v846 = vmul.f32 %v804, %v651
  %v847 = vmul.f32 %v819, %v652
  %v848 = vadd.f32 %v844, %v846
  %v849 = vadd.f32 %v845, %v847
  %852 = vrot.lane.b32.xlu0 %v848, 96
  %v853 = vpop.permute.xlu0 %852
  %854 = vrot.lane.b32.xlu0 %v849, 96
  %v855 = vpop.permute.xlu0 %854
  %v856 = vsel %vm173, %v853, 0
  %v858 = vsel %vm173, %v855, 0
  %860 = vmatpush.msra.mxu0 0.0
  %861 = vmatpush.msra.mxu0 0.0
  %862 = vmatpush.msra.mxu0 0.0
  %863 = vmatpush.msra.mxu0 0.0
  %864 = vmatpush.msra.mxu0 0.0
  %865 = vmatpush.msra.mxu0 0.0
  %866 = vmatpush.msra.mxu0 0.0
  %867 = vmatpush.msra.mxu0 0.0
  %868 = vmatpush.msra.mxu0 0.0
  %869 = vmatpush.msra.mxu0 0.0
  %870 = vmatpush.msra.mxu0 0.0
  %871 = vmatpush.msra.mxu0 0.0
  %872 = vmatpush.msra.mxu0 %v375
  %873 = vmatpush.msra.mxu0 %v374
  %874 = vmatpush.msra.mxu0 %v373
  %875 = vmatpush.msra.mxu0 %v372
  %876 = vmatmul.f32.gmra.mxu0 %v856
  %v877 = vpop.f32.mrf.mxu0
  %v878 = vadd.f32 0.0, %v877
  %879 = vmatmul.f32.gmra.mxu0 %v858
  %v880 = vpop.f32.mrf.mxu0
  %v881 = vadd.f32 0.0, %v880
  %882 = vdwg.mxu0
  %883 = vmatpush.msra.mxu0 0.0
  %884 = vmatpush.msra.mxu0 0.0
  %885 = vmatpush.msra.mxu0 0.0
  %886 = vmatpush.msra.mxu0 0.0
  %887 = vmatpush.msra.mxu0 0.0
  %888 = vmatpush.msra.mxu0 0.0
  %889 = vmatpush.msra.mxu0 0.0
  %890 = vmatpush.msra.mxu0 0.0
  %891 = vmatpush.msra.mxu0 0.0
  %892 = vmatpush.msra.mxu0 0.0
  %893 = vmatpush.msra.mxu0 0.0
  %894 = vmatpush.msra.mxu0 0.0
  %895 = vmatpush.msra.mxu0 %v463
  %896 = vmatpush.msra.mxu0 %v461
  %897 = vmatpush.msra.mxu0 %v459
  %898 = vmatpush.msra.mxu0 %v457
  %899 = vmatmul.f32.gmra.mxu0 %v856
  %v900 = vpop.f32.mrf.mxu0
  %v901 = vadd.f32 0.0, %v900
  %902 = vmatmul.f32.gmra.mxu0 %v858
  %v903 = vpop.f32.mrf.mxu0
  %v904 = vadd.f32 0.0, %v903
  %905 = vdwg.mxu0
  %906 = vmatpush.msra.mxu0 0.0
  %907 = vmatpush.msra.mxu0 0.0
  %908 = vmatpush.msra.mxu0 0.0
  %909 = vmatpush.msra.mxu0 0.0
  %910 = vmatpush.msra.mxu0 0.0
  %911 = vmatpush.msra.mxu0 0.0
  %912 = vmatpush.msra.mxu0 0.0
  %913 = vmatpush.msra.mxu0 0.0
  %914 = vmatpush.msra.mxu0 0.0
  %915 = vmatpush.msra.mxu0 0.0
  %916 = vmatpush.msra.mxu0 0.0
  %917 = vmatpush.msra.mxu0 0.0
  %918 = vmatpush.msra.mxu0 %v498
  %919 = vmatpush.msra.mxu0 %v496
  %920 = vmatpush.msra.mxu0 %v494
  %921 = vmatpush.msra.mxu0 %v492
  %922 = vmatmul.f32.gmra.mxu0 %v856
  %v923 = vpop.f32.mrf.mxu0
  %v924 = vadd.f32 %v504, %v923
  %925 = vmatmul.f32.gmra.mxu0 %v858
  %v926 = vpop.f32.mrf.mxu0
  %v927 = vadd.f32 %v504, %v926
  %928 = vdwg.mxu0
  %v929 = vadd.f32 %v419, %v878
  %v930 = vadd.f32 %v420, %v881
  %v931 = vxor.u32 %v929, 2147483648
  %v932 = vxor.u32 %v930, 2147483648
  %v933 = vmul.f32 %v931, 1.442695
  %v934 = vpow.pop %v933
  %v935 = vmul.f32 %v932, 1.442695
  %v936 = vpow.pop %v935
  %v937 = vadd.f32 %v934, 1.0
  %v938 = vadd.f32 %v936, 1.0
  %v939 = vrcp.pop %v937
  %v940 = vmul.f32 %v937, %v939
  %v941 = vsub.f32 1.0, %v940
  %v942 = vmul.f32 %v939, %v941
  %v943 = vadd.f32 %v939, %v942
  %vm944 = vweird.f32 %v937
  %vm945 = vweird.f32 %v939
  %vm946 = vmor %vm944, %vm945
  %v947 = vsel %vm946, %v939, %v943
  %v948 = vand.u32 2147483647, %v937
  %vm949 = vcmp.eq.f32.partialorder %v948, 8.507059e+37
  %v950 = vand.u32 %v937, 2147483648
  %v951 = vor.u32 1.1754944e-38, %v950
  %v952 = vsel %vm949, %v951, %v947
  %v953 = vmul.f32 1.0, %v952
  %v954 = vrcp.pop %v938
  %v955 = vmul.f32 %v938, %v954
  %v956 = vsub.f32 1.0, %v955
  %v957 = vmul.f32 %v954, %v956
  %v958 = vadd.f32 %v954, %v957
  %vm959 = vweird.f32 %v938
  %vm960 = vweird.f32 %v954
  %vm961 = vmor %vm959, %vm960
  %v962 = vsel %vm961, %v954, %v958
  %v963 = vand.u32 2147483647, %v938
  %vm964 = vcmp.eq.f32.partialorder %v963, 8.507059e+37
  %v965 = vand.u32 %v938, 2147483648
  %v966 = vor.u32 1.1754944e-38, %v965
  %v967 = vsel %vm964, %v966, %v962
  %v968 = vmul.f32 1.0, %v967
  %971 = vrot.lane.b32.xlu0 %v901, 32
  %v972 = vpop.permute.xlu0 %971
  %973 = vrot.lane.b32.xlu0 %v904, 32
  %v974 = vpop.permute.xlu0 %973
  %v977 = vadd.f32 %v419, %v972
  %v978 = vadd.f32 %v420, %v974
  %v979 = vxor.u32 %v977, 2147483648
  %v980 = vxor.u32 %v978, 2147483648
  %v981 = vmul.f32 %v979, 1.442695
  %v982 = vpow.pop %v981
  %v983 = vmul.f32 %v980, 1.442695
  %v984 = vpow.pop %v983
  %v985 = vadd.f32 %v982, 1.0
  %v986 = vadd.f32 %v984, 1.0
  %v987 = vrcp.pop %v985
  %v988 = vmul.f32 %v985, %v987
  %v989 = vsub.f32 1.0, %v988
  %v990 = vmul.f32 %v987, %v989
  %v991 = vadd.f32 %v987, %v990
  %vm992 = vweird.f32 %v985
  %vm993 = vweird.f32 %v987
  %vm994 = vmor %vm992, %vm993
  %v995 = vsel %vm994, %v987, %v991
  %v996 = vand.u32 2147483647, %v985
  %vm997 = vcmp.eq.f32.partialorder %v996, 8.507059e+37
  %v998 = vand.u32 %v985, 2147483648
  %v999 = vor.u32 1.1754944e-38, %v998
  %v1000 = vsel %vm997, %v999, %v995
  %v1001 = vmul.f32 1.0, %v1000
  %v1002 = vrcp.pop %v986
  %v1003 = vmul.f32 %v986, %v1002
  %v1004 = vsub.f32 1.0, %v1003
  %v1005 = vmul.f32 %v1002, %v1004
  %v1006 = vadd.f32 %v1002, %v1005
  %vm1007 = vweird.f32 %v986
  %vm1008 = vweird.f32 %v1002
  %vm1009 = vmor %vm1007, %vm1008
  %v1010 = vsel %vm1009, %v1002, %v1006
  %v1011 = vand.u32 2147483647, %v986
  %vm1012 = vcmp.eq.f32.partialorder %v1011, 8.507059e+37
  %v1013 = vand.u32 %v986, 2147483648
  %v1014 = vor.u32 1.1754944e-38, %v1013
  %v1015 = vsel %vm1012, %v1014, %v1010
  %v1016 = vmul.f32 1.0, %v1015
  %v1017 = vmul.f32 %v953, %v924
  %v1018 = vmul.f32 %v968, %v927
  %1021 = vrot.lane.b32.xlu0 %v1017, 64
  %v1022 = vpop.permute.xlu0 %1021
  %1023 = vrot.lane.b32.xlu0 %v1018, 64
  %v1024 = vpop.permute.xlu0 %1023
  %v1027 = vadd.f32 %v411, %v1022
  %v1028 = vadd.f32 %v414, %v1024
  %v1029 = vtanh.pop %v1027
  %v1030 = vtanh.pop %v1028
  %v1031 = vsub.f32 1.0, %v1001
  %v1032 = vsub.f32 1.0, %v1016
  %1035 = vrot.lane.b32.xlu0 %v1029, 96
  %v1036 = vpop.permute.xlu0 %1035
  %1037 = vrot.lane.b32.xlu0 %v1030, 96
  %v1038 = vpop.permute.xlu0 %1037
  %v1041 = vmul.f32 %v1031, %v1036
  %v1042 = vmul.f32 %v1032, %v1038
  %v1043 = vmul.f32 %v1001, %v848
  %v1044 = vmul.f32 %v1016, %v849
  %v1045 = vadd.f32 %v1041, %v1043
  %v1046 = vadd.f32 %v1042, %v1044
  %1049 = vrot.lane.b32.xlu0 %v1045, 96
  %v1050 = vpop.permute.xlu0 %1049
  %1051 = vrot.lane.b32.xlu0 %v1046, 96
  %v1052 = vpop.permute.xlu0 %1051
  %v1053 = vsel %vm173, %v1050, 0
  %v1055 = vsel %vm173, %v1052, 0
  %1057 = vmatpush.msra.mxu0 0.0
  %1058 = vmatpush.msra.mxu0 0.0
  %1059 = vmatpush.msra.mxu0 0.0
  %1060 = vmatpush.msra.mxu0 0.0
  %1061 = vmatpush.msra.mxu0 0.0
  %1062 = vmatpush.msra.mxu0 0.0
  %1063 = vmatpush.msra.mxu0 0.0
  %1064 = vmatpush.msra.mxu0 0.0
  %1065 = vmatpush.msra.mxu0 0.0
  %1066 = vmatpush.msra.mxu0 0.0
  %1067 = vmatpush.msra.mxu0 0.0
  %1068 = vmatpush.msra.mxu0 0.0
  %1069 = vmatpush.msra.mxu0 %v375
  %1070 = vmatpush.msra.mxu0 %v374
  %1071 = vmatpush.msra.mxu0 %v373
  %1072 = vmatpush.msra.mxu0 %v372
  %1073 = vmatmul.f32.gmra.mxu0 %v1053
  %v1074 = vpop.f32.mrf.mxu0
  %v1075 = vadd.f32 0.0, %v1074
  %1076 = vmatmul.f32.gmra.mxu0 %v1055
  %v1077 = vpop.f32.mrf.mxu0
  %v1078 = vadd.f32 0.0, %v1077
  %1079 = vdwg.mxu0
  %1080 = vmatpush.msra.mxu0 0.0
  %1081 = vmatpush.msra.mxu0 0.0
  %1082 = vmatpush.msra.mxu0 0.0
  %1083 = vmatpush.msra.mxu0 0.0
  %1084 = vmatpush.msra.mxu0 0.0
  %1085 = vmatpush.msra.mxu0 0.0
  %1086 = vmatpush.msra.mxu0 0.0
  %1087 = vmatpush.msra.mxu0 0.0
  %1088 = vmatpush.msra.mxu0 0.0
  %1089 = vmatpush.msra.mxu0 0.0
  %1090 = vmatpush.msra.mxu0 0.0
  %1091 = vmatpush.msra.mxu0 0.0
  %1092 = vmatpush.msra.mxu0 %v463
  %1093 = vmatpush.msra.mxu0 %v461
  %1094 = vmatpush.msra.mxu0 %v459
  %1095 = vmatpush.msra.mxu0 %v457
  %1096 = vmatmul.f32.gmra.mxu0 %v1053
  %v1097 = vpop.f32.mrf.mxu0
  %v1098 = vadd.f32 0.0, %v1097
  %1099 = vmatmul.f32.gmra.mxu0 %v1055
  %v1100 = vpop.f32.mrf.mxu0
  %v1101 = vadd.f32 0.0, %v1100
  %1102 = vdwg.mxu0
  %1103 = vmatpush.msra.mxu0 0.0
  %1104 = vmatpush.msra.mxu0 0.0
  %1105 = vmatpush.msra.mxu0 0.0
  %1106 = vmatpush.msra.mxu0 0.0
  %1107 = vmatpush.msra.mxu0 0.0
  %1108 = vmatpush.msra.mxu0 0.0
  %1109 = vmatpush.msra.mxu0 0.0
  %1110 = vmatpush.msra.mxu0 0.0
  %1111 = vmatpush.msra.mxu0 0.0
  %1112 = vmatpush.msra.mxu0 0.0
  %1113 = vmatpush.msra.mxu0 0.0
  %1114 = vmatpush.msra.mxu0 0.0
  %1115 = vmatpush.msra.mxu0 %v498
  %1116 = vmatpush.msra.mxu0 %v496
  %1117 = vmatpush.msra.mxu0 %v494
  %1118 = vmatpush.msra.mxu0 %v492
  %1119 = vmatmul.f32.gmra.mxu0 %v1053
  %v1120 = vpop.f32.mrf.mxu0
  %v1121 = vadd.f32 %v504, %v1120
  %1122 = vmatmul.f32.gmra.mxu0 %v1055
  %v1123 = vpop.f32.mrf.mxu0
  %v1124 = vadd.f32 %v504, %v1123
  %1125 = vdwg.mxu0
  %v1126 = vadd.f32 %v419, %v1075
  %v1127 = vadd.f32 %v420, %v1078
  %v1128 = vxor.u32 %v1126, 2147483648
  %v1129 = vxor.u32 %v1127, 2147483648
  %v1130 = vmul.f32 %v1128, 1.442695
  %v1131 = vpow.pop %v1130
  %v1132 = vmul.f32 %v1129, 1.442695
  %v1133 = vpow.pop %v1132
  %v1134 = vadd.f32 %v1131, 1.0
  %v1135 = vadd.f32 %v1133, 1.0
  %v1136 = vrcp.pop %v1134
  %v1137 = vmul.f32 %v1134, %v1136
  %v1138 = vsub.f32 1.0, %v1137
  %v1139 = vmul.f32 %v1136, %v1138
  %v1140 = vadd.f32 %v1136, %v1139
  %vm1141 = vweird.f32 %v1134
  %vm1142 = vweird.f32 %v1136
  %vm1143 = vmor %vm1141, %vm1142
  %v1144 = vsel %vm1143, %v1136, %v1140
  %v1145 = vand.u32 2147483647, %v1134
  %vm1146 = vcmp.eq.f32.partialorder %v1145, 8.507059e+37
  %v1147 = vand.u32 %v1134, 2147483648
  %v1148 = vor.u32 1.1754944e-38, %v1147
  %v1149 = vsel %vm1146, %v1148, %v1144
  %v1150 = vmul.f32 1.0, %v1149
  %v1151 = vrcp.pop %v1135
  %v1152 = vmul.f32 %v1135, %v1151
  %v1153 = vsub.f32 1.0, %v1152
  %v1154 = vmul.f32 %v1151, %v1153
  %v1155 = vadd.f32 %v1151, %v1154
  %vm1156 = vweird.f32 %v1135
  %vm1157 = vweird.f32 %v1151
  %vm1158 = vmor %vm1156, %vm1157
  %v1159 = vsel %vm1158, %v1151, %v1155
  %v1160 = vand.u32 2147483647, %v1135
  %vm1161 = vcmp.eq.f32.partialorder %v1160, 8.507059e+37
  %v1162 = vand.u32 %v1135, 2147483648
  %v1163 = vor.u32 1.1754944e-38, %v1162
  %v1164 = vsel %vm1161, %v1163, %v1159
  %v1165 = vmul.f32 1.0, %v1164
  %1168 = vrot.lane.b32.xlu0 %v1098, 32
  %v1169 = vpop.permute.xlu0 %1168
  %1170 = vrot.lane.b32.xlu0 %v1101, 32
  %v1171 = vpop.permute.xlu0 %1170
  %v1174 = vadd.f32 %v419, %v1169
  %v1175 = vadd.f32 %v420, %v1171
  %v1176 = vxor.u32 %v1174, 2147483648
  %v1177 = vxor.u32 %v1175, 2147483648
  %v1178 = vmul.f32 %v1176, 1.442695
  %v1179 = vpow.pop %v1178
  %v1180 = vmul.f32 %v1177, 1.442695
  %v1181 = vpow.pop %v1180
  %v1182 = vadd.f32 %v1179, 1.0
  %v1183 = vadd.f32 %v1181, 1.0
  %v1184 = vrcp.pop %v1182
  %v1185 = vmul.f32 %v1182, %v1184
  %v1186 = vsub.f32 1.0, %v1185
  %v1187 = vmul.f32 %v1184, %v1186
  %v1188 = vadd.f32 %v1184, %v1187
  %vm1189 = vweird.f32 %v1182
  %vm1190 = vweird.f32 %v1184
  %vm1191 = vmor %vm1189, %vm1190
  %v1192 = vsel %vm1191, %v1184, %v1188
  %v1193 = vand.u32 2147483647, %v1182
  %vm1194 = vcmp.eq.f32.partialorder %v1193, 8.507059e+37
  %v1195 = vand.u32 %v1182, 2147483648
  %v1196 = vor.u32 1.1754944e-38, %v1195
  %v1197 = vsel %vm1194, %v1196, %v1192
  %v1198 = vmul.f32 1.0, %v1197
  %v1199 = vrcp.pop %v1183
  %v1200 = vmul.f32 %v1183, %v1199
  %v1201 = vsub.f32 1.0, %v1200
  %v1202 = vmul.f32 %v1199, %v1201
  %v1203 = vadd.f32 %v1199, %v1202
  %vm1204 = vweird.f32 %v1183
  %vm1205 = vweird.f32 %v1199
  %vm1206 = vmor %vm1204, %vm1205
  %v1207 = vsel %vm1206, %v1199, %v1203
  %v1208 = vand.u32 2147483647, %v1183
  %vm1209 = vcmp.eq.f32.partialorder %v1208, 8.507059e+37
  %v1210 = vand.u32 %v1183, 2147483648
  %v1211 = vor.u32 1.1754944e-38, %v1210
  %v1212 = vsel %vm1209, %v1211, %v1207
  %v1213 = vmul.f32 1.0, %v1212
  %v1214 = vmul.f32 %v1150, %v1121
  %v1215 = vmul.f32 %v1165, %v1124
  %1218 = vrot.lane.b32.xlu0 %v1214, 64
  %v1219 = vpop.permute.xlu0 %1218
  %1220 = vrot.lane.b32.xlu0 %v1215, 64
  %v1221 = vpop.permute.xlu0 %1220
  %v1224 = vadd.f32 %v411, %v1219
  %v1225 = vadd.f32 %v414, %v1221
  %v1226 = vtanh.pop %v1224
  %v1227 = vtanh.pop %v1225
  %v1228 = vsub.f32 1.0, %v1198
  %v1229 = vsub.f32 1.0, %v1213
  %1232 = vrot.lane.b32.xlu0 %v1226, 96
  %v1233 = vpop.permute.xlu0 %1232
  %1234 = vrot.lane.b32.xlu0 %v1227, 96
  %v1235 = vpop.permute.xlu0 %1234
  %v1238 = vmul.f32 %v1228, %v1233
  %v1239 = vmul.f32 %v1229, %v1235
  %v1240 = vmul.f32 %v1198, %v1045
  %v1241 = vmul.f32 %v1213, %v1046
  %v1242 = vadd.f32 %v1238, %v1240
  %v1243 = vadd.f32 %v1239, %v1241
  %1246 = vrot.lane.b32.xlu0 %v1242, 96
  %v1247 = vpop.permute.xlu0 %1246
  %1248 = vrot.lane.b32.xlu0 %v1243, 96
  %v1249 = vpop.permute.xlu0 %1248
  %v1250 = vsel %vm173, %v1247, 0
  %v1252 = vsel %vm173, %v1249, 0
  %1254 = vmatpush.msra.mxu0 0.0
  %1255 = vmatpush.msra.mxu0 0.0
  %1256 = vmatpush.msra.mxu0 0.0
  %1257 = vmatpush.msra.mxu0 0.0
  %1258 = vmatpush.msra.mxu0 0.0
  %1259 = vmatpush.msra.mxu0 0.0
  %1260 = vmatpush.msra.mxu0 0.0
  %1261 = vmatpush.msra.mxu0 0.0
  %1262 = vmatpush.msra.mxu0 0.0
  %1263 = vmatpush.msra.mxu0 0.0
  %1264 = vmatpush.msra.mxu0 0.0
  %1265 = vmatpush.msra.mxu0 0.0
  %1266 = vmatpush.msra.mxu0 %v375
  %1267 = vmatpush.msra.mxu0 %v374
  %1268 = vmatpush.msra.mxu0 %v373
  %1269 = vmatpush.msra.mxu0 %v372
  %1270 = vmatmul.f32.gmra.mxu0 %v1250
  %v1271 = vpop.f32.mrf.mxu0
  %v1272 = vadd.f32 0.0, %v1271
  %1273 = vmatmul.f32.gmra.mxu0 %v1252
  %v1274 = vpop.f32.mrf.mxu0
  %v1275 = vadd.f32 0.0, %v1274
  %1276 = vdwg.mxu0
  %1277 = vmatpush.msra.mxu0 0.0
  %1278 = vmatpush.msra.mxu0 0.0
  %1279 = vmatpush.msra.mxu0 0.0
  %1280 = vmatpush.msra.mxu0 0.0
  %1281 = vmatpush.msra.mxu0 0.0
  %1282 = vmatpush.msra.mxu0 0.0
  %1283 = vmatpush.msra.mxu0 0.0
  %1284 = vmatpush.msra.mxu0 0.0
  %1285 = vmatpush.msra.mxu0 0.0
  %1286 = vmatpush.msra.mxu0 0.0
  %1287 = vmatpush.msra.mxu0 0.0
  %1288 = vmatpush.msra.mxu0 0.0
  %1289 = vmatpush.msra.mxu0 %v463
  %1290 = vmatpush.msra.mxu0 %v461
  %1291 = vmatpush.msra.mxu0 %v459
  %1292 = vmatpush.msra.mxu0 %v457
  %1293 = vmatmul.f32.gmra.mxu0 %v1250
  %v1294 = vpop.f32.mrf.mxu0
  %v1295 = vadd.f32 0.0, %v1294
  %1296 = vmatmul.f32.gmra.mxu0 %v1252
  %v1297 = vpop.f32.mrf.mxu0
  %v1298 = vadd.f32 0.0, %v1297
  %1299 = vdwg.mxu0
  %1300 = vmatpush.msra.mxu0 0.0
  %1301 = vmatpush.msra.mxu0 0.0
  %1302 = vmatpush.msra.mxu0 0.0
  %1303 = vmatpush.msra.mxu0 0.0
  %1304 = vmatpush.msra.mxu0 0.0
  %1305 = vmatpush.msra.mxu0 0.0
  %1306 = vmatpush.msra.mxu0 0.0
  %1307 = vmatpush.msra.mxu0 0.0
  %1308 = vmatpush.msra.mxu0 0.0
  %1309 = vmatpush.msra.mxu0 0.0
  %1310 = vmatpush.msra.mxu0 0.0
  %1311 = vmatpush.msra.mxu0 0.0
  %1312 = vmatpush.msra.mxu0 %v498
  %1313 = vmatpush.msra.mxu0 %v496
  %1314 = vmatpush.msra.mxu0 %v494
  %1315 = vmatpush.msra.mxu0 %v492
  %1316 = vmatmul.f32.gmra.mxu0 %v1250
  %v1317 = vpop.f32.mrf.mxu0
  %v1318 = vadd.f32 %v504, %v1317
  %1319 = vmatmul.f32.gmra.mxu0 %v1252
  %v1320 = vpop.f32.mrf.mxu0
  %v1321 = vadd.f32 %v504, %v1320
  %1322 = vdwg.mxu0
  %v1323 = vadd.f32 %v419, %v1272
  %v1324 = vadd.f32 %v420, %v1275
  %v1325 = vxor.u32 %v1323, 2147483648
  %v1326 = vxor.u32 %v1324, 2147483648
  %v1327 = vmul.f32 %v1325, 1.442695
  %v1328 = vpow.pop %v1327
  %v1329 = vmul.f32 %v1326, 1.442695
  %v1330 = vpow.pop %v1329
  %v1331 = vadd.f32 %v1328, 1.0
  %v1332 = vadd.f32 %v1330, 1.0
  %v1333 = vrcp.pop %v1331
  %v1334 = vmul.f32 %v1331, %v1333
  %v1335 = vsub.f32 1.0, %v1334
  %v1336 = vmul.f32 %v1333, %v1335
  %v1337 = vadd.f32 %v1333, %v1336
  %vm1338 = vweird.f32 %v1331
  %vm1339 = vweird.f32 %v1333
  %vm1340 = vmor %vm1338, %vm1339
  %v1341 = vsel %vm1340, %v1333, %v1337
  %v1342 = vand.u32 2147483647, %v1331
  %vm1343 = vcmp.eq.f32.partialorder %v1342, 8.507059e+37
  %v1344 = vand.u32 %v1331, 2147483648
  %v1345 = vor.u32 1.1754944e-38, %v1344
  %v1346 = vsel %vm1343, %v1345, %v1341
  %v1347 = vmul.f32 1.0, %v1346
  %v1348 = vrcp.pop %v1332
  %v1349 = vmul.f32 %v1332, %v1348
  %v1350 = vsub.f32 1.0, %v1349
  %v1351 = vmul.f32 %v1348, %v1350
  %v1352 = vadd.f32 %v1348, %v1351
  %vm1353 = vweird.f32 %v1332
  %vm1354 = vweird.f32 %v1348
  %vm1355 = vmor %vm1353, %vm1354
  %v1356 = vsel %vm1355, %v1348, %v1352
  %v1357 = vand.u32 2147483647, %v1332
  %vm1358 = vcmp.eq.f32.partialorder %v1357, 8.507059e+37
  %v1359 = vand.u32 %v1332, 2147483648
  %v1360 = vor.u32 1.1754944e-38, %v1359
  %v1361 = vsel %vm1358, %v1360, %v1356
  %v1362 = vmul.f32 1.0, %v1361
  %1365 = vrot.lane.b32.xlu0 %v1295, 32
  %v1366 = vpop.permute.xlu0 %1365
  %1367 = vrot.lane.b32.xlu0 %v1298, 32
  %v1368 = vpop.permute.xlu0 %1367
  %v1371 = vadd.f32 %v419, %v1366
  %v1372 = vadd.f32 %v420, %v1368
  %v1373 = vxor.u32 %v1371, 2147483648
  %v1374 = vxor.u32 %v1372, 2147483648
  %v1375 = vmul.f32 %v1373, 1.442695
  %v1376 = vpow.pop %v1375
  %v1377 = vmul.f32 %v1374, 1.442695
  %v1378 = vpow.pop %v1377
  %v1379 = vadd.f32 %v1376, 1.0
  %v1380 = vadd.f32 %v1378, 1.0
  %v1381 = vrcp.pop %v1379
  %v1382 = vmul.f32 %v1379, %v1381
  %v1383 = vsub.f32 1.0, %v1382
  %v1384 = vmul.f32 %v1381, %v1383
  %v1385 = vadd.f32 %v1381, %v1384
  %vm1386 = vweird.f32 %v1379
  %vm1387 = vweird.f32 %v1381
  %vm1388 = vmor %vm1386, %vm1387
  %v1389 = vsel %vm1388, %v1381, %v1385
  %v1390 = vand.u32 2147483647, %v1379
  %vm1391 = vcmp.eq.f32.partialorder %v1390, 8.507059e+37
  %v1392 = vand.u32 %v1379, 2147483648
  %v1393 = vor.u32 1.1754944e-38, %v1392
  %v1394 = vsel %vm1391, %v1393, %v1389
  %v1395 = vmul.f32 1.0, %v1394
  %v1396 = vrcp.pop %v1380
  %v1397 = vmul.f32 %v1380, %v1396
  %v1398 = vsub.f32 1.0, %v1397
  %v1399 = vmul.f32 %v1396, %v1398
  %v1400 = vadd.f32 %v1396, %v1399
  %vm1401 = vweird.f32 %v1380
  %vm1402 = vweird.f32 %v1396
  %vm1403 = vmor %vm1401, %vm1402
  %v1404 = vsel %vm1403, %v1396, %v1400
  %v1405 = vand.u32 2147483647, %v1380
  %vm1406 = vcmp.eq.f32.partialorder %v1405, 8.507059e+37
  %v1407 = vand.u32 %v1380, 2147483648
  %v1408 = vor.u32 1.1754944e-38, %v1407
  %v1409 = vsel %vm1406, %v1408, %v1404
  %v1410 = vmul.f32 1.0, %v1409
  %v1411 = vmul.f32 %v1347, %v1318
  %v1412 = vmul.f32 %v1362, %v1321
  %1415 = vrot.lane.b32.xlu0 %v1411, 64
  %v1416 = vpop.permute.xlu0 %1415
  %1417 = vrot.lane.b32.xlu0 %v1412, 64
  %v1418 = vpop.permute.xlu0 %1417
  %v1421 = vadd.f32 %v411, %v1416
  %v1422 = vadd.f32 %v414, %v1418
  %v1423 = vtanh.pop %v1421
  %v1424 = vtanh.pop %v1422
  %v1425 = vsub.f32 1.0, %v1395
  %v1426 = vsub.f32 1.0, %v1410
  %1429 = vrot.lane.b32.xlu0 %v1423, 96
  %v1430 = vpop.permute.xlu0 %1429
  %1431 = vrot.lane.b32.xlu0 %v1424, 96
  %v1432 = vpop.permute.xlu0 %1431
  %v1435 = vmul.f32 %v1425, %v1430
  %v1436 = vmul.f32 %v1426, %v1432
  %v1437 = vmul.f32 %v1395, %v1242
  %v1438 = vmul.f32 %v1410, %v1243
  %v1439 = vadd.f32 %v1435, %v1437
  %v1440 = vadd.f32 %v1436, %v1438
  %1443 = vrot.lane.b32.xlu0 %v1439, 96
  %v1444 = vpop.permute.xlu0 %1443
  %1445 = vrot.lane.b32.xlu0 %v1440, 96
  %v1446 = vpop.permute.xlu0 %1445
  %v1447 = vsel %vm173, %v1444, 0
  %v1449 = vsel %vm173, %v1446, 0
  %1451 = vmatpush.msra.mxu0 0.0
  %1452 = vmatpush.msra.mxu0 0.0
  %1453 = vmatpush.msra.mxu0 0.0
  %1454 = vmatpush.msra.mxu0 0.0
  %1455 = vmatpush.msra.mxu0 0.0
  %1456 = vmatpush.msra.mxu0 0.0
  %1457 = vmatpush.msra.mxu0 0.0
  %1458 = vmatpush.msra.mxu0 0.0
  %1459 = vmatpush.msra.mxu0 0.0
  %1460 = vmatpush.msra.mxu0 0.0
  %1461 = vmatpush.msra.mxu0 0.0
  %1462 = vmatpush.msra.mxu0 0.0
  %1463 = vmatpush.msra.mxu0 %v375
  %1464 = vmatpush.msra.mxu0 %v374
  %1465 = vmatpush.msra.mxu0 %v373
  %1466 = vmatpush.msra.mxu0 %v372
  %1467 = vmatmul.f32.gmra.mxu0 %v1447
  %v1468 = vpop.f32.mrf.mxu0
  %v1469 = vadd.f32 0.0, %v1468
  %1470 = vmatmul.f32.gmra.mxu0 %v1449
  %v1471 = vpop.f32.mrf.mxu0
  %v1472 = vadd.f32 0.0, %v1471
  %1473 = vdwg.mxu0
  %1474 = vmatpush.msra.mxu0 0.0
  %1475 = vmatpush.msra.mxu0 0.0
  %1476 = vmatpush.msra.mxu0 0.0
  %1477 = vmatpush.msra.mxu0 0.0
  %1478 = vmatpush.msra.mxu0 0.0
  %1479 = vmatpush.msra.mxu0 0.0
  %1480 = vmatpush.msra.mxu0 0.0
  %1481 = vmatpush.msra.mxu0 0.0
  %1482 = vmatpush.msra.mxu0 0.0
  %1483 = vmatpush.msra.mxu0 0.0
  %1484 = vmatpush.msra.mxu0 0.0
  %1485 = vmatpush.msra.mxu0 0.0
  %1486 = vmatpush.msra.mxu0 %v463
  %1487 = vmatpush.msra.mxu0 %v461
  %1488 = vmatpush.msra.mxu0 %v459
  %1489 = vmatpush.msra.mxu0 %v457
  %1490 = vmatmul.f32.gmra.mxu0 %v1447
  %v1491 = vpop.f32.mrf.mxu0
  %v1492 = vadd.f32 0.0, %v1491
  %1493 = vmatmul.f32.gmra.mxu0 %v1449
  %v1494 = vpop.f32.mrf.mxu0
  %v1495 = vadd.f32 0.0, %v1494
  %1496 = vdwg.mxu0
  %1497 = vmatpush.msra.mxu0 0.0
  %1498 = vmatpush.msra.mxu0 0.0
  %1499 = vmatpush.msra.mxu0 0.0
  %1500 = vmatpush.msra.mxu0 0.0
  %1501 = vmatpush.msra.mxu0 0.0
  %1502 = vmatpush.msra.mxu0 0.0
  %1503 = vmatpush.msra.mxu0 0.0
  %1504 = vmatpush.msra.mxu0 0.0
  %1505 = vmatpush.msra.mxu0 0.0
  %1506 = vmatpush.msra.mxu0 0.0
  %1507 = vmatpush.msra.mxu0 0.0
  %1508 = vmatpush.msra.mxu0 0.0
  %1509 = vmatpush.msra.mxu0 %v498
  %1510 = vmatpush.msra.mxu0 %v496
  %1511 = vmatpush.msra.mxu0 %v494
  %1512 = vmatpush.msra.mxu0 %v492
  %1513 = vmatmul.f32.gmra.mxu0 %v1447
  %v1514 = vpop.f32.mrf.mxu0
  %v1515 = vadd.f32 %v504, %v1514
  %1516 = vmatmul.f32.gmra.mxu0 %v1449
  %v1517 = vpop.f32.mrf.mxu0
  %v1518 = vadd.f32 %v504, %v1517
  %1519 = vdwg.mxu0
  %v1520 = vadd.f32 %v419, %v1469
  %v1521 = vadd.f32 %v420, %v1472
  %v1522 = vxor.u32 %v1520, 2147483648
  %v1523 = vxor.u32 %v1521, 2147483648
  %v1524 = vmul.f32 %v1522, 1.442695
  %v1525 = vpow.pop %v1524
  %v1526 = vmul.f32 %v1523, 1.442695
  %v1527 = vpow.pop %v1526
  %v1528 = vadd.f32 %v1525, 1.0
  %v1529 = vadd.f32 %v1527, 1.0
  %v1530 = vrcp.pop %v1528
  %v1531 = vmul.f32 %v1528, %v1530
  %v1532 = vsub.f32 1.0, %v1531
  %v1533 = vmul.f32 %v1530, %v1532
  %v1534 = vadd.f32 %v1530, %v1533
  %vm1535 = vweird.f32 %v1528
  %vm1536 = vweird.f32 %v1530
  %vm1537 = vmor %vm1535, %vm1536
  %v1538 = vsel %vm1537, %v1530, %v1534
  %v1539 = vand.u32 2147483647, %v1528
  %vm1540 = vcmp.eq.f32.partialorder %v1539, 8.507059e+37
  %v1541 = vand.u32 %v1528, 2147483648
  %v1542 = vor.u32 1.1754944e-38, %v1541
  %v1543 = vsel %vm1540, %v1542, %v1538
  %v1544 = vmul.f32 1.0, %v1543
  %v1545 = vrcp.pop %v1529
  %v1546 = vmul.f32 %v1529, %v1545
  %v1547 = vsub.f32 1.0, %v1546
  %v1548 = vmul.f32 %v1545, %v1547
  %v1549 = vadd.f32 %v1545, %v1548
  %vm1550 = vweird.f32 %v1529
  %vm1551 = vweird.f32 %v1545
  %vm1552 = vmor %vm1550, %vm1551
  %v1553 = vsel %vm1552, %v1545, %v1549
  %v1554 = vand.u32 2147483647, %v1529
  %vm1555 = vcmp.eq.f32.partialorder %v1554, 8.507059e+37
  %v1556 = vand.u32 %v1529, 2147483648
  %v1557 = vor.u32 1.1754944e-38, %v1556
  %v1558 = vsel %vm1555, %v1557, %v1553
  %v1559 = vmul.f32 1.0, %v1558
  %1562 = vrot.lane.b32.xlu0 %v1492, 32
  %v1563 = vpop.permute.xlu0 %1562
  %1564 = vrot.lane.b32.xlu0 %v1495, 32
  %v1565 = vpop.permute.xlu0 %1564
  %v1568 = vadd.f32 %v419, %v1563
  %v1569 = vadd.f32 %v420, %v1565
  %v1570 = vxor.u32 %v1568, 2147483648
  %v1571 = vxor.u32 %v1569, 2147483648
  %v1572 = vmul.f32 %v1570, 1.442695
  %v1573 = vpow.pop %v1572
  %v1574 = vmul.f32 %v1571, 1.442695
  %v1575 = vpow.pop %v1574
  %v1576 = vadd.f32 %v1573, 1.0
  %v1577 = vadd.f32 %v1575, 1.0
  %v1578 = vrcp.pop %v1576
  %v1579 = vmul.f32 %v1576, %v1578
  %v1580 = vsub.f32 1.0, %v1579
  %v1581 = vmul.f32 %v1578, %v1580
  %v1582 = vadd.f32 %v1578, %v1581
  %vm1583 = vweird.f32 %v1576
  %vm1584 = vweird.f32 %v1578
  %vm1585 = vmor %vm1583, %vm1584
  %v1586 = vsel %vm1585, %v1578, %v1582
  %v1587 = vand.u32 2147483647, %v1576
  %vm1588 = vcmp.eq.f32.partialorder %v1587, 8.507059e+37
  %v1589 = vand.u32 %v1576, 2147483648
  %v1590 = vor.u32 1.1754944e-38, %v1589
  %v1591 = vsel %vm1588, %v1590, %v1586
  %v1592 = vmul.f32 1.0, %v1591
  %v1593 = vrcp.pop %v1577
  %v1594 = vmul.f32 %v1577, %v1593
  %v1595 = vsub.f32 1.0, %v1594
  %v1596 = vmul.f32 %v1593, %v1595
  %v1597 = vadd.f32 %v1593, %v1596
  %vm1598 = vweird.f32 %v1577
  %vm1599 = vweird.f32 %v1593
  %vm1600 = vmor %vm1598, %vm1599
  %v1601 = vsel %vm1600, %v1593, %v1597
  %v1602 = vand.u32 2147483647, %v1577
  %vm1603 = vcmp.eq.f32.partialorder %v1602, 8.507059e+37
  %v1604 = vand.u32 %v1577, 2147483648
  %v1605 = vor.u32 1.1754944e-38, %v1604
  %v1606 = vsel %vm1603, %v1605, %v1601
  %v1607 = vmul.f32 1.0, %v1606
  %v1608 = vmul.f32 %v1544, %v1515
  %v1609 = vmul.f32 %v1559, %v1518
  %1612 = vrot.lane.b32.xlu0 %v1608, 64
  %v1613 = vpop.permute.xlu0 %1612
  %1614 = vrot.lane.b32.xlu0 %v1609, 64
  %v1615 = vpop.permute.xlu0 %1614
  %v1618 = vadd.f32 %v411, %v1613
  %v1619 = vadd.f32 %v414, %v1615
  %v1620 = vtanh.pop %v1618
  %v1621 = vtanh.pop %v1619
  %v1622 = vsub.f32 1.0, %v1592
  %v1623 = vsub.f32 1.0, %v1607
  %1626 = vrot.lane.b32.xlu0 %v1620, 96
  %v1627 = vpop.permute.xlu0 %1626
  %1628 = vrot.lane.b32.xlu0 %v1621, 96
  %v1629 = vpop.permute.xlu0 %1628
  %v1632 = vmul.f32 %v1622, %v1627
  %v1633 = vmul.f32 %v1623, %v1629
  %v1634 = vmul.f32 %v1592, %v1439
  %v1635 = vmul.f32 %v1607, %v1440
  %v1636 = vadd.f32 %v1632, %v1634
  %v1637 = vadd.f32 %v1633, %v1635
  %1640 = vrot.lane.b32.xlu0 %v1636, 96
  %v1641 = vpop.permute.xlu0 %1640
  %1642 = vrot.lane.b32.xlu0 %v1637, 96
  %v1643 = vpop.permute.xlu0 %1642
  %v1644 = vsel %vm173, %v1641, 0
  %v1646 = vsel %vm173, %v1643, 0
  %1648 = vmatpush.msra.mxu0 0.0
  %1649 = vmatpush.msra.mxu0 0.0
  %1650 = vmatpush.msra.mxu0 0.0
  %1651 = vmatpush.msra.mxu0 0.0
  %1652 = vmatpush.msra.mxu0 0.0
  %1653 = vmatpush.msra.mxu0 0.0
  %1654 = vmatpush.msra.mxu0 0.0
  %1655 = vmatpush.msra.mxu0 0.0
  %1656 = vmatpush.msra.mxu0 0.0
  %1657 = vmatpush.msra.mxu0 0.0
  %1658 = vmatpush.msra.mxu0 0.0
  %1659 = vmatpush.msra.mxu0 0.0
  %1660 = vmatpush.msra.mxu0 %v375
  %1661 = vmatpush.msra.mxu0 %v374
  %1662 = vmatpush.msra.mxu0 %v373
  %1663 = vmatpush.msra.mxu0 %v372
  %1664 = vmatmul.f32.gmra.mxu0 %v1644
  %v1665 = vpop.f32.mrf.mxu0
  %v1666 = vadd.f32 0.0, %v1665
  %1667 = vmatmul.f32.gmra.mxu0 %v1646
  %v1668 = vpop.f32.mrf.mxu0
  %v1669 = vadd.f32 0.0, %v1668
  %1670 = vdwg.mxu0
  %1671 = vmatpush.msra.mxu0 0.0
  %1672 = vmatpush.msra.mxu0 0.0
  %1673 = vmatpush.msra.mxu0 0.0
  %1674 = vmatpush.msra.mxu0 0.0
  %1675 = vmatpush.msra.mxu0 0.0
  %1676 = vmatpush.msra.mxu0 0.0
  %1677 = vmatpush.msra.mxu0 0.0
  %1678 = vmatpush.msra.mxu0 0.0
  %1679 = vmatpush.msra.mxu0 0.0
  %1680 = vmatpush.msra.mxu0 0.0
  %1681 = vmatpush.msra.mxu0 0.0
  %1682 = vmatpush.msra.mxu0 0.0
  %1683 = vmatpush.msra.mxu0 %v463
  %1684 = vmatpush.msra.mxu0 %v461
  %1685 = vmatpush.msra.mxu0 %v459
  %1686 = vmatpush.msra.mxu0 %v457
  %1687 = vmatmul.f32.gmra.mxu0 %v1644
  %v1688 = vpop.f32.mrf.mxu0
  %v1689 = vadd.f32 0.0, %v1688
  %1690 = vmatmul.f32.gmra.mxu0 %v1646
  %v1691 = vpop.f32.mrf.mxu0
  %v1692 = vadd.f32 0.0, %v1691
  %1693 = vdwg.mxu0
  %1694 = vmatpush.msra.mxu0 0.0
  %1695 = vmatpush.msra.mxu0 0.0
  %1696 = vmatpush.msra.mxu0 0.0
  %1697 = vmatpush.msra.mxu0 0.0
  %1698 = vmatpush.msra.mxu0 0.0
  %1699 = vmatpush.msra.mxu0 0.0
  %1700 = vmatpush.msra.mxu0 0.0
  %1701 = vmatpush.msra.mxu0 0.0
  %1702 = vmatpush.msra.mxu0 0.0
  %1703 = vmatpush.msra.mxu0 0.0
  %1704 = vmatpush.msra.mxu0 0.0
  %1705 = vmatpush.msra.mxu0 0.0
  %1706 = vmatpush.msra.mxu0 %v498
  %1707 = vmatpush.msra.mxu0 %v496
  %1708 = vmatpush.msra.mxu0 %v494
  %1709 = vmatpush.msra.mxu0 %v492
  %1710 = vmatmul.f32.gmra.mxu0 %v1644
  %v1711 = vpop.f32.mrf.mxu0
  %v1712 = vadd.f32 %v504, %v1711
  %1713 = vmatmul.f32.gmra.mxu0 %v1646
  %v1714 = vpop.f32.mrf.mxu0
  %v1715 = vadd.f32 %v504, %v1714
  %1716 = vdwg.mxu0
  %v1717 = vadd.f32 %v419, %v1666
  %v1718 = vadd.f32 %v420, %v1669
  %v1719 = vxor.u32 %v1717, 2147483648
  %v1720 = vxor.u32 %v1718, 2147483648
  %v1721 = vmul.f32 %v1719, 1.442695
  %v1722 = vpow.pop %v1721
  %v1723 = vmul.f32 %v1720, 1.442695
  %v1724 = vpow.pop %v1723
  %v1725 = vadd.f32 %v1722, 1.0
  %v1726 = vadd.f32 %v1724, 1.0
  %v1727 = vrcp.pop %v1725
  %v1728 = vmul.f32 %v1725, %v1727
  %v1729 = vsub.f32 1.0, %v1728
  %v1730 = vmul.f32 %v1727, %v1729
  %v1731 = vadd.f32 %v1727, %v1730
  %vm1732 = vweird.f32 %v1725
  %vm1733 = vweird.f32 %v1727
  %vm1734 = vmor %vm1732, %vm1733
  %v1735 = vsel %vm1734, %v1727, %v1731
  %v1736 = vand.u32 2147483647, %v1725
  %vm1737 = vcmp.eq.f32.partialorder %v1736, 8.507059e+37
  %v1738 = vand.u32 %v1725, 2147483648
  %v1739 = vor.u32 1.1754944e-38, %v1738
  %v1740 = vsel %vm1737, %v1739, %v1735
  %v1741 = vmul.f32 1.0, %v1740
  %v1742 = vrcp.pop %v1726
  %v1743 = vmul.f32 %v1726, %v1742
  %v1744 = vsub.f32 1.0, %v1743
  %v1745 = vmul.f32 %v1742, %v1744
  %v1746 = vadd.f32 %v1742, %v1745
  %vm1747 = vweird.f32 %v1726
  %vm1748 = vweird.f32 %v1742
  %vm1749 = vmor %vm1747, %vm1748
  %v1750 = vsel %vm1749, %v1742, %v1746
  %v1751 = vand.u32 2147483647, %v1726
  %vm1752 = vcmp.eq.f32.partialorder %v1751, 8.507059e+37
  %v1753 = vand.u32 %v1726, 2147483648
  %v1754 = vor.u32 1.1754944e-38, %v1753
  %v1755 = vsel %vm1752, %v1754, %v1750
  %v1756 = vmul.f32 1.0, %v1755
  %1759 = vrot.lane.b32.xlu0 %v1689, 32
  %v1760 = vpop.permute.xlu0 %1759
  %1761 = vrot.lane.b32.xlu0 %v1692, 32
  %v1762 = vpop.permute.xlu0 %1761
  %v1765 = vadd.f32 %v419, %v1760
  %v1766 = vadd.f32 %v420, %v1762
  %v1767 = vxor.u32 %v1765, 2147483648
  %v1768 = vxor.u32 %v1766, 2147483648
  %v1769 = vmul.f32 %v1767, 1.442695
  %v1770 = vpow.pop %v1769
  %v1771 = vmul.f32 %v1768, 1.442695
  %v1772 = vpow.pop %v1771
  %v1773 = vadd.f32 %v1770, 1.0
  %v1774 = vadd.f32 %v1772, 1.0
  %v1775 = vrcp.pop %v1773
  %v1776 = vmul.f32 %v1773, %v1775
  %v1777 = vsub.f32 1.0, %v1776
  %v1778 = vmul.f32 %v1775, %v1777
  %v1779 = vadd.f32 %v1775, %v1778
  %vm1780 = vweird.f32 %v1773
  %vm1781 = vweird.f32 %v1775
  %vm1782 = vmor %vm1780, %vm1781
  %v1783 = vsel %vm1782, %v1775, %v1779
  %v1784 = vand.u32 2147483647, %v1773
  %vm1785 = vcmp.eq.f32.partialorder %v1784, 8.507059e+37
  %v1786 = vand.u32 %v1773, 2147483648
  %v1787 = vor.u32 1.1754944e-38, %v1786
  %v1788 = vsel %vm1785, %v1787, %v1783
  %v1789 = vmul.f32 1.0, %v1788
  %v1790 = vrcp.pop %v1774
  %v1791 = vmul.f32 %v1774, %v1790
  %v1792 = vsub.f32 1.0, %v1791
  %v1793 = vmul.f32 %v1790, %v1792
  %v1794 = vadd.f32 %v1790, %v1793
  %vm1795 = vweird.f32 %v1774
  %vm1796 = vweird.f32 %v1790
  %vm1797 = vmor %vm1795, %vm1796
  %v1798 = vsel %vm1797, %v1790, %v1794
  %v1799 = vand.u32 2147483647, %v1774
  %vm1800 = vcmp.eq.f32.partialorder %v1799, 8.507059e+37
  %v1801 = vand.u32 %v1774, 2147483648
  %v1802 = vor.u32 1.1754944e-38, %v1801
  %v1803 = vsel %vm1800, %v1802, %v1798
  %v1804 = vmul.f32 1.0, %v1803
  %v1805 = vmul.f32 %v1741, %v1712
  %v1806 = vmul.f32 %v1756, %v1715
  %1809 = vrot.lane.b32.xlu0 %v1805, 64
  %v1810 = vpop.permute.xlu0 %1809
  %1811 = vrot.lane.b32.xlu0 %v1806, 64
  %v1812 = vpop.permute.xlu0 %1811
  %v1815 = vadd.f32 %v411, %v1810
  %v1816 = vadd.f32 %v414, %v1812
  %v1817 = vtanh.pop %v1815
  %v1818 = vtanh.pop %v1816
  %v1819 = vsub.f32 1.0, %v1789
  %v1820 = vsub.f32 1.0, %v1804
  %1823 = vrot.lane.b32.xlu0 %v1817, 96
  %v1824 = vpop.permute.xlu0 %1823
  %1825 = vrot.lane.b32.xlu0 %v1818, 96
  %v1826 = vpop.permute.xlu0 %1825
  %v1829 = vmul.f32 %v1819, %v1824
  %v1830 = vmul.f32 %v1820, %v1826
  %v1831 = vmul.f32 %v1789, %v1636
  %v1832 = vmul.f32 %v1804, %v1637
  %v1833 = vadd.f32 %v1829, %v1831
  %v1834 = vadd.f32 %v1830, %v1832
  %1837 = vrot.lane.b32.xlu0 %v1833, 96
  %v1838 = vpop.permute.xlu0 %1837
  %1839 = vrot.lane.b32.xlu0 %v1834, 96
  %v1840 = vpop.permute.xlu0 %1839
  %v1841 = vsel %vm173, %v1838, 0
  %v1843 = vsel %vm173, %v1840, 0
  %1845 = vmatpush.msra.mxu0 0.0
  %1846 = vmatpush.msra.mxu0 0.0
  %1847 = vmatpush.msra.mxu0 0.0
  %1848 = vmatpush.msra.mxu0 0.0
  %1849 = vmatpush.msra.mxu0 0.0
  %1850 = vmatpush.msra.mxu0 0.0
  %1851 = vmatpush.msra.mxu0 0.0
  %1852 = vmatpush.msra.mxu0 0.0
  %1853 = vmatpush.msra.mxu0 0.0
  %1854 = vmatpush.msra.mxu0 0.0
  %1855 = vmatpush.msra.mxu0 0.0
  %1856 = vmatpush.msra.mxu0 0.0
  %1857 = vmatpush.msra.mxu0 %v375
  %1858 = vmatpush.msra.mxu0 %v374
  %1859 = vmatpush.msra.mxu0 %v373
  %1860 = vmatpush.msra.mxu0 %v372
  %1861 = vmatmul.f32.gmra.mxu0 %v1841
  %v1862 = vpop.f32.mrf.mxu0
  %v1863 = vadd.f32 0.0, %v1862
  %1864 = vmatmul.f32.gmra.mxu0 %v1843
  %v1865 = vpop.f32.mrf.mxu0
  %v1866 = vadd.f32 0.0, %v1865
  %1867 = vdwg.mxu0
  %1868 = vmatpush.msra.mxu0 0.0
  %1869 = vmatpush.msra.mxu0 0.0
  %1870 = vmatpush.msra.mxu0 0.0
  %1871 = vmatpush.msra.mxu0 0.0
  %1872 = vmatpush.msra.mxu0 0.0
  %1873 = vmatpush.msra.mxu0 0.0
  %1874 = vmatpush.msra.mxu0 0.0
  %1875 = vmatpush.msra.mxu0 0.0
  %1876 = vmatpush.msra.mxu0 0.0
  %1877 = vmatpush.msra.mxu0 0.0
  %1878 = vmatpush.msra.mxu0 0.0
  %1879 = vmatpush.msra.mxu0 0.0
  %1880 = vmatpush.msra.mxu0 %v463
  %1881 = vmatpush.msra.mxu0 %v461
  %1882 = vmatpush.msra.mxu0 %v459
  %1883 = vmatpush.msra.mxu0 %v457
  %1884 = vmatmul.f32.gmra.mxu0 %v1841
  %v1885 = vpop.f32.mrf.mxu0
  %v1886 = vadd.f32 0.0, %v1885
  %1887 = vmatmul.f32.gmra.mxu0 %v1843
  %v1888 = vpop.f32.mrf.mxu0
  %v1889 = vadd.f32 0.0, %v1888
  %1890 = vdwg.mxu0
  %1891 = vmatpush.msra.mxu0 0.0
  %1892 = vmatpush.msra.mxu0 0.0
  %1893 = vmatpush.msra.mxu0 0.0
  %1894 = vmatpush.msra.mxu0 0.0
  %1895 = vmatpush.msra.mxu0 0.0
  %1896 = vmatpush.msra.mxu0 0.0
  %1897 = vmatpush.msra.mxu0 0.0
  %1898 = vmatpush.msra.mxu0 0.0
  %1899 = vmatpush.msra.mxu0 0.0
  %1900 = vmatpush.msra.mxu0 0.0
  %1901 = vmatpush.msra.mxu0 0.0
  %1902 = vmatpush.msra.mxu0 0.0
  %1903 = vmatpush.msra.mxu0 %v498
  %1904 = vmatpush.msra.mxu0 %v496
  %1905 = vmatpush.msra.mxu0 %v494
  %1906 = vmatpush.msra.mxu0 %v492
  %1907 = vmatmul.f32.gmra.mxu0 %v1841
  %v1908 = vpop.f32.mrf.mxu0
  %v1909 = vadd.f32 %v504, %v1908
  %1910 = vmatmul.f32.gmra.mxu0 %v1843
  %v1911 = vpop.f32.mrf.mxu0
  %v1912 = vadd.f32 %v504, %v1911
  %1913 = vdwg.mxu0
  %v1914 = vadd.f32 %v419, %v1863
  %v1915 = vadd.f32 %v420, %v1866
  %v1916 = vxor.u32 %v1914, 2147483648
  %v1917 = vxor.u32 %v1915, 2147483648
  %v1918 = vmul.f32 %v1916, 1.442695
  %v1919 = vpow.pop %v1918
  %v1920 = vmul.f32 %v1917, 1.442695
  %v1921 = vpow.pop %v1920
  %v1922 = vadd.f32 %v1919, 1.0
  %v1923 = vadd.f32 %v1921, 1.0
  %v1924 = vrcp.pop %v1922
  %v1925 = vmul.f32 %v1922, %v1924
  %v1926 = vsub.f32 1.0, %v1925
  %v1927 = vmul.f32 %v1924, %v1926
  %v1928 = vadd.f32 %v1924, %v1927
  %vm1929 = vweird.f32 %v1922
  %vm1930 = vweird.f32 %v1924
  %vm1931 = vmor %vm1929, %vm1930
  %v1932 = vsel %vm1931, %v1924, %v1928
  %v1933 = vand.u32 2147483647, %v1922
  %vm1934 = vcmp.eq.f32.partialorder %v1933, 8.507059e+37
  %v1935 = vand.u32 %v1922, 2147483648
  %v1936 = vor.u32 1.1754944e-38, %v1935
  %v1937 = vsel %vm1934, %v1936, %v1932
  %v1938 = vmul.f32 1.0, %v1937
  %v1939 = vrcp.pop %v1923
  %v1940 = vmul.f32 %v1923, %v1939
  %v1941 = vsub.f32 1.0, %v1940
  %v1942 = vmul.f32 %v1939, %v1941
  %v1943 = vadd.f32 %v1939, %v1942
  %vm1944 = vweird.f32 %v1923
  %vm1945 = vweird.f32 %v1939
  %vm1946 = vmor %vm1944, %vm1945
  %v1947 = vsel %vm1946, %v1939, %v1943
  %v1948 = vand.u32 2147483647, %v1923
  %vm1949 = vcmp.eq.f32.partialorder %v1948, 8.507059e+37
  %v1950 = vand.u32 %v1923, 2147483648
  %v1951 = vor.u32 1.1754944e-38, %v1950
  %v1952 = vsel %vm1949, %v1951, %v1947
  %v1953 = vmul.f32 1.0, %v1952
  %1956 = vrot.lane.b32.xlu0 %v1886, 32
  %v1957 = vpop.permute.xlu0 %1956
  %1958 = vrot.lane.b32.xlu0 %v1889, 32
  %v1959 = vpop.permute.xlu0 %1958
  %v1962 = vadd.f32 %v419, %v1957
  %v1963 = vadd.f32 %v420, %v1959
  %v1964 = vxor.u32 %v1962, 2147483648
  %v1965 = vxor.u32 %v1963, 2147483648
  %v1966 = vmul.f32 %v1964, 1.442695
  %v1967 = vpow.pop %v1966
  %v1968 = vmul.f32 %v1965, 1.442695
  %v1969 = vpow.pop %v1968
  %v1970 = vadd.f32 %v1967, 1.0
  %v1971 = vadd.f32 %v1969, 1.0
  %v1972 = vrcp.pop %v1970
  %v1973 = vmul.f32 %v1970, %v1972
  %v1974 = vsub.f32 1.0, %v1973
  %v1975 = vmul.f32 %v1972, %v1974
  %v1976 = vadd.f32 %v1972, %v1975
  %vm1977 = vweird.f32 %v1970
  %vm1978 = vweird.f32 %v1972
  %vm1979 = vmor %vm1977, %vm1978
  %v1980 = vsel %vm1979, %v1972, %v1976
  %v1981 = vand.u32 2147483647, %v1970
  %vm1982 = vcmp.eq.f32.partialorder %v1981, 8.507059e+37
  %v1983 = vand.u32 %v1970, 2147483648
  %v1984 = vor.u32 1.1754944e-38, %v1983
  %v1985 = vsel %vm1982, %v1984, %v1980
  %v1986 = vmul.f32 1.0, %v1985
  %v1987 = vrcp.pop %v1971
  %v1988 = vmul.f32 %v1971, %v1987
  %v1989 = vsub.f32 1.0, %v1988
  %v1990 = vmul.f32 %v1987, %v1989
  %v1991 = vadd.f32 %v1987, %v1990
  %vm1992 = vweird.f32 %v1971
  %vm1993 = vweird.f32 %v1987
  %vm1994 = vmor %vm1992, %vm1993
  %v1995 = vsel %vm1994, %v1987, %v1991
  %v1996 = vand.u32 2147483647, %v1971
  %vm1997 = vcmp.eq.f32.partialorder %v1996, 8.507059e+37
  %v1998 = vand.u32 %v1971, 2147483648
  %v1999 = vor.u32 1.1754944e-38, %v1998
  %v2000 = vsel %vm1997, %v1999, %v1995
  %v2001 = vmul.f32 1.0, %v2000
  %v2002 = vmul.f32 %v1938, %v1909
  %v2003 = vmul.f32 %v1953, %v1912
  %2006 = vrot.lane.b32.xlu0 %v2002, 64
  %v2007 = vpop.permute.xlu0 %2006
  %2008 = vrot.lane.b32.xlu0 %v2003, 64
  %v2009 = vpop.permute.xlu0 %2008
  %v2012 = vadd.f32 %v411, %v2007
  %v2013 = vadd.f32 %v414, %v2009
  %v2014 = vtanh.pop %v2012
  %v2015 = vtanh.pop %v2013
  %v2016 = vsub.f32 1.0, %v1986
  %v2017 = vsub.f32 1.0, %v2001
  %2020 = vrot.lane.b32.xlu0 %v2014, 96
  %v2021 = vpop.permute.xlu0 %2020
  %2022 = vrot.lane.b32.xlu0 %v2015, 96
  %v2023 = vpop.permute.xlu0 %2022
  %v2026 = vmul.f32 %v2016, %v2021
  %v2027 = vmul.f32 %v2017, %v2023
  %v2028 = vmul.f32 %v1986, %v1833
  %v2029 = vmul.f32 %v2001, %v1834
  %v2030 = vadd.f32 %v2026, %v2028
  %v2031 = vadd.f32 %v2027, %v2029
  %v2032 = vld [vmem:[%s15] sm:$0xff]
  %v2033 = vld [vmem:[%s15 + $0x8] sm:$0xff]
  %v2034 = vld [vmem:[%s15 + $0x10] sm:$0xff]
  %v2035 = vld [vmem:[%s15 + $0x18] sm:$0xff]
  %v2036 = vld [vmem:[%s27] sm:$0xff]
  %v2037 = vld [vmem:[%s27 + $0x8] sm:$0xff]
  %v2038 = vld [vmem:[%s27 + $0x10] sm:$0xff]
  %v2039 = vld [vmem:[%s27 + $0x18] sm:$0xff]
  %2044 = vrot.lane.b32.xlu0 %v2036, 32
  %v2045 = vpop.permute.xlu0 %2044
  %2046 = vrot.lane.b32.xlu0 %v2037, 32
  %v2047 = vpop.permute.xlu0 %2046
  %2048 = vrot.lane.b32.xlu0 %v2038, 32
  %v2049 = vpop.permute.xlu0 %2048
  %2050 = vrot.lane.b32.xlu0 %v2039, 32
  %v2051 = vpop.permute.xlu0 %2050
  %v2056 = vsel %vm173, %v2032, %v2045
  %v2057 = vsel %vm173, %v2033, %v2047
  %v2058 = vsel %vm173, %v2034, %v2049
  %v2059 = vsel %vm173, %v2035, %v2051
  %v2060 = vld [vmem:[%s17] sm:$0x1]
  %v2061 = vld [vmem:[%s29] sm:$0x1]
  %v2063 = vperm.slane %v2061, 0
  %2064 = vrot.lane.b32.xlu0 %v2063, 32
  %v2065 = vpop.permute.xlu0 %2064
  %v2067 = vsel %vm173, %v2060, %v2065
  %v2068 = vperm.slane %v2067, 0
  %2071 = vrot.lane.b32.xlu0 %v2030, 96
  %v2072 = vpop.permute.xlu0 %2071
  %2073 = vrot.lane.b32.xlu0 %v2031, 96
  %v2074 = vpop.permute.xlu0 %2073
  %v2075 = vsel %vm173, %v2072, 0
  %v2077 = vsel %vm173, %v2074, 0
  %2079 = vmatpush.msra.mxu0 0.0
  %2080 = vmatpush.msra.mxu0 0.0
  %2081 = vmatpush.msra.mxu0 0.0
  %2082 = vmatpush.msra.mxu0 0.0
  %2083 = vmatpush.msra.mxu0 0.0
  %2084 = vmatpush.msra.mxu0 0.0
  %2085 = vmatpush.msra.mxu0 0.0
  %2086 = vmatpush.msra.mxu0 0.0
  %2087 = vmatpush.msra.mxu0 0.0
  %2088 = vmatpush.msra.mxu0 0.0
  %2089 = vmatpush.msra.mxu0 0.0
  %2090 = vmatpush.msra.mxu0 0.0
  %2091 = vmatpush.msra.mxu0 %v2059
  %2092 = vmatpush.msra.mxu0 %v2058
  %2093 = vmatpush.msra.mxu0 %v2057
  %2094 = vmatpush.msra.mxu0 %v2056
  %2095 = vmatmul.f32.gmra.mxu0 %v659
  %v2096 = vpop.f32.mrf.mxu0
  %v2097 = vadd.f32 %v2068, %v2096
  %2098 = vmatmul.f32.gmra.mxu0 %v661
  %v2099 = vpop.f32.mrf.mxu0
  %v2100 = vadd.f32 %v2068, %v2099
  %2101 = vmatmul.f32.gmra.mxu0 %v856
  %v2102 = vpop.f32.mrf.mxu0
  %v2103 = vadd.f32 %v2068, %v2102
  %2104 = vmatmul.f32.gmra.mxu0 %v858
  %v2105 = vpop.f32.mrf.mxu0
  %v2106 = vadd.f32 %v2068, %v2105
  %2107 = vmatmul.f32.gmra.mxu0 %v1053
  %v2108 = vpop.f32.mrf.mxu0
  %v2109 = vadd.f32 %v2068, %v2108
  %2110 = vmatmul.f32.gmra.mxu0 %v1055
  %v2111 = vpop.f32.mrf.mxu0
  %v2112 = vadd.f32 %v2068, %v2111
  %2113 = vmatmul.f32.gmra.mxu0 %v1250
  %v2114 = vpop.f32.mrf.mxu0
  %v2115 = vadd.f32 %v2068, %v2114
  %2116 = vmatmul.f32.gmra.mxu0 %v1252
  %v2117 = vpop.f32.mrf.mxu0
  %v2118 = vadd.f32 %v2068, %v2117
  %2119 = vmatmul.f32.gmra.mxu0 %v1447
  %v2120 = vpop.f32.mrf.mxu0
  %v2121 = vadd.f32 %v2068, %v2120
  %2122 = vmatmul.f32.gmra.mxu0 %v1449
  %v2123 = vpop.f32.mrf.mxu0
  %v2124 = vadd.f32 %v2068, %v2123
  %2125 = vmatmul.f32.gmra.mxu0 %v1644
  %v2126 = vpop.f32.mrf.mxu0
  %v2127 = vadd.f32 %v2068, %v2126
  %2128 = vmatmul.f32.gmra.mxu0 %v1646
  %v2129 = vpop.f32.mrf.mxu0
  %v2130 = vadd.f32 %v2068, %v2129
  %2131 = vmatmul.f32.gmra.mxu0 %v1841
  %v2132 = vpop.f32.mrf.mxu0
  %v2133 = vadd.f32 %v2068, %v2132
  %2134 = vmatmul.f32.gmra.mxu0 %v1843
  %v2135 = vpop.f32.mrf.mxu0
  %v2136 = vadd.f32 %v2068, %v2135
  %2137 = vmatmul.f32.gmra.mxu0 %v2075
  %v2138 = vpop.f32.mrf.mxu0
  %v2139 = vadd.f32 %v2068, %v2138
  %2140 = vmatmul.f32.gmra.mxu0 %v2077
  %v2141 = vpop.f32.mrf.mxu0
  %v2142 = vadd.f32 %v2068, %v2141
  %2143 = vdwg.mxu0
  %v2144 = vld [vmem:[%s19] sm:$0x1]
  %v2145 = vld [vmem:[%s21] sm:$0x1]
  %v2146 = vsel %vm173, %v2097, 0.0
  %2147 = vadd.xlane.f32.xlu0 %v2146
  %v2148 = vpop.xlane.xlu0 %2147
  %v2149 = vsel %vm173, %v2100, 0.0
  %2150 = vadd.xlane.f32.xlu0 %v2149
  %v2151 = vpop.xlane.xlu0 %2150
  %v2152 = vsel %vm173, %v2103, 0.0
  %2153 = vadd.xlane.f32.xlu0 %v2152
  %v2154 = vpop.xlane.xlu0 %2153
  %v2155 = vsel %vm173, %v2106, 0.0
  %2156 = vadd.xlane.f32.xlu0 %v2155
  %v2157 = vpop.xlane.xlu0 %2156
  %v2158 = vsel %vm173, %v2109, 0.0
  %2159 = vadd.xlane.f32.xlu0 %v2158
  %v2160 = vpop.xlane.xlu0 %2159
  %v2161 = vsel %vm173, %v2112, 0.0
  %2162 = vadd.xlane.f32.xlu0 %v2161
  %v2163 = vpop.xlane.xlu0 %2162
  %v2164 = vsel %vm173, %v2115, 0.0
  %2165 = vadd.xlane.f32.xlu0 %v2164
  %v2166 = vpop.xlane.xlu0 %2165
  %v2167 = vsel %vm173, %v2118, 0.0
  %2168 = vadd.xlane.f32.xlu0 %v2167
  %v2169 = vpop.xlane.xlu0 %2168
  %v2170 = vsel %vm173, %v2121, 0.0
  %2171 = vadd.xlane.f32.xlu0 %v2170
  %v2172 = vpop.xlane.xlu0 %2171
  %v2173 = vsel %vm173, %v2124, 0.0
  %2174 = vadd.xlane.f32.xlu0 %v2173
  %v2175 = vpop.xlane.xlu0 %2174
  %v2176 = vsel %vm173, %v2127, 0.0
  %2177 = vadd.xlane.f32.xlu0 %v2176
  %v2178 = vpop.xlane.xlu0 %2177
  %v2179 = vsel %vm173, %v2130, 0.0
  %2180 = vadd.xlane.f32.xlu0 %v2179
  %v2181 = vpop.xlane.xlu0 %2180
  %v2182 = vsel %vm173, %v2133, 0.0
  %2183 = vadd.xlane.f32.xlu0 %v2182
  %v2184 = vpop.xlane.xlu0 %2183
  %v2185 = vsel %vm173, %v2136, 0.0
  %2186 = vadd.xlane.f32.xlu0 %v2185
  %v2187 = vpop.xlane.xlu0 %2186
  %v2188 = vsel %vm173, %v2139, 0.0
  %2189 = vadd.xlane.f32.xlu0 %v2188
  %v2190 = vpop.xlane.xlu0 %2189
  %v2191 = vsel %vm173, %v2142, 0.0
  %2192 = vadd.xlane.f32.xlu0 %v2191
  %v2193 = vpop.xlane.xlu0 %2192
  %v2194 = vmul.f32 %v2148, %v186
  %v2195 = vmul.f32 %v2151, %v186
  %v2196 = vmul.f32 %v2154, %v186
  %v2197 = vmul.f32 %v2157, %v186
  %v2198 = vmul.f32 %v2160, %v186
  %v2199 = vmul.f32 %v2163, %v186
  %v2200 = vmul.f32 %v2166, %v186
  %v2201 = vmul.f32 %v2169, %v186
  %v2202 = vmul.f32 %v2172, %v186
  %v2203 = vmul.f32 %v2175, %v186
  %v2204 = vmul.f32 %v2178, %v186
  %v2205 = vmul.f32 %v2181, %v186
  %v2206 = vmul.f32 %v2184, %v186
  %v2207 = vmul.f32 %v2187, %v186
  %v2208 = vmul.f32 %v2190, %v186
  %v2209 = vmul.f32 %v2193, %v186
  %v2210 = vsub.f32 %v2097, %v2194
  %v2211 = vsub.f32 %v2100, %v2195
  %v2212 = vsub.f32 %v2103, %v2196
  %v2213 = vsub.f32 %v2106, %v2197
  %v2214 = vsub.f32 %v2109, %v2198
  %v2215 = vsub.f32 %v2112, %v2199
  %v2216 = vsub.f32 %v2115, %v2200
  %v2217 = vsub.f32 %v2118, %v2201
  %v2218 = vsub.f32 %v2121, %v2202
  %v2219 = vsub.f32 %v2124, %v2203
  %v2220 = vsub.f32 %v2127, %v2204
  %v2221 = vsub.f32 %v2130, %v2205
  %v2222 = vsub.f32 %v2133, %v2206
  %v2223 = vsub.f32 %v2136, %v2207
  %v2224 = vsub.f32 %v2139, %v2208
  %v2225 = vsub.f32 %v2142, %v2209
  %v2226 = vmul.f32 %v2210, %v2210
  %v2227 = vmul.f32 %v2211, %v2211
  %v2228 = vmul.f32 %v2212, %v2212
  %v2229 = vmul.f32 %v2213, %v2213
  %v2230 = vmul.f32 %v2214, %v2214
  %v2231 = vmul.f32 %v2215, %v2215
  %v2232 = vmul.f32 %v2216, %v2216
  %v2233 = vmul.f32 %v2217, %v2217
  %v2234 = vmul.f32 %v2218, %v2218
  %v2235 = vmul.f32 %v2219, %v2219
  %v2236 = vmul.f32 %v2220, %v2220
  %v2237 = vmul.f32 %v2221, %v2221
  %v2238 = vmul.f32 %v2222, %v2222
  %v2239 = vmul.f32 %v2223, %v2223
  %v2240 = vmul.f32 %v2224, %v2224
  %v2241 = vmul.f32 %v2225, %v2225
  %v2242 = vsel %vm173, %v2226, 0.0
  %2243 = vadd.xlane.f32.xlu0 %v2242
  %v2244 = vpop.xlane.xlu0 %2243
  %v2245 = vsel %vm173, %v2227, 0.0
  %2246 = vadd.xlane.f32.xlu0 %v2245
  %v2247 = vpop.xlane.xlu0 %2246
  %v2248 = vsel %vm173, %v2228, 0.0
  %2249 = vadd.xlane.f32.xlu0 %v2248
  %v2250 = vpop.xlane.xlu0 %2249
  %v2251 = vsel %vm173, %v2229, 0.0
  %2252 = vadd.xlane.f32.xlu0 %v2251
  %v2253 = vpop.xlane.xlu0 %2252
  %v2254 = vsel %vm173, %v2230, 0.0
  %2255 = vadd.xlane.f32.xlu0 %v2254
  %v2256 = vpop.xlane.xlu0 %2255
  %v2257 = vsel %vm173, %v2231, 0.0
  %2258 = vadd.xlane.f32.xlu0 %v2257
  %v2259 = vpop.xlane.xlu0 %2258
  %v2260 = vsel %vm173, %v2232, 0.0
  %2261 = vadd.xlane.f32.xlu0 %v2260
  %v2262 = vpop.xlane.xlu0 %2261
  %v2263 = vsel %vm173, %v2233, 0.0
  %2264 = vadd.xlane.f32.xlu0 %v2263
  %v2265 = vpop.xlane.xlu0 %2264
  %v2266 = vsel %vm173, %v2234, 0.0
  %2267 = vadd.xlane.f32.xlu0 %v2266
  %v2268 = vpop.xlane.xlu0 %2267
  %v2269 = vsel %vm173, %v2235, 0.0
  %2270 = vadd.xlane.f32.xlu0 %v2269
  %v2271 = vpop.xlane.xlu0 %2270
  %v2272 = vsel %vm173, %v2236, 0.0
  %2273 = vadd.xlane.f32.xlu0 %v2272
  %v2274 = vpop.xlane.xlu0 %2273
  %v2275 = vsel %vm173, %v2237, 0.0
  %2276 = vadd.xlane.f32.xlu0 %v2275
  %v2277 = vpop.xlane.xlu0 %2276
  %v2278 = vsel %vm173, %v2238, 0.0
  %2279 = vadd.xlane.f32.xlu0 %v2278
  %v2280 = vpop.xlane.xlu0 %2279
  %v2281 = vsel %vm173, %v2239, 0.0
  %2282 = vadd.xlane.f32.xlu0 %v2281
  %v2283 = vpop.xlane.xlu0 %2282
  %v2284 = vsel %vm173, %v2240, 0.0
  %2285 = vadd.xlane.f32.xlu0 %v2284
  %v2286 = vpop.xlane.xlu0 %2285
  %v2287 = vsel %vm173, %v2241, 0.0
  %2288 = vadd.xlane.f32.xlu0 %v2287
  %v2289 = vpop.xlane.xlu0 %2288
  %v2290 = vmul.f32 %v2244, %v186
  %v2291 = vmul.f32 %v2247, %v186
  %v2292 = vmul.f32 %v2250, %v186
  %v2293 = vmul.f32 %v2253, %v186
  %v2294 = vmul.f32 %v2256, %v186
  %v2295 = vmul.f32 %v2259, %v186
  %v2296 = vmul.f32 %v2262, %v186
  %v2297 = vmul.f32 %v2265, %v186
  %v2298 = vmul.f32 %v2268, %v186
  %v2299 = vmul.f32 %v2271, %v186
  %v2300 = vmul.f32 %v2274, %v186
  %v2301 = vmul.f32 %v2277, %v186
  %v2302 = vmul.f32 %v2280, %v186
  %v2303 = vmul.f32 %v2283, %v186
  %v2304 = vmul.f32 %v2286, %v186
  %v2305 = vmul.f32 %v2289, %v186
  %v2306 = vadd.f32 %v2290, 1e-05
  %v2307 = vadd.f32 %v2291, 1e-05
  %v2308 = vadd.f32 %v2292, 1e-05
  %v2309 = vadd.f32 %v2293, 1e-05
  %v2310 = vadd.f32 %v2294, 1e-05
  %v2311 = vadd.f32 %v2295, 1e-05
  %v2312 = vadd.f32 %v2296, 1e-05
  %v2313 = vadd.f32 %v2297, 1e-05
  %v2314 = vadd.f32 %v2298, 1e-05
  %v2315 = vadd.f32 %v2299, 1e-05
  %v2316 = vadd.f32 %v2300, 1e-05
  %v2317 = vadd.f32 %v2301, 1e-05
  %v2318 = vadd.f32 %v2302, 1e-05
  %v2319 = vadd.f32 %v2303, 1e-05
  %v2320 = vadd.f32 %v2304, 1e-05
  %v2321 = vadd.f32 %v2305, 1e-05
  %v2322 = vrsqrt.pop %v2306
  %v2323 = vmul.f32 %v2322, %v2306
  %v2324 = vmul.f32 %v2323, %v2322
  %v2325 = vmul.f32 0.5, %v2324
  %v2326 = vsub.f32 1.5, %v2325
  %v2327 = vmul.f32 %v2322, %v2326
  %vm2328 = vweird.f32 %v2306
  %vm2329 = vweird.f32 %v2322
  %vm2330 = vmor %vm2328, %vm2329
  %v2331 = vsel %vm2330, %v2322, %v2327
  %v2332 = vrsqrt.pop %v2307
  %v2333 = vmul.f32 %v2332, %v2307
  %v2334 = vmul.f32 %v2333, %v2332
  %v2335 = vmul.f32 0.5, %v2334
  %v2336 = vsub.f32 1.5, %v2335
  %v2337 = vmul.f32 %v2332, %v2336
  %vm2338 = vweird.f32 %v2307
  %vm2339 = vweird.f32 %v2332
  %vm2340 = vmor %vm2338, %vm2339
  %v2341 = vsel %vm2340, %v2332, %v2337
  %v2342 = vrsqrt.pop %v2308
  %v2343 = vmul.f32 %v2342, %v2308
  %v2344 = vmul.f32 %v2343, %v2342
  %v2345 = vmul.f32 0.5, %v2344
  %v2346 = vsub.f32 1.5, %v2345
  %v2347 = vmul.f32 %v2342, %v2346
  %vm2348 = vweird.f32 %v2308
  %vm2349 = vweird.f32 %v2342
  %vm2350 = vmor %vm2348, %vm2349
  %v2351 = vsel %vm2350, %v2342, %v2347
  %v2352 = vrsqrt.pop %v2309
  %v2353 = vmul.f32 %v2352, %v2309
  %v2354 = vmul.f32 %v2353, %v2352
  %v2355 = vmul.f32 0.5, %v2354
  %v2356 = vsub.f32 1.5, %v2355
  %v2357 = vmul.f32 %v2352, %v2356
  %vm2358 = vweird.f32 %v2309
  %vm2359 = vweird.f32 %v2352
  %vm2360 = vmor %vm2358, %vm2359
  %v2361 = vsel %vm2360, %v2352, %v2357
  %v2362 = vrsqrt.pop %v2310
  %v2363 = vmul.f32 %v2362, %v2310
  %v2364 = vmul.f32 %v2363, %v2362
  %v2365 = vmul.f32 0.5, %v2364
  %v2366 = vsub.f32 1.5, %v2365
  %v2367 = vmul.f32 %v2362, %v2366
  %vm2368 = vweird.f32 %v2310
  %vm2369 = vweird.f32 %v2362
  %vm2370 = vmor %vm2368, %vm2369
  %v2371 = vsel %vm2370, %v2362, %v2367
  %v2372 = vrsqrt.pop %v2311
  %v2373 = vmul.f32 %v2372, %v2311
  %v2374 = vmul.f32 %v2373, %v2372
  %v2375 = vmul.f32 0.5, %v2374
  %v2376 = vsub.f32 1.5, %v2375
  %v2377 = vmul.f32 %v2372, %v2376
  %vm2378 = vweird.f32 %v2311
  %vm2379 = vweird.f32 %v2372
  %vm2380 = vmor %vm2378, %vm2379
  %v2381 = vsel %vm2380, %v2372, %v2377
  %v2382 = vrsqrt.pop %v2312
  %v2383 = vmul.f32 %v2382, %v2312
  %v2384 = vmul.f32 %v2383, %v2382
  %v2385 = vmul.f32 0.5, %v2384
  %v2386 = vsub.f32 1.5, %v2385
  %v2387 = vmul.f32 %v2382, %v2386
  %vm2388 = vweird.f32 %v2312
  %vm2389 = vweird.f32 %v2382
  %vm2390 = vmor %vm2388, %vm2389
  %v2391 = vsel %vm2390, %v2382, %v2387
  %v2392 = vrsqrt.pop %v2313
  %v2393 = vmul.f32 %v2392, %v2313
  %v2394 = vmul.f32 %v2393, %v2392
  %v2395 = vmul.f32 0.5, %v2394
  %v2396 = vsub.f32 1.5, %v2395
  %v2397 = vmul.f32 %v2392, %v2396
  %vm2398 = vweird.f32 %v2313
  %vm2399 = vweird.f32 %v2392
  %vm2400 = vmor %vm2398, %vm2399
  %v2401 = vsel %vm2400, %v2392, %v2397
  %v2402 = vrsqrt.pop %v2314
  %v2403 = vmul.f32 %v2402, %v2314
  %v2404 = vmul.f32 %v2403, %v2402
  %v2405 = vmul.f32 0.5, %v2404
  %v2406 = vsub.f32 1.5, %v2405
  %v2407 = vmul.f32 %v2402, %v2406
  %vm2408 = vweird.f32 %v2314
  %vm2409 = vweird.f32 %v2402
  %vm2410 = vmor %vm2408, %vm2409
  %v2411 = vsel %vm2410, %v2402, %v2407
  %v2412 = vrsqrt.pop %v2315
  %v2413 = vmul.f32 %v2412, %v2315
  %v2414 = vmul.f32 %v2413, %v2412
  %v2415 = vmul.f32 0.5, %v2414
  %v2416 = vsub.f32 1.5, %v2415
  %v2417 = vmul.f32 %v2412, %v2416
  %vm2418 = vweird.f32 %v2315
  %vm2419 = vweird.f32 %v2412
  %vm2420 = vmor %vm2418, %vm2419
  %v2421 = vsel %vm2420, %v2412, %v2417
  %v2422 = vrsqrt.pop %v2316
  %v2423 = vmul.f32 %v2422, %v2316
  %v2424 = vmul.f32 %v2423, %v2422
  %v2425 = vmul.f32 0.5, %v2424
  %v2426 = vsub.f32 1.5, %v2425
  %v2427 = vmul.f32 %v2422, %v2426
  %vm2428 = vweird.f32 %v2316
  %vm2429 = vweird.f32 %v2422
  %vm2430 = vmor %vm2428, %vm2429
  %v2431 = vsel %vm2430, %v2422, %v2427
  %v2432 = vrsqrt.pop %v2317
  %v2433 = vmul.f32 %v2432, %v2317
  %v2434 = vmul.f32 %v2433, %v2432
  %v2435 = vmul.f32 0.5, %v2434
  %v2436 = vsub.f32 1.5, %v2435
  %v2437 = vmul.f32 %v2432, %v2436
  %vm2438 = vweird.f32 %v2317
  %vm2439 = vweird.f32 %v2432
  %vm2440 = vmor %vm2438, %vm2439
  %v2441 = vsel %vm2440, %v2432, %v2437
  %v2442 = vrsqrt.pop %v2318
  %v2443 = vmul.f32 %v2442, %v2318
  %v2444 = vmul.f32 %v2443, %v2442
  %v2445 = vmul.f32 0.5, %v2444
  %v2446 = vsub.f32 1.5, %v2445
  %v2447 = vmul.f32 %v2442, %v2446
  %vm2448 = vweird.f32 %v2318
  %vm2449 = vweird.f32 %v2442
  %vm2450 = vmor %vm2448, %vm2449
  %v2451 = vsel %vm2450, %v2442, %v2447
  %v2452 = vrsqrt.pop %v2319
  %v2453 = vmul.f32 %v2452, %v2319
  %v2454 = vmul.f32 %v2453, %v2452
  %v2455 = vmul.f32 0.5, %v2454
  %v2456 = vsub.f32 1.5, %v2455
  %v2457 = vmul.f32 %v2452, %v2456
  %vm2458 = vweird.f32 %v2319
  %vm2459 = vweird.f32 %v2452
  %vm2460 = vmor %vm2458, %vm2459
  %v2461 = vsel %vm2460, %v2452, %v2457
  %v2462 = vrsqrt.pop %v2320
  %v2463 = vmul.f32 %v2462, %v2320
  %v2464 = vmul.f32 %v2463, %v2462
  %v2465 = vmul.f32 0.5, %v2464
  %v2466 = vsub.f32 1.5, %v2465
  %v2467 = vmul.f32 %v2462, %v2466
  %vm2468 = vweird.f32 %v2320
  %vm2469 = vweird.f32 %v2462
  %vm2470 = vmor %vm2468, %vm2469
  %v2471 = vsel %vm2470, %v2462, %v2467
  %v2472 = vrsqrt.pop %v2321
  %v2473 = vmul.f32 %v2472, %v2321
  %v2474 = vmul.f32 %v2473, %v2472
  %v2475 = vmul.f32 0.5, %v2474
  %v2476 = vsub.f32 1.5, %v2475
  %v2477 = vmul.f32 %v2472, %v2476
  %vm2478 = vweird.f32 %v2321
  %vm2479 = vweird.f32 %v2472
  %vm2480 = vmor %vm2478, %vm2479
  %v2481 = vsel %vm2480, %v2472, %v2477
  %v2482 = vmul.f32 %v2210, %v2331
  %v2483 = vmul.f32 %v2211, %v2341
  %v2484 = vmul.f32 %v2212, %v2351
  %v2485 = vmul.f32 %v2213, %v2361
  %v2486 = vmul.f32 %v2214, %v2371
  %v2487 = vmul.f32 %v2215, %v2381
  %v2488 = vmul.f32 %v2216, %v2391
  %v2489 = vmul.f32 %v2217, %v2401
  %v2490 = vmul.f32 %v2218, %v2411
  %v2491 = vmul.f32 %v2219, %v2421
  %v2492 = vmul.f32 %v2220, %v2431
  %v2493 = vmul.f32 %v2221, %v2441
  %v2494 = vmul.f32 %v2222, %v2451
  %v2495 = vmul.f32 %v2223, %v2461
  %v2496 = vmul.f32 %v2224, %v2471
  %v2497 = vmul.f32 %v2225, %v2481
  %v2499 = vperm.slane %v2144, 0
  %v2501 = vmul.f32 %v2482, %v2499
  %v2502 = vmul.f32 %v2483, %v2499
  %v2503 = vmul.f32 %v2484, %v2499
  %v2504 = vmul.f32 %v2485, %v2499
  %v2505 = vmul.f32 %v2486, %v2499
  %v2506 = vmul.f32 %v2487, %v2499
  %v2507 = vmul.f32 %v2488, %v2499
  %v2508 = vmul.f32 %v2489, %v2499
  %v2509 = vmul.f32 %v2490, %v2499
  %v2510 = vmul.f32 %v2491, %v2499
  %v2511 = vmul.f32 %v2492, %v2499
  %v2512 = vmul.f32 %v2493, %v2499
  %v2513 = vmul.f32 %v2494, %v2499
  %v2514 = vmul.f32 %v2495, %v2499
  %v2515 = vmul.f32 %v2496, %v2499
  %v2516 = vmul.f32 %v2497, %v2499
  %v2518 = vperm.slane %v2145, 0
  %v2520 = vadd.f32 %v2501, %v2518
  %v2521 = vadd.f32 %v2502, %v2518
  %v2522 = vadd.f32 %v2503, %v2518
  %v2523 = vadd.f32 %v2504, %v2518
  %v2524 = vadd.f32 %v2505, %v2518
  %v2525 = vadd.f32 %v2506, %v2518
  %v2526 = vadd.f32 %v2507, %v2518
  %v2527 = vadd.f32 %v2508, %v2518
  %v2528 = vadd.f32 %v2509, %v2518
  %v2529 = vadd.f32 %v2510, %v2518
  %v2530 = vadd.f32 %v2511, %v2518
  %v2531 = vadd.f32 %v2512, %v2518
  %v2532 = vadd.f32 %v2513, %v2518
  %v2533 = vadd.f32 %v2514, %v2518
  %v2534 = vadd.f32 %v2515, %v2518
  %v2535 = vadd.f32 %v2516, %v2518
  %v2536 = vmax.f32 %v2520, 0.0
  %v2537 = vmax.f32 %v2521, 0.0
  %v2538 = vmax.f32 %v2522, 0.0
  %v2539 = vmax.f32 %v2523, 0.0
  %v2540 = vmax.f32 %v2524, 0.0
  %v2541 = vmax.f32 %v2525, 0.0
  %v2542 = vmax.f32 %v2526, 0.0
  %v2543 = vmax.f32 %v2527, 0.0
  %v2544 = vmax.f32 %v2528, 0.0
  %v2545 = vmax.f32 %v2529, 0.0
  %v2546 = vmax.f32 %v2530, 0.0
  %v2547 = vmax.f32 %v2531, 0.0
  %v2548 = vmax.f32 %v2532, 0.0
  %v2549 = vmax.f32 %v2533, 0.0
  %v2550 = vmax.f32 %v2534, 0.0
  %v2551 = vmax.f32 %v2535, 0.0
  %v2552 = vld [vmem:[%s31] sm:$0x1]
  %v2553 = vld [vmem:[%s33] sm:$0x1]
  %2570 = vrot.lane.b32.xlu0 %v2097, 96
  %v2571 = vpop.permute.xlu0 %2570
  %2572 = vrot.lane.b32.xlu0 %v2100, 96
  %v2573 = vpop.permute.xlu0 %2572
  %2574 = vrot.lane.b32.xlu0 %v2103, 96
  %v2575 = vpop.permute.xlu0 %2574
  %2576 = vrot.lane.b32.xlu0 %v2106, 96
  %v2577 = vpop.permute.xlu0 %2576
  %2578 = vrot.lane.b32.xlu0 %v2109, 96
  %v2579 = vpop.permute.xlu0 %2578
  %2580 = vrot.lane.b32.xlu0 %v2112, 96
  %v2581 = vpop.permute.xlu0 %2580
  %2582 = vrot.lane.b32.xlu0 %v2115, 96
  %v2583 = vpop.permute.xlu0 %2582
  %2584 = vrot.lane.b32.xlu0 %v2118, 96
  %v2585 = vpop.permute.xlu0 %2584
  %2586 = vrot.lane.b32.xlu0 %v2121, 96
  %v2587 = vpop.permute.xlu0 %2586
  %2588 = vrot.lane.b32.xlu0 %v2124, 96
  %v2589 = vpop.permute.xlu0 %2588
  %2590 = vrot.lane.b32.xlu0 %v2127, 96
  %v2591 = vpop.permute.xlu0 %2590
  %2592 = vrot.lane.b32.xlu0 %v2130, 96
  %v2593 = vpop.permute.xlu0 %2592
  %2594 = vrot.lane.b32.xlu0 %v2133, 96
  %v2595 = vpop.permute.xlu0 %2594
  %2596 = vrot.lane.b32.xlu0 %v2136, 96
  %v2597 = vpop.permute.xlu0 %2596
  %2598 = vrot.lane.b32.xlu0 %v2139, 96
  %v2599 = vpop.permute.xlu0 %2598
  %2600 = vrot.lane.b32.xlu0 %v2142, 96
  %v2601 = vpop.permute.xlu0 %2600
  %v2618 = vsel %vm173, %v2571, 0.0
  %2619 = vadd.xlane.f32.xlu0 %v2618
  %v2620 = vpop.xlane.xlu0 %2619
  %v2621 = vsel %vm173, %v2573, 0.0
  %2622 = vadd.xlane.f32.xlu0 %v2621
  %v2623 = vpop.xlane.xlu0 %2622
  %v2624 = vsel %vm173, %v2575, 0.0
  %2625 = vadd.xlane.f32.xlu0 %v2624
  %v2626 = vpop.xlane.xlu0 %2625
  %v2627 = vsel %vm173, %v2577, 0.0
  %2628 = vadd.xlane.f32.xlu0 %v2627
  %v2629 = vpop.xlane.xlu0 %2628
  %v2630 = vsel %vm173, %v2579, 0.0
  %2631 = vadd.xlane.f32.xlu0 %v2630
  %v2632 = vpop.xlane.xlu0 %2631
  %v2633 = vsel %vm173, %v2581, 0.0
  %2634 = vadd.xlane.f32.xlu0 %v2633
  %v2635 = vpop.xlane.xlu0 %2634
  %v2636 = vsel %vm173, %v2583, 0.0
  %2637 = vadd.xlane.f32.xlu0 %v2636
  %v2638 = vpop.xlane.xlu0 %2637
  %v2639 = vsel %vm173, %v2585, 0.0
  %2640 = vadd.xlane.f32.xlu0 %v2639
  %v2641 = vpop.xlane.xlu0 %2640
  %v2642 = vsel %vm173, %v2587, 0.0
  %2643 = vadd.xlane.f32.xlu0 %v2642
  %v2644 = vpop.xlane.xlu0 %2643
  %v2645 = vsel %vm173, %v2589, 0.0
  %2646 = vadd.xlane.f32.xlu0 %v2645
  %v2647 = vpop.xlane.xlu0 %2646
  %v2648 = vsel %vm173, %v2591, 0.0
  %2649 = vadd.xlane.f32.xlu0 %v2648
  %v2650 = vpop.xlane.xlu0 %2649
  %v2651 = vsel %vm173, %v2593, 0.0
  %2652 = vadd.xlane.f32.xlu0 %v2651
  %v2653 = vpop.xlane.xlu0 %2652
  %v2654 = vsel %vm173, %v2595, 0.0
  %2655 = vadd.xlane.f32.xlu0 %v2654
  %v2656 = vpop.xlane.xlu0 %2655
  %v2657 = vsel %vm173, %v2597, 0.0
  %2658 = vadd.xlane.f32.xlu0 %v2657
  %v2659 = vpop.xlane.xlu0 %2658
  %v2660 = vsel %vm173, %v2599, 0.0
  %2661 = vadd.xlane.f32.xlu0 %v2660
  %v2662 = vpop.xlane.xlu0 %2661
  %v2663 = vsel %vm173, %v2601, 0.0
  %2664 = vadd.xlane.f32.xlu0 %v2663
  %v2665 = vpop.xlane.xlu0 %2664
  %v2666 = vmul.f32 %v2620, %v186
  %v2667 = vmul.f32 %v2623, %v186
  %v2668 = vmul.f32 %v2626, %v186
  %v2669 = vmul.f32 %v2629, %v186
  %v2670 = vmul.f32 %v2632, %v186
  %v2671 = vmul.f32 %v2635, %v186
  %v2672 = vmul.f32 %v2638, %v186
  %v2673 = vmul.f32 %v2641, %v186
  %v2674 = vmul.f32 %v2644, %v186
  %v2675 = vmul.f32 %v2647, %v186
  %v2676 = vmul.f32 %v2650, %v186
  %v2677 = vmul.f32 %v2653, %v186
  %v2678 = vmul.f32 %v2656, %v186
  %v2679 = vmul.f32 %v2659, %v186
  %v2680 = vmul.f32 %v2662, %v186
  %v2681 = vmul.f32 %v2665, %v186
  %v2682 = vsub.f32 %v2097, %v2666
  %v2683 = vsub.f32 %v2100, %v2667
  %v2684 = vsub.f32 %v2103, %v2668
  %v2685 = vsub.f32 %v2106, %v2669
  %v2686 = vsub.f32 %v2109, %v2670
  %v2687 = vsub.f32 %v2112, %v2671
  %v2688 = vsub.f32 %v2115, %v2672
  %v2689 = vsub.f32 %v2118, %v2673
  %v2690 = vsub.f32 %v2121, %v2674
  %v2691 = vsub.f32 %v2124, %v2675
  %v2692 = vsub.f32 %v2127, %v2676
  %v2693 = vsub.f32 %v2130, %v2677
  %v2694 = vsub.f32 %v2133, %v2678
  %v2695 = vsub.f32 %v2136, %v2679
  %v2696 = vsub.f32 %v2139, %v2680
  %v2697 = vsub.f32 %v2142, %v2681
  %v2698 = vmul.f32 %v2682, %v2682
  %v2699 = vmul.f32 %v2683, %v2683
  %v2700 = vmul.f32 %v2684, %v2684
  %v2701 = vmul.f32 %v2685, %v2685
  %v2702 = vmul.f32 %v2686, %v2686
  %v2703 = vmul.f32 %v2687, %v2687
  %v2704 = vmul.f32 %v2688, %v2688
  %v2705 = vmul.f32 %v2689, %v2689
  %v2706 = vmul.f32 %v2690, %v2690
  %v2707 = vmul.f32 %v2691, %v2691
  %v2708 = vmul.f32 %v2692, %v2692
  %v2709 = vmul.f32 %v2693, %v2693
  %v2710 = vmul.f32 %v2694, %v2694
  %v2711 = vmul.f32 %v2695, %v2695
  %v2712 = vmul.f32 %v2696, %v2696
  %v2713 = vmul.f32 %v2697, %v2697
  %2730 = vrot.lane.b32.xlu0 %v2698, 96
  %v2731 = vpop.permute.xlu0 %2730
  %2732 = vrot.lane.b32.xlu0 %v2699, 96
  %v2733 = vpop.permute.xlu0 %2732
  %2734 = vrot.lane.b32.xlu0 %v2700, 96
  %v2735 = vpop.permute.xlu0 %2734
  %2736 = vrot.lane.b32.xlu0 %v2701, 96
  %v2737 = vpop.permute.xlu0 %2736
  %2738 = vrot.lane.b32.xlu0 %v2702, 96
  %v2739 = vpop.permute.xlu0 %2738
  %2740 = vrot.lane.b32.xlu0 %v2703, 96
  %v2741 = vpop.permute.xlu0 %2740
  %2742 = vrot.lane.b32.xlu0 %v2704, 96
  %v2743 = vpop.permute.xlu0 %2742
  %2744 = vrot.lane.b32.xlu0 %v2705, 96
  %v2745 = vpop.permute.xlu0 %2744
  %2746 = vrot.lane.b32.xlu0 %v2706, 96
  %v2747 = vpop.permute.xlu0 %2746
  %2748 = vrot.lane.b32.xlu0 %v2707, 96
  %v2749 = vpop.permute.xlu0 %2748
  %2750 = vrot.lane.b32.xlu0 %v2708, 96
  %v2751 = vpop.permute.xlu0 %2750
  %2752 = vrot.lane.b32.xlu0 %v2709, 96
  %v2753 = vpop.permute.xlu0 %2752
  %2754 = vrot.lane.b32.xlu0 %v2710, 96
  %v2755 = vpop.permute.xlu0 %2754
  %2756 = vrot.lane.b32.xlu0 %v2711, 96
  %v2757 = vpop.permute.xlu0 %2756
  %2758 = vrot.lane.b32.xlu0 %v2712, 96
  %v2759 = vpop.permute.xlu0 %2758
  %2760 = vrot.lane.b32.xlu0 %v2713, 96
  %v2761 = vpop.permute.xlu0 %2760
  %v2778 = vsel %vm173, %v2731, 0.0
  %2779 = vadd.xlane.f32.xlu0 %v2778
  %v2780 = vpop.xlane.xlu0 %2779
  %v2781 = vsel %vm173, %v2733, 0.0
  %2782 = vadd.xlane.f32.xlu0 %v2781
  %v2783 = vpop.xlane.xlu0 %2782
  %v2784 = vsel %vm173, %v2735, 0.0
  %2785 = vadd.xlane.f32.xlu0 %v2784
  %v2786 = vpop.xlane.xlu0 %2785
  %v2787 = vsel %vm173, %v2737, 0.0
  %2788 = vadd.xlane.f32.xlu0 %v2787
  %v2789 = vpop.xlane.xlu0 %2788
  %v2790 = vsel %vm173, %v2739, 0.0
  %2791 = vadd.xlane.f32.xlu0 %v2790
  %v2792 = vpop.xlane.xlu0 %2791
  %v2793 = vsel %vm173, %v2741, 0.0
  %2794 = vadd.xlane.f32.xlu0 %v2793
  %v2795 = vpop.xlane.xlu0 %2794
  %v2796 = vsel %vm173, %v2743, 0.0
  %2797 = vadd.xlane.f32.xlu0 %v2796
  %v2798 = vpop.xlane.xlu0 %2797
  %v2799 = vsel %vm173, %v2745, 0.0
  %2800 = vadd.xlane.f32.xlu0 %v2799
  %v2801 = vpop.xlane.xlu0 %2800
  %v2802 = vsel %vm173, %v2747, 0.0
  %2803 = vadd.xlane.f32.xlu0 %v2802
  %v2804 = vpop.xlane.xlu0 %2803
  %v2805 = vsel %vm173, %v2749, 0.0
  %2806 = vadd.xlane.f32.xlu0 %v2805
  %v2807 = vpop.xlane.xlu0 %2806
  %v2808 = vsel %vm173, %v2751, 0.0
  %2809 = vadd.xlane.f32.xlu0 %v2808
  %v2810 = vpop.xlane.xlu0 %2809
  %v2811 = vsel %vm173, %v2753, 0.0
  %2812 = vadd.xlane.f32.xlu0 %v2811
  %v2813 = vpop.xlane.xlu0 %2812
  %v2814 = vsel %vm173, %v2755, 0.0
  %2815 = vadd.xlane.f32.xlu0 %v2814
  %v2816 = vpop.xlane.xlu0 %2815
  %v2817 = vsel %vm173, %v2757, 0.0
  %2818 = vadd.xlane.f32.xlu0 %v2817
  %v2819 = vpop.xlane.xlu0 %2818
  %v2820 = vsel %vm173, %v2759, 0.0
  %2821 = vadd.xlane.f32.xlu0 %v2820
  %v2822 = vpop.xlane.xlu0 %2821
  %v2823 = vsel %vm173, %v2761, 0.0
  %2824 = vadd.xlane.f32.xlu0 %v2823
  %v2825 = vpop.xlane.xlu0 %2824
  %v2826 = vmul.f32 %v2780, %v186
  %v2827 = vmul.f32 %v2783, %v186
  %v2828 = vmul.f32 %v2786, %v186
  %v2829 = vmul.f32 %v2789, %v186
  %v2830 = vmul.f32 %v2792, %v186
  %v2831 = vmul.f32 %v2795, %v186
  %v2832 = vmul.f32 %v2798, %v186
  %v2833 = vmul.f32 %v2801, %v186
  %v2834 = vmul.f32 %v2804, %v186
  %v2835 = vmul.f32 %v2807, %v186
  %v2836 = vmul.f32 %v2810, %v186
  %v2837 = vmul.f32 %v2813, %v186
  %v2838 = vmul.f32 %v2816, %v186
  %v2839 = vmul.f32 %v2819, %v186
  %v2840 = vmul.f32 %v2822, %v186
  %v2841 = vmul.f32 %v2825, %v186
  %v2842 = vadd.f32 %v2826, 1e-05
  %v2843 = vadd.f32 %v2827, 1e-05
  %v2844 = vadd.f32 %v2828, 1e-05
  %v2845 = vadd.f32 %v2829, 1e-05
  %v2846 = vadd.f32 %v2830, 1e-05
  %v2847 = vadd.f32 %v2831, 1e-05
  %v2848 = vadd.f32 %v2832, 1e-05
  %v2849 = vadd.f32 %v2833, 1e-05
  %v2850 = vadd.f32 %v2834, 1e-05
  %v2851 = vadd.f32 %v2835, 1e-05
  %v2852 = vadd.f32 %v2836, 1e-05
  %v2853 = vadd.f32 %v2837, 1e-05
  %v2854 = vadd.f32 %v2838, 1e-05
  %v2855 = vadd.f32 %v2839, 1e-05
  %v2856 = vadd.f32 %v2840, 1e-05
  %v2857 = vadd.f32 %v2841, 1e-05
  %v2858 = vrsqrt.pop %v2842
  %v2859 = vmul.f32 %v2858, %v2842
  %v2860 = vmul.f32 %v2859, %v2858
  %v2861 = vmul.f32 0.5, %v2860
  %v2862 = vsub.f32 1.5, %v2861
  %v2863 = vmul.f32 %v2858, %v2862
  %vm2864 = vweird.f32 %v2842
  %vm2865 = vweird.f32 %v2858
  %vm2866 = vmor %vm2864, %vm2865
  %v2867 = vsel %vm2866, %v2858, %v2863
  %v2868 = vrsqrt.pop %v2843
  %v2869 = vmul.f32 %v2868, %v2843
  %v2870 = vmul.f32 %v2869, %v2868
  %v2871 = vmul.f32 0.5, %v2870
  %v2872 = vsub.f32 1.5, %v2871
  %v2873 = vmul.f32 %v2868, %v2872
  %vm2874 = vweird.f32 %v2843
  %vm2875 = vweird.f32 %v2868
  %vm2876 = vmor %vm2874, %vm2875
  %v2877 = vsel %vm2876, %v2868, %v2873
  %v2878 = vrsqrt.pop %v2844
  %v2879 = vmul.f32 %v2878, %v2844
  %v2880 = vmul.f32 %v2879, %v2878
  %v2881 = vmul.f32 0.5, %v2880
  %v2882 = vsub.f32 1.5, %v2881
  %v2883 = vmul.f32 %v2878, %v2882
  %vm2884 = vweird.f32 %v2844
  %vm2885 = vweird.f32 %v2878
  %vm2886 = vmor %vm2884, %vm2885
  %v2887 = vsel %vm2886, %v2878, %v2883
  %v2888 = vrsqrt.pop %v2845
  %v2889 = vmul.f32 %v2888, %v2845
  %v2890 = vmul.f32 %v2889, %v2888
  %v2891 = vmul.f32 0.5, %v2890
  %v2892 = vsub.f32 1.5, %v2891
  %v2893 = vmul.f32 %v2888, %v2892
  %vm2894 = vweird.f32 %v2845
  %vm2895 = vweird.f32 %v2888
  %vm2896 = vmor %vm2894, %vm2895
  %v2897 = vsel %vm2896, %v2888, %v2893
  %v2898 = vrsqrt.pop %v2846
  %v2899 = vmul.f32 %v2898, %v2846
  %v2900 = vmul.f32 %v2899, %v2898
  %v2901 = vmul.f32 0.5, %v2900
  %v2902 = vsub.f32 1.5, %v2901
  %v2903 = vmul.f32 %v2898, %v2902
  %vm2904 = vweird.f32 %v2846
  %vm2905 = vweird.f32 %v2898
  %vm2906 = vmor %vm2904, %vm2905
  %v2907 = vsel %vm2906, %v2898, %v2903
  %v2908 = vrsqrt.pop %v2847
  %v2909 = vmul.f32 %v2908, %v2847
  %v2910 = vmul.f32 %v2909, %v2908
  %v2911 = vmul.f32 0.5, %v2910
  %v2912 = vsub.f32 1.5, %v2911
  %v2913 = vmul.f32 %v2908, %v2912
  %vm2914 = vweird.f32 %v2847
  %vm2915 = vweird.f32 %v2908
  %vm2916 = vmor %vm2914, %vm2915
  %v2917 = vsel %vm2916, %v2908, %v2913
  %v2918 = vrsqrt.pop %v2848
  %v2919 = vmul.f32 %v2918, %v2848
  %v2920 = vmul.f32 %v2919, %v2918
  %v2921 = vmul.f32 0.5, %v2920
  %v2922 = vsub.f32 1.5, %v2921
  %v2923 = vmul.f32 %v2918, %v2922
  %vm2924 = vweird.f32 %v2848
  %vm2925 = vweird.f32 %v2918
  %vm2926 = vmor %vm2924, %vm2925
  %v2927 = vsel %vm2926, %v2918, %v2923
  %v2928 = vrsqrt.pop %v2849
  %v2929 = vmul.f32 %v2928, %v2849
  %v2930 = vmul.f32 %v2929, %v2928
  %v2931 = vmul.f32 0.5, %v2930
  %v2932 = vsub.f32 1.5, %v2931
  %v2933 = vmul.f32 %v2928, %v2932
  %vm2934 = vweird.f32 %v2849
  %vm2935 = vweird.f32 %v2928
  %vm2936 = vmor %vm2934, %vm2935
  %v2937 = vsel %vm2936, %v2928, %v2933
  %v2938 = vrsqrt.pop %v2850
  %v2939 = vmul.f32 %v2938, %v2850
  %v2940 = vmul.f32 %v2939, %v2938
  %v2941 = vmul.f32 0.5, %v2940
  %v2942 = vsub.f32 1.5, %v2941
  %v2943 = vmul.f32 %v2938, %v2942
  %vm2944 = vweird.f32 %v2850
  %vm2945 = vweird.f32 %v2938
  %vm2946 = vmor %vm2944, %vm2945
  %v2947 = vsel %vm2946, %v2938, %v2943
  %v2948 = vrsqrt.pop %v2851
  %v2949 = vmul.f32 %v2948, %v2851
  %v2950 = vmul.f32 %v2949, %v2948
  %v2951 = vmul.f32 0.5, %v2950
  %v2952 = vsub.f32 1.5, %v2951
  %v2953 = vmul.f32 %v2948, %v2952
  %vm2954 = vweird.f32 %v2851
  %vm2955 = vweird.f32 %v2948
  %vm2956 = vmor %vm2954, %vm2955
  %v2957 = vsel %vm2956, %v2948, %v2953
  %v2958 = vrsqrt.pop %v2852
  %v2959 = vmul.f32 %v2958, %v2852
  %v2960 = vmul.f32 %v2959, %v2958
  %v2961 = vmul.f32 0.5, %v2960
  %v2962 = vsub.f32 1.5, %v2961
  %v2963 = vmul.f32 %v2958, %v2962
  %vm2964 = vweird.f32 %v2852
  %vm2965 = vweird.f32 %v2958
  %vm2966 = vmor %vm2964, %vm2965
  %v2967 = vsel %vm2966, %v2958, %v2963
  %v2968 = vrsqrt.pop %v2853
  %v2969 = vmul.f32 %v2968, %v2853
  %v2970 = vmul.f32 %v2969, %v2968
  %v2971 = vmul.f32 0.5, %v2970
  %v2972 = vsub.f32 1.5, %v2971
  %v2973 = vmul.f32 %v2968, %v2972
  %vm2974 = vweird.f32 %v2853
  %vm2975 = vweird.f32 %v2968
  %vm2976 = vmor %vm2974, %vm2975
  %v2977 = vsel %vm2976, %v2968, %v2973
  %v2978 = vrsqrt.pop %v2854
  %v2979 = vmul.f32 %v2978, %v2854
  %v2980 = vmul.f32 %v2979, %v2978
  %v2981 = vmul.f32 0.5, %v2980
  %v2982 = vsub.f32 1.5, %v2981
  %v2983 = vmul.f32 %v2978, %v2982
  %vm2984 = vweird.f32 %v2854
  %vm2985 = vweird.f32 %v2978
  %vm2986 = vmor %vm2984, %vm2985
  %v2987 = vsel %vm2986, %v2978, %v2983
  %v2988 = vrsqrt.pop %v2855
  %v2989 = vmul.f32 %v2988, %v2855
  %v2990 = vmul.f32 %v2989, %v2988
  %v2991 = vmul.f32 0.5, %v2990
  %v2992 = vsub.f32 1.5, %v2991
  %v2993 = vmul.f32 %v2988, %v2992
  %vm2994 = vweird.f32 %v2855
  %vm2995 = vweird.f32 %v2988
  %vm2996 = vmor %vm2994, %vm2995
  %v2997 = vsel %vm2996, %v2988, %v2993
  %v2998 = vrsqrt.pop %v2856
  %v2999 = vmul.f32 %v2998, %v2856
  %v3000 = vmul.f32 %v2999, %v2998
  %v3001 = vmul.f32 0.5, %v3000
  %v3002 = vsub.f32 1.5, %v3001
  %v3003 = vmul.f32 %v2998, %v3002
  %vm3004 = vweird.f32 %v2856
  %vm3005 = vweird.f32 %v2998
  %vm3006 = vmor %vm3004, %vm3005
  %v3007 = vsel %vm3006, %v2998, %v3003
  %v3008 = vrsqrt.pop %v2857
  %v3009 = vmul.f32 %v3008, %v2857
  %v3010 = vmul.f32 %v3009, %v3008
  %v3011 = vmul.f32 0.5, %v3010
  %v3012 = vsub.f32 1.5, %v3011
  %v3013 = vmul.f32 %v3008, %v3012
  %vm3014 = vweird.f32 %v2857
  %vm3015 = vweird.f32 %v3008
  %vm3016 = vmor %vm3014, %vm3015
  %v3017 = vsel %vm3016, %v3008, %v3013
  %v3018 = vmul.f32 %v2682, %v2867
  %v3019 = vmul.f32 %v2683, %v2877
  %v3020 = vmul.f32 %v2684, %v2887
  %v3021 = vmul.f32 %v2685, %v2897
  %v3022 = vmul.f32 %v2686, %v2907
  %v3023 = vmul.f32 %v2687, %v2917
  %v3024 = vmul.f32 %v2688, %v2927
  %v3025 = vmul.f32 %v2689, %v2937
  %v3026 = vmul.f32 %v2690, %v2947
  %v3027 = vmul.f32 %v2691, %v2957
  %v3028 = vmul.f32 %v2692, %v2967
  %v3029 = vmul.f32 %v2693, %v2977
  %v3030 = vmul.f32 %v2694, %v2987
  %v3031 = vmul.f32 %v2695, %v2997
  %v3032 = vmul.f32 %v2696, %v3007
  %v3033 = vmul.f32 %v2697, %v3017
  %v3035 = vperm.slane %v2552, 0
  %3036 = vrot.lane.b32.xlu0 %v3035, 32
  %v3037 = vpop.permute.xlu0 %3036
  %v3039 = vmul.f32 %v3018, %v3037
  %v3040 = vmul.f32 %v3019, %v3037
  %v3041 = vmul.f32 %v3020, %v3037
  %v3042 = vmul.f32 %v3021, %v3037
  %v3043 = vmul.f32 %v3022, %v3037
  %v3044 = vmul.f32 %v3023, %v3037
  %v3045 = vmul.f32 %v3024, %v3037
  %v3046 = vmul.f32 %v3025, %v3037
  %v3047 = vmul.f32 %v3026, %v3037
  %v3048 = vmul.f32 %v3027, %v3037
  %v3049 = vmul.f32 %v3028, %v3037
  %v3050 = vmul.f32 %v3029, %v3037
  %v3051 = vmul.f32 %v3030, %v3037
  %v3052 = vmul.f32 %v3031, %v3037
  %v3053 = vmul.f32 %v3032, %v3037
  %v3054 = vmul.f32 %v3033, %v3037
  %v3056 = vperm.slane %v2553, 0
  %3057 = vrot.lane.b32.xlu0 %v3056, 32
  %v3058 = vpop.permute.xlu0 %3057
  %v3060 = vadd.f32 %v3039, %v3058
  %v3061 = vadd.f32 %v3040, %v3058
  %v3062 = vadd.f32 %v3041, %v3058
  %v3063 = vadd.f32 %v3042, %v3058
  %v3064 = vadd.f32 %v3043, %v3058
  %v3065 = vadd.f32 %v3044, %v3058
  %v3066 = vadd.f32 %v3045, %v3058
  %v3067 = vadd.f32 %v3046, %v3058
  %v3068 = vadd.f32 %v3047, %v3058
  %v3069 = vadd.f32 %v3048, %v3058
  %v3070 = vadd.f32 %v3049, %v3058
  %v3071 = vadd.f32 %v3050, %v3058
  %v3072 = vadd.f32 %v3051, %v3058
  %v3073 = vadd.f32 %v3052, %v3058
  %v3074 = vadd.f32 %v3053, %v3058
  %v3075 = vadd.f32 %v3054, %v3058
  %v3076 = vmax.f32 %v3060, 0.0
  %v3077 = vmax.f32 %v3061, 0.0
  %v3078 = vmax.f32 %v3062, 0.0
  %v3079 = vmax.f32 %v3063, 0.0
  %v3080 = vmax.f32 %v3064, 0.0
  %v3081 = vmax.f32 %v3065, 0.0
  %v3082 = vmax.f32 %v3066, 0.0
  %v3083 = vmax.f32 %v3067, 0.0
  %v3084 = vmax.f32 %v3068, 0.0
  %v3085 = vmax.f32 %v3069, 0.0
  %v3086 = vmax.f32 %v3070, 0.0
  %v3087 = vmax.f32 %v3071, 0.0
  %v3088 = vmax.f32 %v3072, 0.0
  %v3089 = vmax.f32 %v3073, 0.0
  %v3090 = vmax.f32 %v3074, 0.0
  %v3091 = vmax.f32 %v3075, 0.0
  %v3092 = vld [vmem:[%s23] sm:$0xff]
  %v3093 = vld [vmem:[%s23 + $0x8] sm:$0xff]
  %v3094 = vld [vmem:[%s23 + $0x10] sm:$0xff]
  %v3095 = vld [vmem:[%s23 + $0x18] sm:$0xff]
  %v3096 = vld [vmem:[%s25] sm:$0x1]
  %v3098 = vperm.slane %v3096, 0
  %v3101 = vsel %vm173, %v2536, 0
  %v3104 = vsel %vm173, %v2537, 0
  %v3107 = vsel %vm173, %v2538, 0
  %v3110 = vsel %vm173, %v2539, 0
  %v3113 = vsel %vm173, %v2540, 0
  %v3116 = vsel %vm173, %v2541, 0
  %v3119 = vsel %vm173, %v2542, 0
  %v3122 = vsel %vm173, %v2543, 0
  %v3125 = vsel %vm173, %v2544, 0
  %v3128 = vsel %vm173, %v2545, 0
  %v3131 = vsel %vm173, %v2546, 0
  %v3134 = vsel %vm173, %v2547, 0
  %v3137 = vsel %vm173, %v2548, 0
  %v3140 = vsel %vm173, %v2549, 0
  %v3143 = vsel %vm173, %v2550, 0
  %v3146 = vsel %vm173, %v2551, 0
  %3148 = vmatpush.msra.mxu0 0.0
  %3149 = vmatpush.msra.mxu0 0.0
  %3150 = vmatpush.msra.mxu0 0.0
  %3151 = vmatpush.msra.mxu0 0.0
  %3152 = vmatpush.msra.mxu0 0.0
  %3153 = vmatpush.msra.mxu0 0.0
  %3154 = vmatpush.msra.mxu0 0.0
  %3155 = vmatpush.msra.mxu0 0.0
  %3156 = vmatpush.msra.mxu0 0.0
  %3157 = vmatpush.msra.mxu0 0.0
  %3158 = vmatpush.msra.mxu0 0.0
  %3159 = vmatpush.msra.mxu0 0.0
  %3160 = vmatpush.msra.mxu0 %v3095
  %3161 = vmatpush.msra.mxu0 %v3094
  %3162 = vmatpush.msra.mxu0 %v3093
  %3163 = vmatpush.msra.mxu0 %v3092
  %3164 = vmatmul.f32.gmra.mxu0 %v3101
  %v3165 = vpop.f32.mrf.mxu0
  %v3166 = vadd.f32 %v3098, %v3165
  %3167 = vmatmul.f32.gmra.mxu0 %v3104
  %v3168 = vpop.f32.mrf.mxu0
  %v3169 = vadd.f32 %v3098, %v3168
  %3170 = vmatmul.f32.gmra.mxu0 %v3107
  %v3171 = vpop.f32.mrf.mxu0
  %v3172 = vadd.f32 %v3098, %v3171
  %3173 = vmatmul.f32.gmra.mxu0 %v3110
  %v3174 = vpop.f32.mrf.mxu0
  %v3175 = vadd.f32 %v3098, %v3174
  %3176 = vmatmul.f32.gmra.mxu0 %v3113
  %v3177 = vpop.f32.mrf.mxu0
  %v3178 = vadd.f32 %v3098, %v3177
  %3179 = vmatmul.f32.gmra.mxu0 %v3116
  %v3180 = vpop.f32.mrf.mxu0
  %v3181 = vadd.f32 %v3098, %v3180
  %3182 = vmatmul.f32.gmra.mxu0 %v3119
  %v3183 = vpop.f32.mrf.mxu0
  %v3184 = vadd.f32 %v3098, %v3183
  %3185 = vmatmul.f32.gmra.mxu0 %v3122
  %v3186 = vpop.f32.mrf.mxu0
  %v3187 = vadd.f32 %v3098, %v3186
  %3188 = vmatmul.f32.gmra.mxu0 %v3125
  %v3189 = vpop.f32.mrf.mxu0
  %v3190 = vadd.f32 %v3098, %v3189
  %3191 = vmatmul.f32.gmra.mxu0 %v3128
  %v3192 = vpop.f32.mrf.mxu0
  %v3193 = vadd.f32 %v3098, %v3192
  %3194 = vmatmul.f32.gmra.mxu0 %v3131
  %v3195 = vpop.f32.mrf.mxu0
  %v3196 = vadd.f32 %v3098, %v3195
  %3197 = vmatmul.f32.gmra.mxu0 %v3134
  %v3198 = vpop.f32.mrf.mxu0
  %v3199 = vadd.f32 %v3098, %v3198
  %3200 = vmatmul.f32.gmra.mxu0 %v3137
  %v3201 = vpop.f32.mrf.mxu0
  %v3202 = vadd.f32 %v3098, %v3201
  %3203 = vmatmul.f32.gmra.mxu0 %v3140
  %v3204 = vpop.f32.mrf.mxu0
  %v3205 = vadd.f32 %v3098, %v3204
  %3206 = vmatmul.f32.gmra.mxu0 %v3143
  %v3207 = vpop.f32.mrf.mxu0
  %v3208 = vadd.f32 %v3098, %v3207
  %3209 = vmatmul.f32.gmra.mxu0 %v3146
  %v3210 = vpop.f32.mrf.mxu0
  %v3211 = vadd.f32 %v3098, %v3210
  %3212 = vdwg.mxu0
  %v3213 = vld [vmem:[%s35] sm:$0xff]
  %v3214 = vld [vmem:[%s35 + $0x8] sm:$0xff]
  %v3215 = vld [vmem:[%s35 + $0x10] sm:$0xff]
  %v3216 = vld [vmem:[%s35 + $0x18] sm:$0xff]
  %v3217 = vld [vmem:[%s37] sm:$0x1]
  %v3219 = vperm.slane %v3217, 0
  %3237 = vrot.lane.b32.xlu0 %v3076, 96
  %v3238 = vpop.permute.xlu0 %3237
  %3239 = vrot.lane.b32.xlu0 %v3077, 96
  %v3240 = vpop.permute.xlu0 %3239
  %3241 = vrot.lane.b32.xlu0 %v3078, 96
  %v3242 = vpop.permute.xlu0 %3241
  %3243 = vrot.lane.b32.xlu0 %v3079, 96
  %v3244 = vpop.permute.xlu0 %3243
  %3245 = vrot.lane.b32.xlu0 %v3080, 96
  %v3246 = vpop.permute.xlu0 %3245
  %3247 = vrot.lane.b32.xlu0 %v3081, 96
  %v3248 = vpop.permute.xlu0 %3247
  %3249 = vrot.lane.b32.xlu0 %v3082, 96
  %v3250 = vpop.permute.xlu0 %3249
  %3251 = vrot.lane.b32.xlu0 %v3083, 96
  %v3252 = vpop.permute.xlu0 %3251
  %3253 = vrot.lane.b32.xlu0 %v3084, 96
  %v3254 = vpop.permute.xlu0 %3253
  %3255 = vrot.lane.b32.xlu0 %v3085, 96
  %v3256 = vpop.permute.xlu0 %3255
  %3257 = vrot.lane.b32.xlu0 %v3086, 96
  %v3258 = vpop.permute.xlu0 %3257
  %3259 = vrot.lane.b32.xlu0 %v3087, 96
  %v3260 = vpop.permute.xlu0 %3259
  %3261 = vrot.lane.b32.xlu0 %v3088, 96
  %v3262 = vpop.permute.xlu0 %3261
  %3263 = vrot.lane.b32.xlu0 %v3089, 96
  %v3264 = vpop.permute.xlu0 %3263
  %3265 = vrot.lane.b32.xlu0 %v3090, 96
  %v3266 = vpop.permute.xlu0 %3265
  %3267 = vrot.lane.b32.xlu0 %v3091, 96
  %v3268 = vpop.permute.xlu0 %3267
  %v3269 = vsel %vm173, %v3238, 0
  %v3271 = vsel %vm173, %v3240, 0
  %v3273 = vsel %vm173, %v3242, 0
  %v3275 = vsel %vm173, %v3244, 0
  %v3277 = vsel %vm173, %v3246, 0
  %v3279 = vsel %vm173, %v3248, 0
  %v3281 = vsel %vm173, %v3250, 0
  %v3283 = vsel %vm173, %v3252, 0
  %v3285 = vsel %vm173, %v3254, 0
  %v3287 = vsel %vm173, %v3256, 0
  %v3289 = vsel %vm173, %v3258, 0
  %v3291 = vsel %vm173, %v3260, 0
  %v3293 = vsel %vm173, %v3262, 0
  %v3295 = vsel %vm173, %v3264, 0
  %v3297 = vsel %vm173, %v3266, 0
  %v3299 = vsel %vm173, %v3268, 0
  %3301 = vmatpush.msra.mxu0 0.0
  %3302 = vmatpush.msra.mxu0 0.0
  %3303 = vmatpush.msra.mxu0 0.0
  %3304 = vmatpush.msra.mxu0 0.0
  %3305 = vmatpush.msra.mxu0 0.0
  %3306 = vmatpush.msra.mxu0 0.0
  %3307 = vmatpush.msra.mxu0 0.0
  %3308 = vmatpush.msra.mxu0 0.0
  %3309 = vmatpush.msra.mxu0 0.0
  %3310 = vmatpush.msra.mxu0 0.0
  %3311 = vmatpush.msra.mxu0 0.0
  %3312 = vmatpush.msra.mxu0 0.0
  %3313 = vmatpush.msra.mxu0 %v3216
  %3314 = vmatpush.msra.mxu0 %v3215
  %3315 = vmatpush.msra.mxu0 %v3214
  %3316 = vmatpush.msra.mxu0 %v3213
  %3317 = vmatmul.f32.gmra.mxu0 %v3269
  %v3318 = vpop.f32.mrf.mxu0
  %v3319 = vadd.f32 %v3219, %v3318
  %3320 = vmatmul.f32.gmra.mxu0 %v3271
  %v3321 = vpop.f32.mrf.mxu0
  %v3322 = vadd.f32 %v3219, %v3321
  %3323 = vmatmul.f32.gmra.mxu0 %v3273
  %v3324 = vpop.f32.mrf.mxu0
  %v3325 = vadd.f32 %v3219, %v3324
  %3326 = vmatmul.f32.gmra.mxu0 %v3275
  %v3327 = vpop.f32.mrf.mxu0
  %v3328 = vadd.f32 %v3219, %v3327
  %3329 = vmatmul.f32.gmra.mxu0 %v3277
  %v3330 = vpop.f32.mrf.mxu0
  %v3331 = vadd.f32 %v3219, %v3330
  %3332 = vmatmul.f32.gmra.mxu0 %v3279
  %v3333 = vpop.f32.mrf.mxu0
  %v3334 = vadd.f32 %v3219, %v3333
  %3335 = vmatmul.f32.gmra.mxu0 %v3281
  %v3336 = vpop.f32.mrf.mxu0
  %v3337 = vadd.f32 %v3219, %v3336
  %3338 = vmatmul.f32.gmra.mxu0 %v3283
  %v3339 = vpop.f32.mrf.mxu0
  %v3340 = vadd.f32 %v3219, %v3339
  %3341 = vmatmul.f32.gmra.mxu0 %v3285
  %v3342 = vpop.f32.mrf.mxu0
  %v3343 = vadd.f32 %v3219, %v3342
  %3344 = vmatmul.f32.gmra.mxu0 %v3287
  %v3345 = vpop.f32.mrf.mxu0
  %v3346 = vadd.f32 %v3219, %v3345
  %3347 = vmatmul.f32.gmra.mxu0 %v3289
  %v3348 = vpop.f32.mrf.mxu0
  %v3349 = vadd.f32 %v3219, %v3348
  %3350 = vmatmul.f32.gmra.mxu0 %v3291
  %v3351 = vpop.f32.mrf.mxu0
  %v3352 = vadd.f32 %v3219, %v3351
  %3353 = vmatmul.f32.gmra.mxu0 %v3293
  %v3354 = vpop.f32.mrf.mxu0
  %v3355 = vadd.f32 %v3219, %v3354
  %3356 = vmatmul.f32.gmra.mxu0 %v3295
  %v3357 = vpop.f32.mrf.mxu0
  %v3358 = vadd.f32 %v3219, %v3357
  %3359 = vmatmul.f32.gmra.mxu0 %v3297
  %v3360 = vpop.f32.mrf.mxu0
  %v3361 = vadd.f32 %v3219, %v3360
  %3362 = vmatmul.f32.gmra.mxu0 %v3299
  %v3363 = vpop.f32.mrf.mxu0
  %v3364 = vadd.f32 %v3219, %v3363
  %3365 = vdwg.mxu0
  %vm3366 = vcmp.gt.f32.partialorder %v3319, 0.0
  %vm3367 = vcmp.gt.f32.partialorder %v3322, 0.0
  %vm3368 = vcmp.gt.f32.partialorder %v3325, 0.0
  %vm3369 = vcmp.gt.f32.partialorder %v3328, 0.0
  %vm3370 = vcmp.gt.f32.partialorder %v3331, 0.0
  %vm3371 = vcmp.gt.f32.partialorder %v3334, 0.0
  %vm3372 = vcmp.gt.f32.partialorder %v3337, 0.0
  %vm3373 = vcmp.gt.f32.partialorder %v3340, 0.0
  %vm3374 = vcmp.gt.f32.partialorder %v3343, 0.0
  %vm3375 = vcmp.gt.f32.partialorder %v3346, 0.0
  %vm3376 = vcmp.gt.f32.partialorder %v3349, 0.0
  %vm3377 = vcmp.gt.f32.partialorder %v3352, 0.0
  %vm3378 = vcmp.gt.f32.partialorder %v3355, 0.0
  %vm3379 = vcmp.gt.f32.partialorder %v3358, 0.0
  %vm3380 = vcmp.gt.f32.partialorder %v3361, 0.0
  %vm3381 = vcmp.gt.f32.partialorder %v3364, 0.0
  %v3382 = vmin.f32 %v3319, 0.0
  %v3383 = vmin.f32 %v3322, 0.0
  %v3384 = vmin.f32 %v3325, 0.0
  %v3385 = vmin.f32 %v3328, 0.0
  %v3386 = vmin.f32 %v3331, 0.0
  %v3387 = vmin.f32 %v3334, 0.0
  %v3388 = vmin.f32 %v3337, 0.0
  %v3389 = vmin.f32 %v3340, 0.0
  %v3390 = vmin.f32 %v3343, 0.0
  %v3391 = vmin.f32 %v3346, 0.0
  %v3392 = vmin.f32 %v3349, 0.0
  %v3393 = vmin.f32 %v3352, 0.0
  %v3394 = vmin.f32 %v3355, 0.0
  %v3395 = vmin.f32 %v3358, 0.0
  %v3396 = vmin.f32 %v3361, 0.0
  %v3397 = vmin.f32 %v3364, 0.0
  %v3398 = vmul.f32 %v3382, 1.442695
  %v3399 = vpow.pop %v3398
  %v3400 = vmul.f32 %v3383, 1.442695
  %v3401 = vpow.pop %v3400
  %v3402 = vmul.f32 %v3384, 1.442695
  %v3403 = vpow.pop %v3402
  %v3404 = vmul.f32 %v3385, 1.442695
  %v3405 = vpow.pop %v3404
  %v3406 = vmul.f32 %v3386, 1.442695
  %v3407 = vpow.pop %v3406
  %v3408 = vmul.f32 %v3387, 1.442695
  %v3409 = vpow.pop %v3408
  %v3410 = vmul.f32 %v3388, 1.442695
  %v3411 = vpow.pop %v3410
  %v3412 = vmul.f32 %v3389, 1.442695
  %v3413 = vpow.pop %v3412
  %v3414 = vmul.f32 %v3390, 1.442695
  %v3415 = vpow.pop %v3414
  %v3416 = vmul.f32 %v3391, 1.442695
  %v3417 = vpow.pop %v3416
  %v3418 = vmul.f32 %v3392, 1.442695
  %v3419 = vpow.pop %v3418
  %v3420 = vmul.f32 %v3393, 1.442695
  %v3421 = vpow.pop %v3420
  %v3422 = vmul.f32 %v3394, 1.442695
  %v3423 = vpow.pop %v3422
  %v3424 = vmul.f32 %v3395, 1.442695
  %v3425 = vpow.pop %v3424
  %v3426 = vmul.f32 %v3396, 1.442695
  %v3427 = vpow.pop %v3426
  %v3428 = vmul.f32 %v3397, 1.442695
  %v3429 = vpow.pop %v3428
  %v3430 = vsub.f32 %v3399, 1.0
  %v3431 = vsub.f32 %v3401, 1.0
  %v3432 = vsub.f32 %v3403, 1.0
  %v3433 = vsub.f32 %v3405, 1.0
  %v3434 = vsub.f32 %v3407, 1.0
  %v3435 = vsub.f32 %v3409, 1.0
  %v3436 = vsub.f32 %v3411, 1.0
  %v3437 = vsub.f32 %v3413, 1.0
  %v3438 = vsub.f32 %v3415, 1.0
  %v3439 = vsub.f32 %v3417, 1.0
  %v3440 = vsub.f32 %v3419, 1.0
  %v3441 = vsub.f32 %v3421, 1.0
  %v3442 = vsub.f32 %v3423, 1.0
  %v3443 = vsub.f32 %v3425, 1.0
  %v3444 = vsub.f32 %v3427, 1.0
  %v3445 = vsub.f32 %v3429, 1.0
  %v3446 = vsel %vm3366, %v3319, %v3430
  %v3447 = vsel %vm3367, %v3322, %v3431
  %v3448 = vsel %vm3368, %v3325, %v3432
  %v3449 = vsel %vm3369, %v3328, %v3433
  %v3450 = vsel %vm3370, %v3331, %v3434
  %v3451 = vsel %vm3371, %v3334, %v3435
  %v3452 = vsel %vm3372, %v3337, %v3436
  %v3453 = vsel %vm3373, %v3340, %v3437
  %v3454 = vsel %vm3374, %v3343, %v3438
  %v3455 = vsel %vm3375, %v3346, %v3439
  %v3456 = vsel %vm3376, %v3349, %v3440
  %v3457 = vsel %vm3377, %v3352, %v3441
  %v3458 = vsel %vm3378, %v3355, %v3442
  %v3459 = vsel %vm3379, %v3358, %v3443
  %v3460 = vsel %vm3380, %v3361, %v3444
  %v3461 = vsel %vm3381, %v3364, %v3445
  %v3462 = vadd.f32 %v3446, 1.0
  %v3463 = vadd.f32 %v3447, 1.0
  %v3464 = vadd.f32 %v3448, 1.0
  %v3465 = vadd.f32 %v3449, 1.0
  %v3466 = vadd.f32 %v3450, 1.0
  %v3467 = vadd.f32 %v3451, 1.0
  %v3468 = vadd.f32 %v3452, 1.0
  %v3469 = vadd.f32 %v3453, 1.0
  %v3470 = vadd.f32 %v3454, 1.0
  %v3471 = vadd.f32 %v3455, 1.0
  %v3472 = vadd.f32 %v3456, 1.0
  %v3473 = vadd.f32 %v3457, 1.0
  %v3474 = vadd.f32 %v3458, 1.0
  %v3475 = vadd.f32 %v3459, 1.0
  %v3476 = vadd.f32 %v3460, 1.0
  %v3477 = vadd.f32 %v3461, 1.0
  %v3478 = vadd.f32 %v3462, 0.001
  %v3479 = vadd.f32 %v3463, 0.001
  %v3480 = vadd.f32 %v3464, 0.001
  %v3481 = vadd.f32 %v3465, 0.001
  %v3482 = vadd.f32 %v3466, 0.001
  %v3483 = vadd.f32 %v3467, 0.001
  %v3484 = vadd.f32 %v3468, 0.001
  %v3485 = vadd.f32 %v3469, 0.001
  %v3486 = vadd.f32 %v3470, 0.001
  %v3487 = vadd.f32 %v3471, 0.001
  %v3488 = vadd.f32 %v3472, 0.001
  %v3489 = vadd.f32 %v3473, 0.001
  %v3490 = vadd.f32 %v3474, 0.001
  %v3491 = vadd.f32 %v3475, 0.001
  %v3492 = vadd.f32 %v3476, 0.001
  %v3493 = vadd.f32 %v3477, 0.001
  %3510 = vrot.lane.b32.xlu0 %v3478, 2
  %v3511 = vpop.permute.xlu0 %3510
  %3512 = vrot.lane.b32.xlu0 %v3479, 2
  %v3513 = vpop.permute.xlu0 %3512
  %3514 = vrot.lane.b32.xlu0 %v3480, 2
  %v3515 = vpop.permute.xlu0 %3514
  %3516 = vrot.lane.b32.xlu0 %v3481, 2
  %v3517 = vpop.permute.xlu0 %3516
  %3518 = vrot.lane.b32.xlu0 %v3482, 2
  %v3519 = vpop.permute.xlu0 %3518
  %3520 = vrot.lane.b32.xlu0 %v3483, 2
  %v3521 = vpop.permute.xlu0 %3520
  %3522 = vrot.lane.b32.xlu0 %v3484, 2
  %v3523 = vpop.permute.xlu0 %3522
  %3524 = vrot.lane.b32.xlu0 %v3485, 2
  %v3525 = vpop.permute.xlu0 %3524
  %3526 = vrot.lane.b32.xlu0 %v3486, 2
  %v3527 = vpop.permute.xlu0 %3526
  %3528 = vrot.lane.b32.xlu0 %v3487, 2
  %v3529 = vpop.permute.xlu0 %3528
  %3530 = vrot.lane.b32.xlu0 %v3488, 2
  %v3531 = vpop.permute.xlu0 %3530
  %3532 = vrot.lane.b32.xlu0 %v3489, 2
  %v3533 = vpop.permute.xlu0 %3532
  %3534 = vrot.lane.b32.xlu0 %v3490, 2
  %v3535 = vpop.permute.xlu0 %3534
  %3536 = vrot.lane.b32.xlu0 %v3491, 2
  %v3537 = vpop.permute.xlu0 %3536
  %3538 = vrot.lane.b32.xlu0 %v3492, 2
  %v3539 = vpop.permute.xlu0 %3538
  %3540 = vrot.lane.b32.xlu0 %v3493, 2
  %v3541 = vpop.permute.xlu0 %3540
  %vm3558 = vcmask 15360
  %v3559 = vsel %vm3558, %v3166, %v3511
  %v3560 = vsel %vm3558, %v3169, %v3513
  %v3561 = vsel %vm3558, %v3172, %v3515
  %v3562 = vsel %vm3558, %v3175, %v3517
  %v3563 = vsel %vm3558, %v3178, %v3519
  %v3564 = vsel %vm3558, %v3181, %v3521
  %v3565 = vsel %vm3558, %v3184, %v3523
  %v3566 = vsel %vm3558, %v3187, %v3525
  %v3567 = vsel %vm3558, %v3190, %v3527
  %v3568 = vsel %vm3558, %v3193, %v3529
  %v3569 = vsel %vm3558, %v3196, %v3531
  %v3570 = vsel %vm3558, %v3199, %v3533
  %v3571 = vsel %vm3558, %v3202, %v3535
  %v3572 = vsel %vm3558, %v3205, %v3537
  %v3573 = vsel %vm3558, %v3208, %v3539
  %v3574 = vsel %vm3558, %v3211, %v3541
  %vm3575 = vcmask 31744
  %3576 = vst.msk [vmem:[%s59] sm:$0xff] %vm3575, %v3559
  %3577 = vst.msk [vmem:[%s59 + $0x8] sm:$0xff] %vm3575, %v3560
  %3578 = vst.msk [vmem:[%s59 + $0x10] sm:$0xff] %vm3575, %v3561
  %3579 = vst.msk [vmem:[%s59 + $0x18] sm:$0xff] %vm3575, %v3562
  %3580 = vst.msk [vmem:[%s59 + $0x20] sm:$0xff] %vm3575, %v3563
  %3581 = vst.msk [vmem:[%s59 + $0x28] sm:$0xff] %vm3575, %v3564
  %3582 = vst.msk [vmem:[%s59 + $0x30] sm:$0xff] %vm3575, %v3565
  %3583 = vst.msk [vmem:[%s59 + $0x38] sm:$0xff] %vm3575, %v3566
  %3584 = vst.msk [vmem:[%s59 + $0x40] sm:$0xff] %vm3575, %v3567
  %3585 = vst.msk [vmem:[%s59 + $0x48] sm:$0xff] %vm3575, %v3568
  %3586 = vst.msk [vmem:[%s59 + $0x50] sm:$0xff] %vm3575, %v3569
  %3587 = vst.msk [vmem:[%s59 + $0x58] sm:$0xff] %vm3575, %v3570
  %3588 = vst.msk [vmem:[%s59 + $0x60] sm:$0xff] %vm3575, %v3571
  %3589 = vst.msk [vmem:[%s59 + $0x68] sm:$0xff] %vm3575, %v3572
  %3590 = vst.msk [vmem:[%s59 + $0x70] sm:$0xff] %vm3575, %v3573
  %3591 = vst.msk [vmem:[%s59 + $0x78] sm:$0xff] %vm3575, %v3574
  // Predicated region
  $region118: #{gru_decoder_forward.1} parent=0 // pred_check
    _
  $region119: #{gru_decoder_forward.1} parent=0 // pred_check_branch
    %3593 = sbr.rel (0) target = $region121
  $region120: #{gru_decoder_forward.1} parent=0 // pred_region
    _
  $region121: #{gru_decoder_forward.1} parent=0 // pred_fallthru
    _
  // Predicated region
  $region122: #{gru_decoder_forward.1} parent=0 // pred_check
    _
  $region123: #{gru_decoder_forward.1} parent=0 // pred_check_branch
    %3595 = sbr.rel (0) target = $region125
  $region124: #{gru_decoder_forward.1} parent=0 // pred_region
    _
  $region125: #{gru_decoder_forward.1} parent=0 // pred_fallthru
    _
  // Predicated region
  $region126: #{gru_decoder_forward.1} parent=0 // pred_check
    _
  $region127: #{gru_decoder_forward.1} parent=0 // pred_check_branch
    %3597 = sbr.rel (0) target = $region129
  $region128: #{gru_decoder_forward.1} parent=0 // pred_region
    _
  $region129: #{gru_decoder_forward.1} parent=0 // pred_fallthru
    _
  // Predicated region
  $region130: #{gru_decoder_forward.1} parent=0 // pred_check
    _
  $region131: #{gru_decoder_forward.1} parent=0 // pred_check_branch
    %3599 = sbr.rel (0) target = $region133
  $region132: #{gru_decoder_forward.1} parent=0 // pred_region
    _
  $region133: #{gru_decoder_forward.1} parent=0 // pred_fallthru
    _

</llo_original>
